<compile_context>
chip_gen: v6e
topology: v6e:2x2x1
jax: 0.10.0
libtpu: 0.0.40
codegen_flags: <defaults>
</compile_context>

<pallas_src>
import functools
import math

import jax
import jax.numpy as jnp
from jax.experimental import pallas as pl
from jax.experimental.pallas import tpu as pltpu


# ------------------------------ activations ---------------------------------

def _make_act(name: str, lamb: float):
    name = name.lower()
    if name == "none":
        return lambda v: v
    if name == "relu":
        return lambda v: jnp.maximum(v, 0.0)
    if name == "sigmoid":
        return jax.nn.sigmoid
    if name == "lrelu":
        return lambda v: jnp.where(v >= 0, v, lamb * v)
    if name == "selu":
        return jax.nn.selu
    raise ValueError(f"unknown activation: {name}")


def _act_is_transcendental(name: str) -> bool:
    return name.lower() in ("sigmoid", "selu")


# ------------------------------ tile helper ----------------------------------

def _pick_tile(dim: int, target: int, align: int) -> int:
    """Largest multiple-of-`align` divisor of `dim` that is <= target, or the
    full extent when the dim is small / not alignable (full-extent blocks are
    always legal).  Note: ED_FC feature sizes are input_size**2 * widening**i,
    which are 128-aligned for the usual power-of-two configs."""
    if dim <= target or dim % align != 0:
        return dim
    t = (target // align) * align
    while t >= align:
        if dim % t == 0:
            return t
        t -= align
    return dim


# -------------------- fully fused whole-network kernel -----------------------

def _ed_fc_fused_kernel(x_ref, *refs, n_enc, n_dec, act_fn, skips):
    """One kernel for the whole encoder/decoder chain.

    refs = (w0, b0, w1, b1, ..., w_{L-1}, b_{L-1}, o_ref).  Weights are bf16,
    biases f32, all resident in VMEM (constant index maps).  `h` never touches
    HBM between layers.
    """
    o_ref = refs[-1]
    wb = refs[:-1]

    h = x_ref[...].astype(jnp.float32)

    enc_out = []
    li = 0
    for i in range(n_enc):
        w = wb[2 * li][...]
        b = wb[2 * li + 1][...]
        hin = h if i == 0 else act_fn(h)          # first encoder is a bare Linear
        h = jnp.dot(hin.astype(w.dtype), w,
                    preferred_element_type=jnp.float32) + b
        enc_out.append(h)
        li += 1

    for i in range(n_dec):
        w = wb[2 * li][...]
        b = wb[2 * li + 1][...]
        h = jnp.dot(act_fn(h).astype(w.dtype), w,
                    preferred_element_type=jnp.float32) + b
        if skips and i < n_dec - 1:
            h = h + enc_out[-(i + 2)]
        li += 1

    o_ref[...] = h.astype(o_ref.dtype)


def _ed_fc_fused(h, layer_params, *, n_enc, act, skips, lamb):
    """Single pallas_call for the whole network.  Grid only over the batch."""
    M, K0 = h.shape
    n_dec = len(layer_params) - n_enc
    N_out = layer_params[-1]["w"].shape[1]
    act_fn = _make_act(act, lamb)

    tm = M if M <= 256 else _pick_tile(M, 256, 8)
    grid = (M // tm,)

    in_specs = [pl.BlockSpec((tm, K0), lambda i: (i, 0))]
    operands = [h]
    for p in layer_params:
        K, N = p["w"].shape
        in_specs.append(pl.BlockSpec((K, N), lambda i: (0, 0)))   # resident
        in_specs.append(pl.BlockSpec((1, N), lambda i: (0, 0)))   # resident
        operands.append(p["w"])
        operands.append(p["b"].reshape(1, N))
    out_spec = pl.BlockSpec((tm, N_out), lambda i: (i, 0))

    # Cost estimate for XLA scheduling.
    flops = 2 * M * sum(p["w"].shape[0] * p["w"].shape[1] for p in layer_params)
    transcend = 0
    if _act_is_transcendental(act):
        transcend = M * sum(p["w"].shape[0] for p in layer_params[1:])
    bytes_accessed = int(
        h.size * h.dtype.itemsize
        + sum(p["w"].size * p["w"].dtype.itemsize
              + p["b"].size * p["b"].dtype.itemsize for p in layer_params)
        + M * N_out * h.dtype.itemsize)

    # VMEM budget: params (x2 for buffering) + activations + margin,
    # clamped so it is safe on v7x (64 MiB physical per TensorCore).
    param_bytes = int(sum(p["w"].size * p["w"].dtype.itemsize
                          + p["b"].size * p["b"].dtype.itemsize
                          for p in layer_params))
    act_bytes = 4 * tm * max(p["w"].shape[1] for p in layer_params)
    vmem_limit = int(min(max(2 * param_bytes + 8 * act_bytes + (8 << 20),
                             32 << 20), 56 << 20))

    return pl.pallas_call(
        functools.partial(_ed_fc_fused_kernel, n_enc=n_enc, n_dec=n_dec,
                          act_fn=act_fn, skips=skips),
        out_shape=jax.ShapeDtypeStruct((M, N_out), jnp.float32),
        grid=grid,
        in_specs=in_specs,
        out_specs=out_spec,
        compiler_params=pltpu.CompilerParams(
            dimension_semantics=("parallel",),
            vmem_limit_bytes=vmem_limit),
        cost_estimate=pl.CostEstimate(flops=int(flops),
                                      transcendentals=int(transcend),
                                      bytes_accessed=bytes_accessed),
    )(*operands)


# ------------------ per-layer fallback (big-model) kernels --------------------

def _linear_kernel(x_ref, w_ref, b_ref, o_ref, *, act_fn):
    # o = act(x) @ w + b, accumulated directly into the f32 output block.
    k = pl.program_id(2)

    @pl.when(k == 0)
    def _():
        o_ref[...] = jnp.broadcast_to(b_ref[...], o_ref.shape)

    xin = act_fn(x_ref[...]).astype(w_ref.dtype)
    o_ref[...] += jnp.dot(xin, w_ref[...], preferred_element_type=jnp.float32)


def _linear_skip_kernel(x_ref, w_ref, b_ref, s_ref, o_ref, *, act_fn):
    # o = act(x) @ w + b + skip (skip fused into the last-k epilogue).
    k = pl.program_id(2)

    @pl.when(k == 0)
    def _():
        o_ref[...] = jnp.broadcast_to(b_ref[...], o_ref.shape)

    xin = act_fn(x_ref[...]).astype(w_ref.dtype)
    o_ref[...] += jnp.dot(xin, w_ref[...], preferred_element_type=jnp.float32)

    @pl.when(k == pl.num_programs(2) - 1)
    def _():
        o_ref[...] += s_ref[...]


def linear_act(x, w, b, *, act="none", lamb=0.0, skip=None,
               tm_target=256, tn_target=1024, tk_target=512):
    """Fused  y = act(x) @ w + b (+ skip)  tiled Pallas kernel (f32 output)."""
    M, K = x.shape
    K2, N = w.shape
    assert K == K2 and b.shape[-1] == N

    tm = _pick_tile(M, tm_target, 8)     # sublane aligned (batch padded to 8)
    tk = _pick_tile(K, tk_target, 128)   # lane-dense weight slabs
    tn = _pick_tile(N, tn_target, 128)   # full-N when N <= 1024: act computed once
    grid = (M // tm, N // tn, K // tk)

    act_fn = _make_act(act, lamb)
    b2 = b.reshape(1, N).astype(jnp.float32)

    x_spec = pl.BlockSpec((tm, tk), lambda i, j, k: (i, k))
    w_spec = pl.BlockSpec((tk, tn), lambda i, j, k: (k, j))
    b_spec = pl.BlockSpec((1, tn), lambda i, j, k: (0, j))
    o_spec = pl.BlockSpec((tm, tn), lambda i, j, k: (i, j))

    flops = 2 * M * N * K
    transcend = M * K if _act_is_transcendental(act) else 0
    bytes_accessed = (x.size * x.dtype.itemsize + w.size * w.dtype.itemsize
                      + b2.size * 4 + M * N * 4)

    if skip is None:
        kernel = functools.partial(_linear_kernel, act_fn=act_fn)
        in_specs = [x_spec, w_spec, b_spec]
        operands = (x, w, b2)
    else:
        assert skip.shape == (M, N)
        bytes_accessed += M * N * 4
        kernel = functools.partial(_linear_skip_kernel, act_fn=act_fn)
        s_spec = pl.BlockSpec((tm, tn), lambda i, j, k: (i, j))
        in_specs = [x_spec, w_spec, b_spec, s_spec]
        operands = (x, w, b2, skip.astype(jnp.float32))

    return pl.pallas_call(
        kernel,
        out_shape=jax.ShapeDtypeStruct((M, N), jnp.float32),
        grid=grid,
        in_specs=in_specs,
        out_specs=o_spec,
        compiler_params=pltpu.CompilerParams(
            dimension_semantics=("parallel", "parallel", "arbitrary"),
            vmem_limit_bytes=48 * 1024 * 1024),
        cost_estimate=pl.CostEstimate(flops=int(flops),
                                      transcendentals=int(transcend),
                                      bytes_accessed=int(bytes_accessed)),
    )(*operands)


# ------------------------------ ED_FC model ----------------------------------

def init_ed_fc_params(key, input_size, layers, widening,
                      weight_dtype=jnp.bfloat16):
    """Mirrors ED_FC.__init__ layer sizing; uniform init like torch init_layer.
    Weights stored as (in_features, out_features) so kernels compute x @ w.
    Weights kept in bf16 (f32 accumulation in-kernel), biases in f32."""
    layer_specs = [input_size * input_size * widening ** i
                   for i in range(layers + 1)]
    layer_specs = layer_specs[: layers + 1]

    def make_linear(k, fan_in, fan_out):
        stdv = 1.0 / math.sqrt(fan_in)
        w = jax.random.uniform(k, (fan_in, fan_out), jnp.float32,
                               minval=-stdv, maxval=stdv).astype(weight_dtype)
        b = jnp.zeros((fan_out,), jnp.float32)
        return {"w": w, "b": b}

    keys = iter(jax.random.split(key, 2 * layers + 2))

    encoders = []
    last = layer_specs[0]
    for ch_out in layer_specs[1:]:
        encoders.append(make_linear(next(keys), last, ch_out))
        last = ch_out

    rev = list(reversed(layer_specs))
    decoders = []
    for ch_out in rev[1:]:
        decoders.append(make_linear(next(keys), last, ch_out))
        last = ch_out

    return {"encoders": encoders, "decoders": decoders}


def ed_fc_forward(x, params, *, act, skips, lamb=0.0, force_per_layer=False):
    """Pallas implementation of ED_FC.forward."""
    src_shape = x.shape
    M = src_shape[0]
    # Flatten = zero-copy metadata reshape in the wrapper (layout plumbing).
    h = x.reshape(M, -1).astype(jnp.float32)

    # Pad the batch up to one full sublane tile (8 rows) so we never feed the
    # MXU degenerate 2-row tiles; padded rows are sliced away at the end.
    M_pad = max(8, -(-M // 8) * 8)
    if M_pad != M:
        h = jnp.pad(h, ((0, M_pad - M), (0, 0)))

    layer_params = list(params["encoders"]) + list(params["decoders"])
    n_enc = len(params["encoders"])

    param_bytes = int(sum(p["w"].size * p["w"].dtype.itemsize
                          + p["b"].size * p["b"].dtype.itemsize
                          for p in layer_params))
    # Fuse the whole network when double-buffered params fit well under the
    # smallest VMEM (v7x: 64 MiB per TensorCore).
    fuse = (not force_per_layer) and (2 * param_bytes <= (36 << 20))

    if fuse:
        out = _ed_fc_fused(h, layer_params, n_enc=n_enc, act=act,
                           skips=skips, lamb=lamb)
    else:
        enc_out = []
        for idx, p in enumerate(params["encoders"]):
            a = "none" if idx == 0 else act   # first encoder is a bare Linear
            h = linear_act(h, p["w"], p["b"], act=a, lamb=lamb)
            enc_out.append(h)
        decs = params["decoders"]
        for i, p in enumerate(decs[:-1]):
            skip = enc_out[-(i + 2)] if skips else None
            h = linear_act(h, p["w"], p["b"], act=act, lamb=lamb, skip=skip)
        p = decs[-1]
        out = linear_act(h, p["w"], p["b"], act=act, lamb=lamb)

    out = out[:M].astype(x.dtype)
    # Un-flatten back to the source shape (zero-copy).
    return out.reshape(src_shape)


def ed_fc_reference(x, params, *, act, skips, lamb=0.0):
    """Plain-JAX reference with identical numerics (bf16 dot, f32 accum)."""
    act_fn = _make_act(act, lamb)
    src_shape = x.shape
    h = x.reshape(src_shape[0], -1).astype(jnp.float32)

    def lin(hin, p):
        return jnp.dot(hin.astype(p["w"].dtype), p["w"],
                       preferred_element_type=jnp.float32) + p["b"]

    enc_out = []
    for idx, p in enumerate(params["encoders"]):
        hin = h if idx == 0 else act_fn(h)
        h = lin(hin, p)
        enc_out.append(h)
    decs = params["decoders"]
    for i, p in enumerate(decs[:-1]):
        h = lin(act_fn(h), p)
        if skips:
            h = h + enc_out[-(i + 2)]
    h = lin(act_fn(h), decs[-1])
    return h.astype(x.dtype).reshape(src_shape)


if __name__ == "__main__":
    key = jax.random.PRNGKey(0)
    kx, kp = jax.random.split(key)

    # Small config: input_size=16 -> flat feature size 256; widening=2,
    # layers=2 -> layer sizes 256 -> 512 -> 1024 -> 512 -> 256.
    input_size = 16
    layers = 2
    widening = 2
    skips = True
    lamb = 0.1

    # x.view(b, -1) must yield input_size**2 features -> (B, 1, 16, 16).
    x = jax.random.normal(kx, (2, 1, input_size, input_size),
                          dtype=jnp.float32)
    params = init_ed_fc_params(kp, input_size, layers, widening)

    for act in ("relu", "sigmoid"):
        ref = ed_fc_reference(x, params, act=act, skips=skips, lamb=lamb)

        # Fully fused single-kernel path (the fast path for this config).
        out = jax.block_until_ready(
            ed_fc_forward(x, params, act=act, skips=skips, lamb=lamb))
        assert out.shape == x.shape and out.dtype == x.dtype
        assert jnp.allclose(out, ref, atol=2e-3, rtol=2e-3), \
            f"fused mismatch for act={act}"

        # Per-layer fallback path (used for models too big for VMEM).
        out_pl = jax.block_until_ready(
            ed_fc_forward(x, params, act=act, skips=skips, lamb=lamb,
                          force_per_layer=True))
        assert out_pl.shape == x.shape and out_pl.dtype == x.dtype
        assert jnp.allclose(out_pl, ref, atol=2e-3, rtol=2e-3), \
            f"per-layer mismatch for act={act}"

    print("KERNEL_OK")
</pallas_src>

<mosaic_0001>
module attributes {stable_mosaic.version = 11 : i64} {
  func.func @_ed_fc_fused_kernel(%arg0: i32, %arg1: memref<8x256xf32, #tpu.memory_space<vmem>>, %arg2: memref<256x512xbf16, #tpu.memory_space<vmem>>, %arg3: memref<1x512xf32, #tpu.memory_space<vmem>>, %arg4: memref<512x1024xbf16, #tpu.memory_space<vmem>>, %arg5: memref<1x1024xf32, #tpu.memory_space<vmem>>, %arg6: memref<1024x512xbf16, #tpu.memory_space<vmem>>, %arg7: memref<1x512xf32, #tpu.memory_space<vmem>>, %arg8: memref<512x256xbf16, #tpu.memory_space<vmem>>, %arg9: memref<1x256xf32, #tpu.memory_space<vmem>>, %arg10: memref<8x256xf32, #tpu.memory_space<vmem>>) attributes {dimension_semantics = [#tpu.dimension_semantics<parallel>], iteration_bounds = array<i64: 1>, scalar_prefetch = 0 : i64, scratch_operands = 0 : i64, tpu.core_type = #tpu.core_type<tc>, window_params = [{transform_indices = @transform_0, window_bounds = array<i64: 8, 256>}, {pipeline_mode = #tpu.pipeline_mode<synchronous>, transform_indices = @transform_1, window_bounds = array<i64: 256, 512>}, {pipeline_mode = #tpu.pipeline_mode<synchronous>, transform_indices = @transform_2, window_bounds = array<i64: 1, 512>}, {pipeline_mode = #tpu.pipeline_mode<synchronous>, transform_indices = @transform_3, window_bounds = array<i64: 512, 1024>}, {pipeline_mode = #tpu.pipeline_mode<synchronous>, transform_indices = @transform_4, window_bounds = array<i64: 1, 1024>}, {pipeline_mode = #tpu.pipeline_mode<synchronous>, transform_indices = @transform_5, window_bounds = array<i64: 1024, 512>}, {pipeline_mode = #tpu.pipeline_mode<synchronous>, transform_indices = @transform_6, window_bounds = array<i64: 1, 512>}, {pipeline_mode = #tpu.pipeline_mode<synchronous>, transform_indices = @transform_7, window_bounds = array<i64: 512, 256>}, {pipeline_mode = #tpu.pipeline_mode<synchronous>, transform_indices = @transform_8, window_bounds = array<i64: 1, 256>}, {transform_indices = @transform_9, window_bounds = array<i64: 8, 256>}]} {
    %c0 = arith.constant 0 : index
    %c0_0 = arith.constant 0 : index
    %0 = vector.load %arg1[%c0, %c0_0] : memref<8x256xf32, #tpu.memory_space<vmem>>, vector<8x256xf32>
    %c0_1 = arith.constant 0 : index
    %c0_2 = arith.constant 0 : index
    %1 = vector.load %arg2[%c0_1, %c0_2] : memref<256x512xbf16, #tpu.memory_space<vmem>>, vector<256x512xbf16>
    %c0_3 = arith.constant 0 : index
    %c0_4 = arith.constant 0 : index
    %2 = vector.load %arg3[%c0_3, %c0_4] : memref<1x512xf32, #tpu.memory_space<vmem>>, vector<1x512xf32>
    %3 = arith.truncf %0 : vector<8x256xf32> to vector<8x256xbf16>
    %cst = arith.constant dense<0.000000e+00> : vector<8x512xf32>
    %4 = tpu.matmul %3, %1, %cst {dimension_numbers = #tpu.dot_dimension_numbers<[1], [0], [0], [1], [0, 0, 1, 1], [], []>} : vector<8x256xbf16>, vector<256x512xbf16>, vector<8x512xf32> -> vector<8x512xf32>
    %5 = vector.broadcast %2 : vector<1x512xf32> to vector<8x512xf32>
    %6 = arith.addf %4, %5 : vector<8x512xf32>
    %c0_5 = arith.constant 0 : index
    %c0_6 = arith.constant 0 : index
    %7 = vector.load %arg4[%c0_5, %c0_6] : memref<512x1024xbf16, #tpu.memory_space<vmem>>, vector<512x1024xbf16>
    %c0_7 = arith.constant 0 : index
    %c0_8 = arith.constant 0 : index
    %8 = vector.load %arg5[%c0_7, %c0_8] : memref<1x1024xf32, #tpu.memory_space<vmem>>, vector<1x1024xf32>
    %cst_9 = arith.constant 0.000000e+00 : f32
    %9 = vector.broadcast %cst_9 : f32 to vector<8x512xf32>
    %10 = arith.maximumf %6, %9 : vector<8x512xf32>
    %11 = arith.truncf %10 : vector<8x512xf32> to vector<8x512xbf16>
    %cst_10 = arith.constant dense<0.000000e+00> : vector<8x1024xf32>
    %12 = tpu.matmul %11, %7, %cst_10 {dimension_numbers = #tpu.dot_dimension_numbers<[1], [0], [0], [1], [0, 0, 1, 1], [], []>} : vector<8x512xbf16>, vector<512x1024xbf16>, vector<8x1024xf32> -> vector<8x1024xf32>
    %13 = vector.broadcast %8 : vector<1x1024xf32> to vector<8x1024xf32>
    %14 = arith.addf %12, %13 : vector<8x1024xf32>
    %c0_11 = arith.constant 0 : index
    %c0_12 = arith.constant 0 : index
    %15 = vector.load %arg6[%c0_11, %c0_12] : memref<1024x512xbf16, #tpu.memory_space<vmem>>, vector<1024x512xbf16>
    %c0_13 = arith.constant 0 : index
    %c0_14 = arith.constant 0 : index
    %16 = vector.load %arg7[%c0_13, %c0_14] : memref<1x512xf32, #tpu.memory_space<vmem>>, vector<1x512xf32>
    %cst_15 = arith.constant 0.000000e+00 : f32
    %17 = vector.broadcast %cst_15 : f32 to vector<8x1024xf32>
    %18 = arith.maximumf %14, %17 : vector<8x1024xf32>
    %19 = arith.truncf %18 : vector<8x1024xf32> to vector<8x1024xbf16>
    %cst_16 = arith.constant dense<0.000000e+00> : vector<8x512xf32>
    %20 = tpu.matmul %19, %15, %cst_16 {dimension_numbers = #tpu.dot_dimension_numbers<[1], [0], [0], [1], [0, 0, 1, 1], [], []>} : vector<8x1024xbf16>, vector<1024x512xbf16>, vector<8x512xf32> -> vector<8x512xf32>
    %21 = vector.broadcast %16 : vector<1x512xf32> to vector<8x512xf32>
    %22 = arith.addf %20, %21 : vector<8x512xf32>
    %23 = arith.addf %22, %6 : vector<8x512xf32>
    %c0_17 = arith.constant 0 : index
    %c0_18 = arith.constant 0 : index
    %24 = vector.load %arg8[%c0_17, %c0_18] : memref<512x256xbf16, #tpu.memory_space<vmem>>, vector<512x256xbf16>
    %c0_19 = arith.constant 0 : index
    %c0_20 = arith.constant 0 : index
    %25 = vector.load %arg9[%c0_19, %c0_20] : memref<1x256xf32, #tpu.memory_space<vmem>>, vector<1x256xf32>
    %cst_21 = arith.constant 0.000000e+00 : f32
    %26 = vector.broadcast %cst_21 : f32 to vector<8x512xf32>
    %27 = arith.maximumf %23, %26 : vector<8x512xf32>
    %28 = arith.truncf %27 : vector<8x512xf32> to vector<8x512xbf16>
    %cst_22 = arith.constant dense<0.000000e+00> : vector<8x256xf32>
    %29 = tpu.matmul %28, %24, %cst_22 {dimension_numbers = #tpu.dot_dimension_numbers<[1], [0], [0], [1], [0, 0, 1, 1], [], []>} : vector<8x512xbf16>, vector<512x256xbf16>, vector<8x256xf32> -> vector<8x256xf32>
    %30 = vector.broadcast %25 : vector<1x256xf32> to vector<8x256xf32>
    %31 = arith.addf %29, %30 : vector<8x256xf32>
    %c0_23 = arith.constant 0 : index
    %c0_24 = arith.constant 0 : index
    %32 = vector.load %arg10[%c0_23, %c0_24] : memref<8x256xf32, #tpu.memory_space<vmem>>, vector<8x256xf32>
    tpu.vector_store %arg10[%c0_23, %c0_24], %31 {strides = array<i32>} : memref<8x256xf32, #tpu.memory_space<vmem>>, vector<8x256xf32>,
    return
  }
  func.func @transform_0(%arg0: i32) -> (i32, i32) {
    %c0_i32 = arith.constant 0 : i32
    %c0_i32_0 = arith.constant 0 : i32
    return %arg0, %c0_i32 : i32, i32
  }
  func.func @transform_1(%arg0: i32) -> (i32, i32) {
    %c0_i32 = arith.constant 0 : i32
    %c0_i32_0 = arith.constant 0 : i32
    %c0_i32_1 = arith.constant 0 : i32
    return %c0_i32, %c0_i32_0 : i32, i32
  }
  func.func @transform_2(%arg0: i32) -> (i32, i32) {
    %c0_i32 = arith.constant 0 : i32
    %c0_i32_0 = arith.constant 0 : i32
    %c0_i32_1 = arith.constant 0 : i32
    return %c0_i32, %c0_i32_0 : i32, i32
  }
  func.func @transform_3(%arg0: i32) -> (i32, i32) {
    %c0_i32 = arith.constant 0 : i32
    %c0_i32_0 = arith.constant 0 : i32
    %c0_i32_1 = arith.constant 0 : i32
    return %c0_i32, %c0_i32_0 : i32, i32
  }
  func.func @transform_4(%arg0: i32) -> (i32, i32) {
    %c0_i32 = arith.constant 0 : i32
    %c0_i32_0 = arith.constant 0 : i32
    %c0_i32_1 = arith.constant 0 : i32
    return %c0_i32, %c0_i32_0 : i32, i32
  }
  func.func @transform_5(%arg0: i32) -> (i32, i32) {
    %c0_i32 = arith.constant 0 : i32
    %c0_i32_0 = arith.constant 0 : i32
    %c0_i32_1 = arith.constant 0 : i32
    return %c0_i32, %c0_i32_0 : i32, i32
  }
  func.func @transform_6(%arg0: i32) -> (i32, i32) {
    %c0_i32 = arith.constant 0 : i32
    %c0_i32_0 = arith.constant 0 : i32
    %c0_i32_1 = arith.constant 0 : i32
    return %c0_i32, %c0_i32_0 : i32, i32
  }
  func.func @transform_7(%arg0: i32) -> (i32, i32) {
    %c0_i32 = arith.constant 0 : i32
    %c0_i32_0 = arith.constant 0 : i32
    %c0_i32_1 = arith.constant 0 : i32
    return %c0_i32, %c0_i32_0 : i32, i32
  }
  func.func @transform_8(%arg0: i32) -> (i32, i32) {
    %c0_i32 = arith.constant 0 : i32
    %c0_i32_0 = arith.constant 0 : i32
    %c0_i32_1 = arith.constant 0 : i32
    return %c0_i32, %c0_i32_0 : i32, i32
  }
  func.func @transform_9(%arg0: i32) -> (i32, i32) {
    %c0_i32 = arith.constant 0 : i32
    %c0_i32_0 = arith.constant 0 : i32
    return %arg0, %c0_i32 : i32, i32
  }
}

</mosaic_0001>

<llo_original>
// kernel: tpu_custom_call.1
$region0: #{tpu_custom_call.1}
  #allocation0 [shape = 'u32[]', space=smem, size = 0x4, offset = 0x4, fixed_abs, tag = 'smem constant byte address 0x4 - core index']
  #allocation1 [shape = 'u32[144,128]{1,0:T(1,128)}', space=vmem, size = 0x12000, scoped, tag = 'internal scratch']
  %s0 = inlined_call_operand.hbm [shape: f32[8,256], index: 0, kind: input, shape index: {}]
  %s1 = inlined_call_operand.hbm [shape: bf16[256,512], index: 1, kind: input, shape index: {}]
  %s2 = inlined_call_operand.hbm [shape: f32[1,512], index: 2, kind: input, shape index: {}]
  %s3 = inlined_call_operand.hbm [shape: bf16[512,1024], index: 3, kind: input, shape index: {}]
  %s4 = inlined_call_operand.hbm [shape: f32[1,1024], index: 4, kind: input, shape index: {}]
  %s5 = inlined_call_operand.hbm [shape: bf16[1024,512], index: 5, kind: input, shape index: {}]
  %s6 = inlined_call_operand.vmem [shape: f32[1,512], index: 6, kind: input, shape index: {}]
  %s7 = inlined_call_operand.hbm [shape: bf16[512,256], index: 7, kind: input, shape index: {}]
  %s8 = inlined_call_operand.vmem [shape: f32[1,256], index: 8, kind: input, shape index: {}]
  %s9 = inlined_call_operand.hbm [shape: f32[8,256], index: 9, kind: output, shape index: {}]
  %s10 = sld [smem:[#allocation0]]
  $region74: #{tpu_custom_call.1} parent=0
    _
  %s12 = ssub.s32 1, %s10
  %s13 = scalar_select 0, %s12, %s10
  $region1: #{tpu_custom_call.1} parent=0
    #allocation2 [shape = 'u8[8192]{0}', space=vmem, size = 0x2000, scoped, tag = 'input window, operand 0, single buffered']
    #allocation3 [shape = 's32[1]{0}', space=sflag, size = 0x4, scoped, tag = 'scoped memory for tpu_custom_call.1']
    #allocation4 [shape = 's32[1]{0}', space=sflag, size = 0x4, scoped, tag = 'scoped memory for tpu_custom_call.1']
    #allocation5 [shape = 'u8[262144]{0}', space=vmem, size = 0x40000, scoped, tag = 'input window, operand 1, single buffered']
    #allocation6 [shape = 's32[1]{0}', space=sflag, size = 0x4, scoped, tag = 'scoped memory for tpu_custom_call.1']
    #allocation7 [shape = 'u8[2048]{0}', space=vmem, size = 0x800, scoped, tag = 'input window, operand 2, single buffered']
    #allocation8 [shape = 'u8[1048576]{0}', space=vmem, size = 0x100000, scoped, tag = 'input window, operand 3, single buffered']
    #allocation9 [shape = 's32[1]{0}', space=sflag, size = 0x4, scoped, tag = 'scoped memory for tpu_custom_call.1']
    #allocation10 [shape = 'u8[4096]{0}', space=vmem, size = 0x1000, scoped, tag = 'input window, operand 4, single buffered']
    #allocation11 [shape = 'u8[1048576]{0}', space=vmem, size = 0x100000, scoped, tag = 'input window, operand 5, single buffered']
    #allocation12 [shape = 's32[1]{0}', space=sflag, size = 0x4, scoped, tag = 'scoped memory for tpu_custom_call.1']
    #allocation13 [shape = 'u8[262144]{0}', space=vmem, size = 0x40000, scoped, tag = 'input window, operand 7, single buffered']
    #allocation14 [shape = 'u8[8192]{0}', space=vmem, size = 0x2000, scoped, tag = 'output window, operand 0, single buffered']
    %14 = vsyncpa [#allocation3], 0
    %15 = vsyncpa [#allocation6], 0
    %16 = vsyncpa [#allocation9], 0
    %17 = vsyncpa [#allocation12], 0
    %18 = vsyncpa [#allocation4], 0
    // Predicated region
    $region2: #{tpu_custom_call.1} parent=1 // pred_check
      _
    $region3: #{tpu_custom_call.1} parent=1 // pred_check_branch
      %20 = sbr.rel (0) target = $region5
    $region4: #{tpu_custom_call.1} parent=1 // pred_region
      %s22 = ssub.s32 256, 256
      %23 = vsyncadd [#allocation3], %s22
      %s25 = sshll.u32 [#allocation2], 4
      %s26 = int_to_ptr.vmem [resolvable:$true] %s25
      %28 = dma.hbm_to_vmem [thread:$0]  %s0, 256, %s26, [#allocation3]
    $region5: #{tpu_custom_call.1} parent=1 // pred_fallthru
      _
    // Predicated region
    $region6: #{tpu_custom_call.1} parent=1 // pred_check
      _
    $region7: #{tpu_custom_call.1} parent=1 // pred_check_branch
      %30 = sbr.rel (0) target = $region9
    $region8: #{tpu_custom_call.1} parent=1 // pred_region
      %s32 = ssub.s32 8192, 8192
      %33 = vsyncadd [#allocation6], %s32
      %s34 = sshll.u32 [#allocation5], 4
      %s35 = int_to_ptr.vmem [resolvable:$true] %s34
      %40 = dma.hbm_to_vmem [thread:$0]  %s1, 8192, %s35, [#allocation6], 256, 256, 16
    $region9: #{tpu_custom_call.1} parent=1 // pred_fallthru
      _
    // Predicated region
    $region10: #{tpu_custom_call.1} parent=1 // pred_check
      _
    $region11: #{tpu_custom_call.1} parent=1 // pred_check_branch
      %42 = sbr.rel (0) target = $region13
    $region12: #{tpu_custom_call.1} parent=1 // pred_region
      %s44 = ssub.s32 64, 64
      %45 = vsyncadd [#allocation6], %s44
      %s47 = sshll.u32 [#allocation7], 4
      %s48 = int_to_ptr.vmem [resolvable:$true] %s47
      %50 = dma.hbm_to_vmem [thread:$0]  %s2, 64, %s48, [#allocation6]
    $region13: #{tpu_custom_call.1} parent=1 // pred_fallthru
      _
    // Predicated region
    $region14: #{tpu_custom_call.1} parent=1 // pred_check
      _
    $region15: #{tpu_custom_call.1} parent=1 // pred_check_branch
      %52 = sbr.rel (0) target = $region17
    $region16: #{tpu_custom_call.1} parent=1 // pred_region
      %s54 = ssub.s32 32768, 32768
      %55 = vsyncadd [#allocation9], %s54
      %s56 = sshll.u32 [#allocation8], 4
      %s57 = int_to_ptr.vmem [resolvable:$true] %s56
      %62 = dma.hbm_to_vmem [thread:$0]  %s3, 32768, %s57, [#allocation9], 512, 512, 32
    $region17: #{tpu_custom_call.1} parent=1 // pred_fallthru
      _
    // Predicated region
    $region18: #{tpu_custom_call.1} parent=1 // pred_check
      _
    $region19: #{tpu_custom_call.1} parent=1 // pred_check_branch
      %64 = sbr.rel (0) target = $region21
    $region20: #{tpu_custom_call.1} parent=1 // pred_region
      %s66 = ssub.s32 128, 128
      %67 = vsyncadd [#allocation9], %s66
      %s69 = sshll.u32 [#allocation10], 4
      %s70 = int_to_ptr.vmem [resolvable:$true] %s69
      %72 = dma.hbm_to_vmem [thread:$0]  %s4, 128, %s70, [#allocation9]
    $region21: #{tpu_custom_call.1} parent=1 // pred_fallthru
      _
    // Predicated region
    $region22: #{tpu_custom_call.1} parent=1 // pred_check
      _
    $region23: #{tpu_custom_call.1} parent=1 // pred_check_branch
      %74 = sbr.rel (0) target = $region25
    $region24: #{tpu_custom_call.1} parent=1 // pred_region
      %s76 = ssub.s32 32768, 32768
      %77 = vsyncadd [#allocation12], %s76
      %s78 = sshll.u32 [#allocation11], 4
      %s79 = int_to_ptr.vmem [resolvable:$true] %s78
      %84 = dma.hbm_to_vmem [thread:$0]  %s5, 32768, %s79, [#allocation12], 256, 256, 16
    $region25: #{tpu_custom_call.1} parent=1 // pred_fallthru
      _
    // Predicated region
    $region26: #{tpu_custom_call.1} parent=1 // pred_check
      _
    $region27: #{tpu_custom_call.1} parent=1 // pred_check_branch
      %86 = sbr.rel (0) target = $region29
    $region28: #{tpu_custom_call.1} parent=1 // pred_region
      _
    $region29: #{tpu_custom_call.1} parent=1 // pred_fallthru
      _
    // Predicated region
    $region30: #{tpu_custom_call.1} parent=1 // pred_check
      _
    $region31: #{tpu_custom_call.1} parent=1 // pred_check_branch
      %88 = sbr.rel (0) target = $region33
    $region32: #{tpu_custom_call.1} parent=1 // pred_region
      %s90 = ssub.s32 8192, 8192
      %91 = vsyncadd [#allocation12], %s90
      %s92 = sshll.u32 [#allocation13], 4
      %s93 = int_to_ptr.vmem [resolvable:$true] %s92
      %98 = dma.hbm_to_vmem [thread:$0]  %s7, 8192, %s93, [#allocation12], 128, 128, 8
    $region33: #{tpu_custom_call.1} parent=1 // pred_fallthru
      _
    // Predicated region
    $region34: #{tpu_custom_call.1} parent=1 // pred_check
      _
    $region35: #{tpu_custom_call.1} parent=1 // pred_check_branch
      %100 = sbr.rel (0) target = $region37
    $region36: #{tpu_custom_call.1} parent=1 // pred_region
      _
    $region37: #{tpu_custom_call.1} parent=1 // pred_fallthru
      _
    // Predicated region
    $region38: #{tpu_custom_call.1} parent=1 // pred_check
      _
    $region39: #{tpu_custom_call.1} parent=1 // pred_check_branch
      %102 = sbr.rel (0) target = $region41
    $region40: #{tpu_custom_call.1} parent=1 // pred_region
      %103 = dma.done [#allocation3], 256
    $region41: #{tpu_custom_call.1} parent=1 // pred_fallthru
      _
    // Predicated region
    $region42: #{tpu_custom_call.1} parent=1 // pred_check
      _
    $region43: #{tpu_custom_call.1} parent=1 // pred_check_branch
      %105 = sbr.rel (0) target = $region45
    $region44: #{tpu_custom_call.1} parent=1 // pred_region
      %106 = dma.done [#allocation6], 8192
    $region45: #{tpu_custom_call.1} parent=1 // pred_fallthru
      _
    // Predicated region
    $region46: #{tpu_custom_call.1} parent=1 // pred_check
      _
    $region47: #{tpu_custom_call.1} parent=1 // pred_check_branch
      %108 = sbr.rel (0) target = $region49
    $region48: #{tpu_custom_call.1} parent=1 // pred_region
      %109 = dma.done [#allocation6], 64
    $region49: #{tpu_custom_call.1} parent=1 // pred_fallthru
      _
    // Predicated region
    $region50: #{tpu_custom_call.1} parent=1 // pred_check
      _
    $region51: #{tpu_custom_call.1} parent=1 // pred_check_branch
      %111 = sbr.rel (0) target = $region53
    $region52: #{tpu_custom_call.1} parent=1 // pred_region
      %112 = dma.done [#allocation9], 32768
    $region53: #{tpu_custom_call.1} parent=1 // pred_fallthru
      _
    // Predicated region
    $region54: #{tpu_custom_call.1} parent=1 // pred_check
      _
    $region55: #{tpu_custom_call.1} parent=1 // pred_check_branch
      %114 = sbr.rel (0) target = $region57
    $region56: #{tpu_custom_call.1} parent=1 // pred_region
      %115 = dma.done [#allocation9], 128
    $region57: #{tpu_custom_call.1} parent=1 // pred_fallthru
      _
    // Predicated region
    $region58: #{tpu_custom_call.1} parent=1 // pred_check
      _
    $region59: #{tpu_custom_call.1} parent=1 // pred_check_branch
      %117 = sbr.rel (0) target = $region61
    $region60: #{tpu_custom_call.1} parent=1 // pred_region
      %118 = dma.done [#allocation12], 32768
    $region61: #{tpu_custom_call.1} parent=1 // pred_fallthru
      _
    // Predicated region
    $region62: #{tpu_custom_call.1} parent=1 // pred_check
      _
    $region63: #{tpu_custom_call.1} parent=1 // pred_check_branch
      %120 = sbr.rel (0) target = $region65
    $region64: #{tpu_custom_call.1} parent=1 // pred_region
      %121 = dma.done [#allocation12], 8192
    $region65: #{tpu_custom_call.1} parent=1 // pred_fallthru
      _
    %v122 = vld [vmem:[#allocation2] sm:$0xff]
    %v123 = vld [vmem:[#allocation2 + $0x8] sm:$0xff]
    %v124 = vld [vmem:[#allocation5] sm:$0xff]
    %v125 = vld [vmem:[#allocation5 + $0x8] sm:$0xff]
    %v126 = vld [vmem:[#allocation5 + $0x10] sm:$0xff]
    %v127 = vld [vmem:[#allocation5 + $0x18] sm:$0xff]
    %v128 = vld [vmem:[#allocation5 + $0x20] sm:$0xff]
    %v129 = vld [vmem:[#allocation5 + $0x28] sm:$0xff]
    %v130 = vld [vmem:[#allocation5 + $0x30] sm:$0xff]
    %v131 = vld [vmem:[#allocation5 + $0x38] sm:$0xff]
    %v132 = vld [vmem:[#allocation5 + $0x40] sm:$0xff]
    %v133 = vld [vmem:[#allocation5 + $0x48] sm:$0xff]
    %v134 = vld [vmem:[#allocation5 + $0x50] sm:$0xff]
    %v135 = vld [vmem:[#allocation5 + $0x58] sm:$0xff]
    %v136 = vld [vmem:[#allocation5 + $0x60] sm:$0xff]
    %v137 = vld [vmem:[#allocation5 + $0x68] sm:$0xff]
    %v138 = vld [vmem:[#allocation5 + $0x70] sm:$0xff]
    %v139 = vld [vmem:[#allocation5 + $0x78] sm:$0xff]
    %v140 = vld [vmem:[#allocation5 + $0x80] sm:$0xff]
    %v141 = vld [vmem:[#allocation5 + $0x88] sm:$0xff]
    %v142 = vld [vmem:[#allocation5 + $0x90] sm:$0xff]
    %v143 = vld [vmem:[#allocation5 + $0x98] sm:$0xff]
    %v144 = vld [vmem:[#allocation5 + $0xa0] sm:$0xff]
    %v145 = vld [vmem:[#allocation5 + $0xa8] sm:$0xff]
    %v146 = vld [vmem:[#allocation5 + $0xb0] sm:$0xff]
    %v147 = vld [vmem:[#allocation5 + $0xb8] sm:$0xff]
    %v148 = vld [vmem:[#allocation5 + $0xc0] sm:$0xff]
    %v149 = vld [vmem:[#allocation5 + $0xc8] sm:$0xff]
    %v150 = vld [vmem:[#allocation5 + $0xd0] sm:$0xff]
    %v151 = vld [vmem:[#allocation5 + $0xd8] sm:$0xff]
    %v152 = vld [vmem:[#allocation5 + $0xe0] sm:$0xff]
    %v153 = vld [vmem:[#allocation5 + $0xe8] sm:$0xff]
    %v154 = vld [vmem:[#allocation5 + $0xf0] sm:$0xff]
    %v155 = vld [vmem:[#allocation5 + $0xf8] sm:$0xff]
    %v156 = vld [vmem:[#allocation5 + $0x100] sm:$0xff]
    %v157 = vld [vmem:[#allocation5 + $0x108] sm:$0xff]
    %v158 = vld [vmem:[#allocation5 + $0x110] sm:$0xff]
    %v159 = vld [vmem:[#allocation5 + $0x118] sm:$0xff]
    %v160 = vld [vmem:[#allocation5 + $0x120] sm:$0xff]
    %v161 = vld [vmem:[#allocation5 + $0x128] sm:$0xff]
    %v162 = vld [vmem:[#allocation5 + $0x130] sm:$0xff]
    %v163 = vld [vmem:[#allocation5 + $0x138] sm:$0xff]
    %v164 = vld [vmem:[#allocation5 + $0x140] sm:$0xff]
    %v165 = vld [vmem:[#allocation5 + $0x148] sm:$0xff]
    %v166 = vld [vmem:[#allocation5 + $0x150] sm:$0xff]
    %v167 = vld [vmem:[#allocation5 + $0x158] sm:$0xff]
    %v168 = vld [vmem:[#allocation5 + $0x160] sm:$0xff]
    %v169 = vld [vmem:[#allocation5 + $0x168] sm:$0xff]
    %v170 = vld [vmem:[#allocation5 + $0x170] sm:$0xff]
    %v171 = vld [vmem:[#allocation5 + $0x178] sm:$0xff]
    %v172 = vld [vmem:[#allocation5 + $0x180] sm:$0xff]
    %v173 = vld [vmem:[#allocation5 + $0x188] sm:$0xff]
    %v174 = vld [vmem:[#allocation5 + $0x190] sm:$0xff]
    %v175 = vld [vmem:[#allocation5 + $0x198] sm:$0xff]
    %v176 = vld [vmem:[#allocation5 + $0x1a0] sm:$0xff]
    %v177 = vld [vmem:[#allocation5 + $0x1a8] sm:$0xff]
    %v178 = vld [vmem:[#allocation5 + $0x1b0] sm:$0xff]
    %v179 = vld [vmem:[#allocation5 + $0x1b8] sm:$0xff]
    %v180 = vld [vmem:[#allocation5 + $0x1c0] sm:$0xff]
    %v181 = vld [vmem:[#allocation5 + $0x1c8] sm:$0xff]
    %v182 = vld [vmem:[#allocation5 + $0x1d0] sm:$0xff]
    %v183 = vld [vmem:[#allocation5 + $0x1d8] sm:$0xff]
    %v184 = vld [vmem:[#allocation5 + $0x1e0] sm:$0xff]
    %v185 = vld [vmem:[#allocation5 + $0x1e8] sm:$0xff]
    %v186 = vld [vmem:[#allocation5 + $0x1f0] sm:$0xff]
    %v187 = vld [vmem:[#allocation5 + $0x1f8] sm:$0xff]
    %v188 = vld [vmem:[#allocation7] sm:$0xf]
    %v189 = vpack.c.bf16 %v122, %v122
    %v190 = vpack.c.bf16 %v123, %v123
    %v192 = vlaneseq
    %v193 = vshrl.u32 %v192, 7
    %v194 = vsub.s32 0, %v193
    %v195 = vrot.slane %v188, %v194
    %v196 = vlaneseq
    %v197 = vshrl.u32 %v196, 7
    %v198 = vsub.s32 1, %v197
    %v199 = vrot.slane %v188, %v198
    %v200 = vlaneseq
    %v201 = vshrl.u32 %v200, 7
    %v202 = vsub.s32 2, %v201
    %v203 = vrot.slane %v188, %v202
    %v204 = vlaneseq
    %v205 = vshrl.u32 %v204, 7
    %v206 = vsub.s32 3, %v205
    %v207 = vrot.slane %v188, %v206
    %v276 = vunpack.c.l.b16 %v124
    %v277 = vunpack.c.h.b16 %v124
    %v278 = vunpack.c.l.b16 %v125
    %v279 = vunpack.c.h.b16 %v125
    %v280 = vunpack.c.l.b16 %v126
    %v281 = vunpack.c.h.b16 %v126
    %v282 = vunpack.c.l.b16 %v127
    %v283 = vunpack.c.h.b16 %v127
    %v284 = vunpack.c.l.b16 %v128
    %v285 = vunpack.c.h.b16 %v128
    %v286 = vunpack.c.l.b16 %v129
    %v287 = vunpack.c.h.b16 %v129
    %v288 = vunpack.c.l.b16 %v130
    %v289 = vunpack.c.h.b16 %v130
    %v290 = vunpack.c.l.b16 %v131
    %v291 = vunpack.c.h.b16 %v131
    %v292 = vunpack.c.l.b16 %v132
    %v293 = vunpack.c.h.b16 %v132
    %v294 = vunpack.c.l.b16 %v133
    %v295 = vunpack.c.h.b16 %v133
    %v296 = vunpack.c.l.b16 %v134
    %v297 = vunpack.c.h.b16 %v134
    %v298 = vunpack.c.l.b16 %v135
    %v299 = vunpack.c.h.b16 %v135
    %v300 = vunpack.c.l.b16 %v136
    %v301 = vunpack.c.h.b16 %v136
    %v302 = vunpack.c.l.b16 %v137
    %v303 = vunpack.c.h.b16 %v137
    %v304 = vunpack.c.l.b16 %v138
    %v305 = vunpack.c.h.b16 %v138
    %v306 = vunpack.c.l.b16 %v139
    %v307 = vunpack.c.h.b16 %v139
    %v308 = vunpack.c.l.b16 %v140
    %v309 = vunpack.c.h.b16 %v140
    %v310 = vunpack.c.l.b16 %v141
    %v311 = vunpack.c.h.b16 %v141
    %v312 = vunpack.c.l.b16 %v142
    %v313 = vunpack.c.h.b16 %v142
    %v314 = vunpack.c.l.b16 %v143
    %v315 = vunpack.c.h.b16 %v143
    %v316 = vunpack.c.l.b16 %v144
    %v317 = vunpack.c.h.b16 %v144
    %v318 = vunpack.c.l.b16 %v145
    %v319 = vunpack.c.h.b16 %v145
    %v320 = vunpack.c.l.b16 %v146
    %v321 = vunpack.c.h.b16 %v146
    %v322 = vunpack.c.l.b16 %v147
    %v323 = vunpack.c.h.b16 %v147
    %v324 = vunpack.c.l.b16 %v148
    %v325 = vunpack.c.h.b16 %v148
    %v326 = vunpack.c.l.b16 %v149
    %v327 = vunpack.c.h.b16 %v149
    %v328 = vunpack.c.l.b16 %v150
    %v329 = vunpack.c.h.b16 %v150
    %v330 = vunpack.c.l.b16 %v151
    %v331 = vunpack.c.h.b16 %v151
    %v332 = vunpack.c.l.b16 %v152
    %v333 = vunpack.c.h.b16 %v152
    %v334 = vunpack.c.l.b16 %v153
    %v335 = vunpack.c.h.b16 %v153
    %v336 = vunpack.c.l.b16 %v154
    %v337 = vunpack.c.h.b16 %v154
    %v338 = vunpack.c.l.b16 %v155
    %v339 = vunpack.c.h.b16 %v155
    %v340 = vunpack.c.l.b16 %v156
    %v341 = vunpack.c.h.b16 %v156
    %v342 = vunpack.c.l.b16 %v157
    %v343 = vunpack.c.h.b16 %v157
    %v344 = vunpack.c.l.b16 %v158
    %v345 = vunpack.c.h.b16 %v158
    %v346 = vunpack.c.l.b16 %v159
    %v347 = vunpack.c.h.b16 %v159
    %v348 = vunpack.c.l.b16 %v160
    %v349 = vunpack.c.h.b16 %v160
    %v350 = vunpack.c.l.b16 %v161
    %v351 = vunpack.c.h.b16 %v161
    %v352 = vunpack.c.l.b16 %v162
    %v353 = vunpack.c.h.b16 %v162
    %v354 = vunpack.c.l.b16 %v163
    %v355 = vunpack.c.h.b16 %v163
    %v356 = vunpack.c.l.b16 %v164
    %v357 = vunpack.c.h.b16 %v164
    %v358 = vunpack.c.l.b16 %v165
    %v359 = vunpack.c.h.b16 %v165
    %v360 = vunpack.c.l.b16 %v166
    %v361 = vunpack.c.h.b16 %v166
    %v362 = vunpack.c.l.b16 %v167
    %v363 = vunpack.c.h.b16 %v167
    %v364 = vunpack.c.l.b16 %v168
    %v365 = vunpack.c.h.b16 %v168
    %v366 = vunpack.c.l.b16 %v169
    %v367 = vunpack.c.h.b16 %v169
    %v368 = vunpack.c.l.b16 %v170
    %v369 = vunpack.c.h.b16 %v170
    %v370 = vunpack.c.l.b16 %v171
    %v371 = vunpack.c.h.b16 %v171
    %v372 = vunpack.c.l.b16 %v172
    %v373 = vunpack.c.h.b16 %v172
    %v374 = vunpack.c.l.b16 %v173
    %v375 = vunpack.c.h.b16 %v173
    %v376 = vunpack.c.l.b16 %v174
    %v377 = vunpack.c.h.b16 %v174
    %v378 = vunpack.c.l.b16 %v175
    %v379 = vunpack.c.h.b16 %v175
    %v380 = vunpack.c.l.b16 %v176
    %v381 = vunpack.c.h.b16 %v176
    %v382 = vunpack.c.l.b16 %v177
    %v383 = vunpack.c.h.b16 %v177
    %v384 = vunpack.c.l.b16 %v178
    %v385 = vunpack.c.h.b16 %v178
    %v386 = vunpack.c.l.b16 %v179
    %v387 = vunpack.c.h.b16 %v179
    %v388 = vunpack.c.l.b16 %v180
    %v389 = vunpack.c.h.b16 %v180
    %v390 = vunpack.c.l.b16 %v181
    %v391 = vunpack.c.h.b16 %v181
    %v392 = vunpack.c.l.b16 %v182
    %v393 = vunpack.c.h.b16 %v182
    %v394 = vunpack.c.l.b16 %v183
    %v395 = vunpack.c.h.b16 %v183
    %v396 = vunpack.c.l.b16 %v184
    %v397 = vunpack.c.h.b16 %v184
    %v398 = vunpack.c.l.b16 %v185
    %v399 = vunpack.c.h.b16 %v185
    %v400 = vunpack.c.l.b16 %v186
    %v401 = vunpack.c.h.b16 %v186
    %v402 = vunpack.c.l.b16 %v187
    %v403 = vunpack.c.h.b16 %v187
    %v404 = vpack.c.b16 %v280, %v276
    %v405 = vpack.c.b16 %v281, %v277
    %v406 = vpack.c.b16 %v282, %v278
    %v407 = vpack.c.b16 %v283, %v279
    %v408 = vpack.c.b16 %v288, %v284
    %v409 = vpack.c.b16 %v289, %v285
    %v410 = vpack.c.b16 %v290, %v286
    %v411 = vpack.c.b16 %v291, %v287
    %v412 = vpack.c.b16 %v296, %v292
    %v413 = vpack.c.b16 %v297, %v293
    %v414 = vpack.c.b16 %v298, %v294
    %v415 = vpack.c.b16 %v299, %v295
    %v416 = vpack.c.b16 %v304, %v300
    %v417 = vpack.c.b16 %v305, %v301
    %v418 = vpack.c.b16 %v306, %v302
    %v419 = vpack.c.b16 %v307, %v303
    %v420 = vpack.c.b16 %v312, %v308
    %v421 = vpack.c.b16 %v313, %v309
    %v422 = vpack.c.b16 %v314, %v310
    %v423 = vpack.c.b16 %v315, %v311
    %v424 = vpack.c.b16 %v320, %v316
    %v425 = vpack.c.b16 %v321, %v317
    %v426 = vpack.c.b16 %v322, %v318
    %v427 = vpack.c.b16 %v323, %v319
    %v428 = vpack.c.b16 %v328, %v324
    %v429 = vpack.c.b16 %v329, %v325
    %v430 = vpack.c.b16 %v330, %v326
    %v431 = vpack.c.b16 %v331, %v327
    %v432 = vpack.c.b16 %v336, %v332
    %v433 = vpack.c.b16 %v337, %v333
    %v434 = vpack.c.b16 %v338, %v334
    %v435 = vpack.c.b16 %v339, %v335
    %v436 = vpack.c.b16 %v344, %v340
    %v437 = vpack.c.b16 %v345, %v341
    %v438 = vpack.c.b16 %v346, %v342
    %v439 = vpack.c.b16 %v347, %v343
    %v440 = vpack.c.b16 %v352, %v348
    %v441 = vpack.c.b16 %v353, %v349
    %v442 = vpack.c.b16 %v354, %v350
    %v443 = vpack.c.b16 %v355, %v351
    %v444 = vpack.c.b16 %v360, %v356
    %v445 = vpack.c.b16 %v361, %v357
    %v446 = vpack.c.b16 %v362, %v358
    %v447 = vpack.c.b16 %v363, %v359
    %v448 = vpack.c.b16 %v368, %v364
    %v449 = vpack.c.b16 %v369, %v365
    %v450 = vpack.c.b16 %v370, %v366
    %v451 = vpack.c.b16 %v371, %v367
    %v452 = vpack.c.b16 %v376, %v372
    %v453 = vpack.c.b16 %v377, %v373
    %v454 = vpack.c.b16 %v378, %v374
    %v455 = vpack.c.b16 %v379, %v375
    %v456 = vpack.c.b16 %v384, %v380
    %v457 = vpack.c.b16 %v385, %v381
    %v458 = vpack.c.b16 %v386, %v382
    %v459 = vpack.c.b16 %v387, %v383
    %v460 = vpack.c.b16 %v392, %v388
    %v461 = vpack.c.b16 %v393, %v389
    %v462 = vpack.c.b16 %v394, %v390
    %v463 = vpack.c.b16 %v395, %v391
    %v464 = vpack.c.b16 %v400, %v396
    %v465 = vpack.c.b16 %v401, %v397
    %v466 = vpack.c.b16 %v402, %v398
    %v467 = vpack.c.b16 %v403, %v399
    %532 = vmatprep.subr.bf16.mxu0 %v433
    %533 = vmatpush1.bf16.msra.mxu0 %v432
    %534 = vmatprep.subr.bf16.mxu0 %v429
    %535 = vmatpush1.bf16.msra.mxu0 %v428
    %536 = vmatprep.subr.bf16.mxu0 %v425
    %537 = vmatpush1.bf16.msra.mxu0 %v424
    %538 = vmatprep.subr.bf16.mxu0 %v421
    %539 = vmatpush1.bf16.msra.mxu0 %v420
    %540 = vmatprep.subr.bf16.mxu0 %v417
    %541 = vmatpush1.bf16.msra.mxu0 %v416
    %542 = vmatprep.subr.bf16.mxu0 %v413
    %543 = vmatpush1.bf16.msra.mxu0 %v412
    %544 = vmatprep.subr.bf16.mxu0 %v409
    %545 = vmatpush1.bf16.msra.mxu0 %v408
    %546 = vmatprep.subr.bf16.mxu0 %v405
    %547 = vmatpush1.bf16.msra.mxu0 %v404
    %548 = vmatprep.subr.bf16.mxu0 %v465
    %549 = vmatpush2.bf16.msra.mxu0 %v464
    %550 = vmatprep.subr.bf16.mxu0 %v461
    %551 = vmatpush2.bf16.msra.mxu0 %v460
    %552 = vmatprep.subr.bf16.mxu0 %v457
    %553 = vmatpush2.bf16.msra.mxu0 %v456
    %554 = vmatprep.subr.bf16.mxu0 %v453
    %555 = vmatpush2.bf16.msra.mxu0 %v452
    %556 = vmatprep.subr.bf16.mxu0 %v449
    %557 = vmatpush2.bf16.msra.mxu0 %v448
    %558 = vmatprep.subr.bf16.mxu0 %v445
    %559 = vmatpush2.bf16.msra.mxu0 %v444
    %560 = vmatprep.subr.bf16.mxu0 %v441
    %561 = vmatpush2.bf16.msra.mxu0 %v440
    %562 = vmatprep.subr.bf16.mxu0 %v437
    %563 = vmatpush2.bf16.msra.mxu0 %v436
    %564 = vmatprep.mubr.bf16.mxu0 %v190
    %565 = vmatmul.mubr.bf16.gmra.mxu0 %v189
    %v566 = vpop.f32.mrf.mxu0
    %v567 = vadd.f32 %v195, %v566
    %v568 = vpop.f32.mrf.mxu0
    %v569 = vadd.f32 %v199, %v568
    %v570 = vpop.f32.mrf.mxu0
    %v571 = vpop.f32.mrf.mxu0
    %572 = vdwg.mxu0
    %573 = vmatprep.subr.bf16.mxu0 %v435
    %574 = vmatpush1.bf16.msra.mxu0 %v434
    %575 = vmatprep.subr.bf16.mxu0 %v431
    %576 = vmatpush1.bf16.msra.mxu0 %v430
    %577 = vmatprep.subr.bf16.mxu0 %v427
    %578 = vmatpush1.bf16.msra.mxu0 %v426
    %579 = vmatprep.subr.bf16.mxu0 %v423
    %580 = vmatpush1.bf16.msra.mxu0 %v422
    %581 = vmatprep.subr.bf16.mxu0 %v419
    %582 = vmatpush1.bf16.msra.mxu0 %v418
    %583 = vmatprep.subr.bf16.mxu0 %v415
    %584 = vmatpush1.bf16.msra.mxu0 %v414
    %585 = vmatprep.subr.bf16.mxu0 %v411
    %586 = vmatpush1.bf16.msra.mxu0 %v410
    %587 = vmatprep.subr.bf16.mxu0 %v407
    %588 = vmatpush1.bf16.msra.mxu0 %v406
    %589 = vmatprep.subr.bf16.mxu0 %v467
    %590 = vmatpush2.bf16.msra.mxu0 %v466
    %591 = vmatprep.subr.bf16.mxu0 %v463
    %592 = vmatpush2.bf16.msra.mxu0 %v462
    %593 = vmatprep.subr.bf16.mxu0 %v459
    %594 = vmatpush2.bf16.msra.mxu0 %v458
    %595 = vmatprep.subr.bf16.mxu0 %v455
    %596 = vmatpush2.bf16.msra.mxu0 %v454
    %597 = vmatprep.subr.bf16.mxu0 %v451
    %598 = vmatpush2.bf16.msra.mxu0 %v450
    %599 = vmatprep.subr.bf16.mxu0 %v447
    %600 = vmatpush2.bf16.msra.mxu0 %v446
    %601 = vmatprep.subr.bf16.mxu0 %v443
    %602 = vmatpush2.bf16.msra.mxu0 %v442
    %603 = vmatprep.subr.bf16.mxu0 %v439
    %604 = vmatpush2.bf16.msra.mxu0 %v438
    %605 = vmatprep.mubr.bf16.mxu0 %v190
    %606 = vmatmul.mubr.bf16.gmra.mxu0 %v189
    %v607 = vpop.f32.mrf.mxu0
    %v608 = vadd.f32 %v203, %v607
    %v609 = vpop.f32.mrf.mxu0
    %v610 = vadd.f32 %v207, %v609
    %v611 = vpop.f32.mrf.mxu0
    %v612 = vpop.f32.mrf.mxu0
    %613 = vdwg.mxu0
    %v614 = vld [vmem:[#allocation8] sm:$0xff]
    %v615 = vld [vmem:[#allocation8 + $0x8] sm:$0xff]
    %v616 = vld [vmem:[#allocation8 + $0x10] sm:$0xff]
    %v617 = vld [vmem:[#allocation8 + $0x18] sm:$0xff]
    %v618 = vld [vmem:[#allocation8 + $0x20] sm:$0xff]
    %v619 = vld [vmem:[#allocation8 + $0x28] sm:$0xff]
    %v620 = vld [vmem:[#allocation8 + $0x30] sm:$0xff]
    %v621 = vld [vmem:[#allocation8 + $0x38] sm:$0xff]
    %v622 = vld [vmem:[#allocation8 + $0x40] sm:$0xff]
    %v623 = vld [vmem:[#allocation8 + $0x48] sm:$0xff]
    %v624 = vld [vmem:[#allocation8 + $0x50] sm:$0xff]
    %v625 = vld [vmem:[#allocation8 + $0x58] sm:$0xff]
    %v626 = vld [vmem:[#allocation8 + $0x60] sm:$0xff]
    %v627 = vld [vmem:[#allocation8 + $0x68] sm:$0xff]
    %v628 = vld [vmem:[#allocation8 + $0x70] sm:$0xff]
    %v629 = vld [vmem:[#allocation8 + $0x78] sm:$0xff]
    %v630 = vld [vmem:[#allocation8 + $0x80] sm:$0xff]
    %v631 = vld [vmem:[#allocation8 + $0x88] sm:$0xff]
    %v632 = vld [vmem:[#allocation8 + $0x90] sm:$0xff]
    %v633 = vld [vmem:[#allocation8 + $0x98] sm:$0xff]
    %v634 = vld [vmem:[#allocation8 + $0xa0] sm:$0xff]
    %v635 = vld [vmem:[#allocation8 + $0xa8] sm:$0xff]
    %v636 = vld [vmem:[#allocation8 + $0xb0] sm:$0xff]
    %v637 = vld [vmem:[#allocation8 + $0xb8] sm:$0xff]
    %v638 = vld [vmem:[#allocation8 + $0xc0] sm:$0xff]
    %v639 = vld [vmem:[#allocation8 + $0xc8] sm:$0xff]
    %v640 = vld [vmem:[#allocation8 + $0xd0] sm:$0xff]
    %v641 = vld [vmem:[#allocation8 + $0xd8] sm:$0xff]
    %v642 = vld [vmem:[#allocation8 + $0xe0] sm:$0xff]
    %v643 = vld [vmem:[#allocation8 + $0xe8] sm:$0xff]
    %v644 = vld [vmem:[#allocation8 + $0xf0] sm:$0xff]
    %v645 = vld [vmem:[#allocation8 + $0xf8] sm:$0xff]
    %v646 = vld [vmem:[#allocation8 + $0x100] sm:$0xff]
    %v647 = vld [vmem:[#allocation8 + $0x108] sm:$0xff]
    %v648 = vld [vmem:[#allocation8 + $0x110] sm:$0xff]
    %v649 = vld [vmem:[#allocation8 + $0x118] sm:$0xff]
    %v650 = vld [vmem:[#allocation8 + $0x120] sm:$0xff]
    %v651 = vld [vmem:[#allocation8 + $0x128] sm:$0xff]
    %v652 = vld [vmem:[#allocation8 + $0x130] sm:$0xff]
    %v653 = vld [vmem:[#allocation8 + $0x138] sm:$0xff]
    %v654 = vld [vmem:[#allocation8 + $0x140] sm:$0xff]
    %v655 = vld [vmem:[#allocation8 + $0x148] sm:$0xff]
    %v656 = vld [vmem:[#allocation8 + $0x150] sm:$0xff]
    %v657 = vld [vmem:[#allocation8 + $0x158] sm:$0xff]
    %v658 = vld [vmem:[#allocation8 + $0x160] sm:$0xff]
    %v659 = vld [vmem:[#allocation8 + $0x168] sm:$0xff]
    %v660 = vld [vmem:[#allocation8 + $0x170] sm:$0xff]
    %v661 = vld [vmem:[#allocation8 + $0x178] sm:$0xff]
    %v662 = vld [vmem:[#allocation8 + $0x180] sm:$0xff]
    %v663 = vld [vmem:[#allocation8 + $0x188] sm:$0xff]
    %v664 = vld [vmem:[#allocation8 + $0x190] sm:$0xff]
    %v665 = vld [vmem:[#allocation8 + $0x198] sm:$0xff]
    %v666 = vld [vmem:[#allocation8 + $0x1a0] sm:$0xff]
    %v667 = vld [vmem:[#allocation8 + $0x1a8] sm:$0xff]
    %v668 = vld [vmem:[#allocation8 + $0x1b0] sm:$0xff]
    %v669 = vld [vmem:[#allocation8 + $0x1b8] sm:$0xff]
    %v670 = vld [vmem:[#allocation8 + $0x1c0] sm:$0xff]
    %v671 = vld [vmem:[#allocation8 + $0x1c8] sm:$0xff]
    %v672 = vld [vmem:[#allocation8 + $0x1d0] sm:$0xff]
    %v673 = vld [vmem:[#allocation8 + $0x1d8] sm:$0xff]
    %v674 = vld [vmem:[#allocation8 + $0x1e0] sm:$0xff]
    %v675 = vld [vmem:[#allocation8 + $0x1e8] sm:$0xff]
    %v676 = vld [vmem:[#allocation8 + $0x1f0] sm:$0xff]
    %v677 = vld [vmem:[#allocation8 + $0x1f8] sm:$0xff]
    %v678 = vld [vmem:[#allocation8 + $0x200] sm:$0xff]
    %v679 = vld [vmem:[#allocation8 + $0x208] sm:$0xff]
    %v680 = vld [vmem:[#allocation8 + $0x210] sm:$0xff]
    %v681 = vld [vmem:[#allocation8 + $0x218] sm:$0xff]
    %v682 = vld [vmem:[#allocation8 + $0x220] sm:$0xff]
    %v683 = vld [vmem:[#allocation8 + $0x228] sm:$0xff]
    %v684 = vld [vmem:[#allocation8 + $0x230] sm:$0xff]
    %v685 = vld [vmem:[#allocation8 + $0x238] sm:$0xff]
    %v686 = vld [vmem:[#allocation8 + $0x240] sm:$0xff]
    %v687 = vld [vmem:[#allocation8 + $0x248] sm:$0xff]
    %v688 = vld [vmem:[#allocation8 + $0x250] sm:$0xff]
    %v689 = vld [vmem:[#allocation8 + $0x258] sm:$0xff]
    %v690 = vld [vmem:[#allocation8 + $0x260] sm:$0xff]
    %v691 = vld [vmem:[#allocation8 + $0x268] sm:$0xff]
    %v692 = vld [vmem:[#allocation8 + $0x270] sm:$0xff]
    %v693 = vld [vmem:[#allocation8 + $0x278] sm:$0xff]
    %v694 = vld [vmem:[#allocation8 + $0x280] sm:$0xff]
    %v695 = vld [vmem:[#allocation8 + $0x288] sm:$0xff]
    %v696 = vld [vmem:[#allocation8 + $0x290] sm:$0xff]
    %v697 = vld [vmem:[#allocation8 + $0x298] sm:$0xff]
    %v698 = vld [vmem:[#allocation8 + $0x2a0] sm:$0xff]
    %v699 = vld [vmem:[#allocation8 + $0x2a8] sm:$0xff]
    %v700 = vld [vmem:[#allocation8 + $0x2b0] sm:$0xff]
    %v701 = vld [vmem:[#allocation8 + $0x2b8] sm:$0xff]
    %v702 = vld [vmem:[#allocation8 + $0x2c0] sm:$0xff]
    %v703 = vld [vmem:[#allocation8 + $0x2c8] sm:$0xff]
    %v704 = vld [vmem:[#allocation8 + $0x2d0] sm:$0xff]
    %v705 = vld [vmem:[#allocation8 + $0x2d8] sm:$0xff]
    %v706 = vld [vmem:[#allocation8 + $0x2e0] sm:$0xff]
    %v707 = vld [vmem:[#allocation8 + $0x2e8] sm:$0xff]
    %v708 = vld [vmem:[#allocation8 + $0x2f0] sm:$0xff]
    %v709 = vld [vmem:[#allocation8 + $0x2f8] sm:$0xff]
    %v710 = vld [vmem:[#allocation8 + $0x300] sm:$0xff]
    %v711 = vld [vmem:[#allocation8 + $0x308] sm:$0xff]
    %v712 = vld [vmem:[#allocation8 + $0x310] sm:$0xff]
    %v713 = vld [vmem:[#allocation8 + $0x318] sm:$0xff]
    %v714 = vld [vmem:[#allocation8 + $0x320] sm:$0xff]
    %v715 = vld [vmem:[#allocation8 + $0x328] sm:$0xff]
    %v716 = vld [vmem:[#allocation8 + $0x330] sm:$0xff]
    %v717 = vld [vmem:[#allocation8 + $0x338] sm:$0xff]
    %v718 = vld [vmem:[#allocation8 + $0x340] sm:$0xff]
    %v719 = vld [vmem:[#allocation8 + $0x348] sm:$0xff]
    %v720 = vld [vmem:[#allocation8 + $0x350] sm:$0xff]
    %v721 = vld [vmem:[#allocation8 + $0x358] sm:$0xff]
    %v722 = vld [vmem:[#allocation8 + $0x360] sm:$0xff]
    %v723 = vld [vmem:[#allocation8 + $0x368] sm:$0xff]
    %v724 = vld [vmem:[#allocation8 + $0x370] sm:$0xff]
    %v725 = vld [vmem:[#allocation8 + $0x378] sm:$0xff]
    %v726 = vld [vmem:[#allocation8 + $0x380] sm:$0xff]
    %v727 = vld [vmem:[#allocation8 + $0x388] sm:$0xff]
    %v728 = vld [vmem:[#allocation8 + $0x390] sm:$0xff]
    %v729 = vld [vmem:[#allocation8 + $0x398] sm:$0xff]
    %v730 = vld [vmem:[#allocation8 + $0x3a0] sm:$0xff]
    %v731 = vld [vmem:[#allocation8 + $0x3a8] sm:$0xff]
    %v732 = vld [vmem:[#allocation8 + $0x3b0] sm:$0xff]
    %v733 = vld [vmem:[#allocation8 + $0x3b8] sm:$0xff]
    %v734 = vld [vmem:[#allocation8 + $0x3c0] sm:$0xff]
    %v735 = vld [vmem:[#allocation8 + $0x3c8] sm:$0xff]
    %v736 = vld [vmem:[#allocation8 + $0x3d0] sm:$0xff]
    %v737 = vld [vmem:[#allocation8 + $0x3d8] sm:$0xff]
    %v738 = vld [vmem:[#allocation8 + $0x3e0] sm:$0xff]
    %v739 = vld [vmem:[#allocation8 + $0x3e8] sm:$0xff]
    %v740 = vld [vmem:[#allocation8 + $0x3f0] sm:$0xff]
    %v741 = vld [vmem:[#allocation8 + $0x3f8] sm:$0xff]
    %v742 = vld [vmem:[#allocation8 + $0x400] sm:$0xff]
    %v743 = vld [vmem:[#allocation8 + $0x408] sm:$0xff]
    %v744 = vld [vmem:[#allocation8 + $0x410] sm:$0xff]
    %v745 = vld [vmem:[#allocation8 + $0x418] sm:$0xff]
    %v746 = vld [vmem:[#allocation8 + $0x420] sm:$0xff]
    %v747 = vld [vmem:[#allocation8 + $0x428] sm:$0xff]
    %v748 = vld [vmem:[#allocation8 + $0x430] sm:$0xff]
    %v749 = vld [vmem:[#allocation8 + $0x438] sm:$0xff]
    %v750 = vld [vmem:[#allocation8 + $0x440] sm:$0xff]
    %v751 = vld [vmem:[#allocation8 + $0x448] sm:$0xff]
    %v752 = vld [vmem:[#allocation8 + $0x450] sm:$0xff]
    %v753 = vld [vmem:[#allocation8 + $0x458] sm:$0xff]
    %v754 = vld [vmem:[#allocation8 + $0x460] sm:$0xff]
    %v755 = vld [vmem:[#allocation8 + $0x468] sm:$0xff]
    %v756 = vld [vmem:[#allocation8 + $0x470] sm:$0xff]
    %v757 = vld [vmem:[#allocation8 + $0x478] sm:$0xff]
    %v758 = vld [vmem:[#allocation8 + $0x480] sm:$0xff]
    %v759 = vld [vmem:[#allocation8 + $0x488] sm:$0xff]
    %v760 = vld [vmem:[#allocation8 + $0x490] sm:$0xff]
    %v761 = vld [vmem:[#allocation8 + $0x498] sm:$0xff]
    %v762 = vld [vmem:[#allocation8 + $0x4a0] sm:$0xff]
    %v763 = vld [vmem:[#allocation8 + $0x4a8] sm:$0xff]
    %v764 = vld [vmem:[#allocation8 + $0x4b0] sm:$0xff]
    %v765 = vld [vmem:[#allocation8 + $0x4b8] sm:$0xff]
    %v766 = vld [vmem:[#allocation8 + $0x4c0] sm:$0xff]
    %v767 = vld [vmem:[#allocation8 + $0x4c8] sm:$0xff]
    %v768 = vld [vmem:[#allocation8 + $0x4d0] sm:$0xff]
    %v769 = vld [vmem:[#allocation8 + $0x4d8] sm:$0xff]
    %v770 = vld [vmem:[#allocation8 + $0x4e0] sm:$0xff]
    %v771 = vld [vmem:[#allocation8 + $0x4e8] sm:$0xff]
    %v772 = vld [vmem:[#allocation8 + $0x4f0] sm:$0xff]
    %v773 = vld [vmem:[#allocation8 + $0x4f8] sm:$0xff]
    %v774 = vld [vmem:[#allocation8 + $0x500] sm:$0xff]
    %v775 = vld [vmem:[#allocation8 + $0x508] sm:$0xff]
    %v776 = vld [vmem:[#allocation8 + $0x510] sm:$0xff]
    %v777 = vld [vmem:[#allocation8 + $0x518] sm:$0xff]
    %v778 = vld [vmem:[#allocation8 + $0x520] sm:$0xff]
    %v779 = vld [vmem:[#allocation8 + $0x528] sm:$0xff]
    %v780 = vld [vmem:[#allocation8 + $0x530] sm:$0xff]
    %v781 = vld [vmem:[#allocation8 + $0x538] sm:$0xff]
    %v782 = vld [vmem:[#allocation8 + $0x540] sm:$0xff]
    %v783 = vld [vmem:[#allocation8 + $0x548] sm:$0xff]
    %v784 = vld [vmem:[#allocation8 + $0x550] sm:$0xff]
    %v785 = vld [vmem:[#allocation8 + $0x558] sm:$0xff]
    %v786 = vld [vmem:[#allocation8 + $0x560] sm:$0xff]
    %v787 = vld [vmem:[#allocation8 + $0x568] sm:$0xff]
    %v788 = vld [vmem:[#allocation8 + $0x570] sm:$0xff]
    %v789 = vld [vmem:[#allocation8 + $0x578] sm:$0xff]
    %v790 = vld [vmem:[#allocation8 + $0x580] sm:$0xff]
    %v791 = vld [vmem:[#allocation8 + $0x588] sm:$0xff]
    %v792 = vld [vmem:[#allocation8 + $0x590] sm:$0xff]
    %v793 = vld [vmem:[#allocation8 + $0x598] sm:$0xff]
    %v794 = vld [vmem:[#allocation8 + $0x5a0] sm:$0xff]
    %v795 = vld [vmem:[#allocation8 + $0x5a8] sm:$0xff]
    %v796 = vld [vmem:[#allocation8 + $0x5b0] sm:$0xff]
    %v797 = vld [vmem:[#allocation8 + $0x5b8] sm:$0xff]
    %v798 = vld [vmem:[#allocation8 + $0x5c0] sm:$0xff]
    %v799 = vld [vmem:[#allocation8 + $0x5c8] sm:$0xff]
    %v800 = vld [vmem:[#allocation8 + $0x5d0] sm:$0xff]
    %v801 = vld [vmem:[#allocation8 + $0x5d8] sm:$0xff]
    %v802 = vld [vmem:[#allocation8 + $0x5e0] sm:$0xff]
    %v803 = vld [vmem:[#allocation8 + $0x5e8] sm:$0xff]
    %v804 = vld [vmem:[#allocation8 + $0x5f0] sm:$0xff]
    %v805 = vld [vmem:[#allocation8 + $0x5f8] sm:$0xff]
    %v806 = vld [vmem:[#allocation8 + $0x600] sm:$0xff]
    %v807 = vld [vmem:[#allocation8 + $0x608] sm:$0xff]
    %v808 = vld [vmem:[#allocation8 + $0x610] sm:$0xff]
    %v809 = vld [vmem:[#allocation8 + $0x618] sm:$0xff]
    %v810 = vld [vmem:[#allocation8 + $0x620] sm:$0xff]
    %v811 = vld [vmem:[#allocation8 + $0x628] sm:$0xff]
    %v812 = vld [vmem:[#allocation8 + $0x630] sm:$0xff]
    %v813 = vld [vmem:[#allocation8 + $0x638] sm:$0xff]
    %v814 = vld [vmem:[#allocation8 + $0x640] sm:$0xff]
    %v815 = vld [vmem:[#allocation8 + $0x648] sm:$0xff]
    %v816 = vld [vmem:[#allocation8 + $0x650] sm:$0xff]
    %v817 = vld [vmem:[#allocation8 + $0x658] sm:$0xff]
    %v818 = vld [vmem:[#allocation8 + $0x660] sm:$0xff]
    %v819 = vld [vmem:[#allocation8 + $0x668] sm:$0xff]
    %v820 = vld [vmem:[#allocation8 + $0x670] sm:$0xff]
    %v821 = vld [vmem:[#allocation8 + $0x678] sm:$0xff]
    %v822 = vld [vmem:[#allocation8 + $0x680] sm:$0xff]
    %v823 = vld [vmem:[#allocation8 + $0x688] sm:$0xff]
    %v824 = vld [vmem:[#allocation8 + $0x690] sm:$0xff]
    %v825 = vld [vmem:[#allocation8 + $0x698] sm:$0xff]
    %v826 = vld [vmem:[#allocation8 + $0x6a0] sm:$0xff]
    %v827 = vld [vmem:[#allocation8 + $0x6a8] sm:$0xff]
    %v828 = vld [vmem:[#allocation8 + $0x6b0] sm:$0xff]
    %v829 = vld [vmem:[#allocation8 + $0x6b8] sm:$0xff]
    %v830 = vld [vmem:[#allocation8 + $0x6c0] sm:$0xff]
    %v831 = vld [vmem:[#allocation8 + $0x6c8] sm:$0xff]
    %v832 = vld [vmem:[#allocation8 + $0x6d0] sm:$0xff]
    %v833 = vld [vmem:[#allocation8 + $0x6d8] sm:$0xff]
    %v834 = vld [vmem:[#allocation8 + $0x6e0] sm:$0xff]
    %v835 = vld [vmem:[#allocation8 + $0x6e8] sm:$0xff]
    %v836 = vld [vmem:[#allocation8 + $0x6f0] sm:$0xff]
    %v837 = vld [vmem:[#allocation8 + $0x6f8] sm:$0xff]
    %v838 = vld [vmem:[#allocation8 + $0x700] sm:$0xff]
    %v839 = vld [vmem:[#allocation8 + $0x708] sm:$0xff]
    %v840 = vld [vmem:[#allocation8 + $0x710] sm:$0xff]
    %v841 = vld [vmem:[#allocation8 + $0x718] sm:$0xff]
    %v842 = vld [vmem:[#allocation8 + $0x720] sm:$0xff]
    %v843 = vld [vmem:[#allocation8 + $0x728] sm:$0xff]
    %v844 = vld [vmem:[#allocation8 + $0x730] sm:$0xff]
    %v845 = vld [vmem:[#allocation8 + $0x738] sm:$0xff]
    %v846 = vld [vmem:[#allocation8 + $0x740] sm:$0xff]
    %v847 = vld [vmem:[#allocation8 + $0x748] sm:$0xff]
    %v848 = vld [vmem:[#allocation8 + $0x750] sm:$0xff]
    %v849 = vld [vmem:[#allocation8 + $0x758] sm:$0xff]
    %v850 = vld [vmem:[#allocation8 + $0x760] sm:$0xff]
    %v851 = vld [vmem:[#allocation8 + $0x768] sm:$0xff]
    %v852 = vld [vmem:[#allocation8 + $0x770] sm:$0xff]
    %v853 = vld [vmem:[#allocation8 + $0x778] sm:$0xff]
    %v854 = vld [vmem:[#allocation8 + $0x780] sm:$0xff]
    %v855 = vld [vmem:[#allocation8 + $0x788] sm:$0xff]
    %v856 = vld [vmem:[#allocation8 + $0x790] sm:$0xff]
    %v857 = vld [vmem:[#allocation8 + $0x798] sm:$0xff]
    %v858 = vld [vmem:[#allocation8 + $0x7a0] sm:$0xff]
    %v859 = vld [vmem:[#allocation8 + $0x7a8] sm:$0xff]
    %v860 = vld [vmem:[#allocation8 + $0x7b0] sm:$0xff]
    %v861 = vld [vmem:[#allocation8 + $0x7b8] sm:$0xff]
    %v862 = vld [vmem:[#allocation8 + $0x7c0] sm:$0xff]
    %v863 = vld [vmem:[#allocation8 + $0x7c8] sm:$0xff]
    %v864 = vld [vmem:[#allocation8 + $0x7d0] sm:$0xff]
    %v865 = vld [vmem:[#allocation8 + $0x7d8] sm:$0xff]
    %v866 = vld [vmem:[#allocation8 + $0x7e0] sm:$0xff]
    %v867 = vld [vmem:[#allocation8 + $0x7e8] sm:$0xff]
    %v868 = vld [vmem:[#allocation8 + $0x7f0] sm:$0xff]
    %v869 = vld [vmem:[#allocation8 + $0x7f8] sm:$0xff]
    %v870 = vld [vmem:[#allocation10] sm:$0xff]
    %v871 = vmax.f32 %v567, 0.0
    %v872 = vmax.f32 %v569, 0.0
    %v873 = vmax.f32 %v608, 0.0
    %v874 = vmax.f32 %v610, 0.0
    %v875 = vpack.c.bf16 %v871, %v871
    %v876 = vpack.c.bf16 %v872, %v872
    %v877 = vpack.c.bf16 %v873, %v873
    %v878 = vpack.c.bf16 %v874, %v874
    %v880 = vlaneseq
    %v881 = vshrl.u32 %v880, 7
    %v882 = vsub.s32 0, %v881
    %v883 = vrot.slane %v870, %v882
    %v884 = vlaneseq
    %v885 = vshrl.u32 %v884, 7
    %v886 = vsub.s32 1, %v885
    %v887 = vrot.slane %v870, %v886
    %v888 = vlaneseq
    %v889 = vshrl.u32 %v888, 7
    %v890 = vsub.s32 2, %v889
    %v891 = vrot.slane %v870, %v890
    %v892 = vlaneseq
    %v893 = vshrl.u32 %v892, 7
    %v894 = vsub.s32 3, %v893
    %v895 = vrot.slane %v870, %v894
    %v896 = vlaneseq
    %v897 = vshrl.u32 %v896, 7
    %v898 = vsub.s32 4, %v897
    %v899 = vrot.slane %v870, %v898
    %v900 = vlaneseq
    %v901 = vshrl.u32 %v900, 7
    %v902 = vsub.s32 5, %v901
    %v903 = vrot.slane %v870, %v902
    %v904 = vlaneseq
    %v905 = vshrl.u32 %v904, 7
    %v906 = vsub.s32 6, %v905
    %v907 = vrot.slane %v870, %v906
    %v908 = vlaneseq
    %v909 = vshrl.u32 %v908, 7
    %v910 = vsub.s32 7, %v909
    %v911 = vrot.slane %v870, %v910
    %v1176 = vunpack.c.l.b16 %v614
    %v1177 = vunpack.c.h.b16 %v614
    %v1178 = vunpack.c.l.b16 %v615
    %v1179 = vunpack.c.h.b16 %v615
    %v1180 = vunpack.c.l.b16 %v616
    %v1181 = vunpack.c.h.b16 %v616
    %v1182 = vunpack.c.l.b16 %v617
    %v1183 = vunpack.c.h.b16 %v617
    %v1184 = vunpack.c.l.b16 %v618
    %v1185 = vunpack.c.h.b16 %v618
    %v1186 = vunpack.c.l.b16 %v619
    %v1187 = vunpack.c.h.b16 %v619
    %v1188 = vunpack.c.l.b16 %v620
    %v1189 = vunpack.c.h.b16 %v620
    %v1190 = vunpack.c.l.b16 %v621
    %v1191 = vunpack.c.h.b16 %v621
    %v1192 = vunpack.c.l.b16 %v622
    %v1193 = vunpack.c.h.b16 %v622
    %v1194 = vunpack.c.l.b16 %v623
    %v1195 = vunpack.c.h.b16 %v623
    %v1196 = vunpack.c.l.b16 %v624
    %v1197 = vunpack.c.h.b16 %v624
    %v1198 = vunpack.c.l.b16 %v625
    %v1199 = vunpack.c.h.b16 %v625
    %v1200 = vunpack.c.l.b16 %v626
    %v1201 = vunpack.c.h.b16 %v626
    %v1202 = vunpack.c.l.b16 %v627
    %v1203 = vunpack.c.h.b16 %v627
    %v1204 = vunpack.c.l.b16 %v628
    %v1205 = vunpack.c.h.b16 %v628
    %v1206 = vunpack.c.l.b16 %v629
    %v1207 = vunpack.c.h.b16 %v629
    %v1208 = vunpack.c.l.b16 %v630
    %v1209 = vunpack.c.h.b16 %v630
    %v1210 = vunpack.c.l.b16 %v631
    %v1211 = vunpack.c.h.b16 %v631
    %v1212 = vunpack.c.l.b16 %v632
    %v1213 = vunpack.c.h.b16 %v632
    %v1214 = vunpack.c.l.b16 %v633
    %v1215 = vunpack.c.h.b16 %v633
    %v1216 = vunpack.c.l.b16 %v634
    %v1217 = vunpack.c.h.b16 %v634
    %v1218 = vunpack.c.l.b16 %v635
    %v1219 = vunpack.c.h.b16 %v635
    %v1220 = vunpack.c.l.b16 %v636
    %v1221 = vunpack.c.h.b16 %v636
    %v1222 = vunpack.c.l.b16 %v637
    %v1223 = vunpack.c.h.b16 %v637
    %v1224 = vunpack.c.l.b16 %v638
    %v1225 = vunpack.c.h.b16 %v638
    %v1226 = vunpack.c.l.b16 %v639
    %v1227 = vunpack.c.h.b16 %v639
    %v1228 = vunpack.c.l.b16 %v640
    %v1229 = vunpack.c.h.b16 %v640
    %v1230 = vunpack.c.l.b16 %v641
    %v1231 = vunpack.c.h.b16 %v641
    %v1232 = vunpack.c.l.b16 %v642
    %v1233 = vunpack.c.h.b16 %v642
    %v1234 = vunpack.c.l.b16 %v643
    %v1235 = vunpack.c.h.b16 %v643
    %v1236 = vunpack.c.l.b16 %v644
    %v1237 = vunpack.c.h.b16 %v644
    %v1238 = vunpack.c.l.b16 %v645
    %v1239 = vunpack.c.h.b16 %v645
    %v1240 = vunpack.c.l.b16 %v646
    %v1241 = vunpack.c.h.b16 %v646
    %v1242 = vunpack.c.l.b16 %v647
    %v1243 = vunpack.c.h.b16 %v647
    %v1244 = vunpack.c.l.b16 %v648
    %v1245 = vunpack.c.h.b16 %v648
    %v1246 = vunpack.c.l.b16 %v649
    %v1247 = vunpack.c.h.b16 %v649
    %v1248 = vunpack.c.l.b16 %v650
    %v1249 = vunpack.c.h.b16 %v650
    %v1250 = vunpack.c.l.b16 %v651
    %v1251 = vunpack.c.h.b16 %v651
    %v1252 = vunpack.c.l.b16 %v652
    %v1253 = vunpack.c.h.b16 %v652
    %v1254 = vunpack.c.l.b16 %v653
    %v1255 = vunpack.c.h.b16 %v653
    %v1256 = vunpack.c.l.b16 %v654
    %v1257 = vunpack.c.h.b16 %v654
    %v1258 = vunpack.c.l.b16 %v655
    %v1259 = vunpack.c.h.b16 %v655
    %v1260 = vunpack.c.l.b16 %v656
    %v1261 = vunpack.c.h.b16 %v656
    %v1262 = vunpack.c.l.b16 %v657
    %v1263 = vunpack.c.h.b16 %v657
    %v1264 = vunpack.c.l.b16 %v658
    %v1265 = vunpack.c.h.b16 %v658
    %v1266 = vunpack.c.l.b16 %v659
    %v1267 = vunpack.c.h.b16 %v659
    %v1268 = vunpack.c.l.b16 %v660
    %v1269 = vunpack.c.h.b16 %v660
    %v1270 = vunpack.c.l.b16 %v661
    %v1271 = vunpack.c.h.b16 %v661
    %v1272 = vunpack.c.l.b16 %v662
    %v1273 = vunpack.c.h.b16 %v662
    %v1274 = vunpack.c.l.b16 %v663
    %v1275 = vunpack.c.h.b16 %v663
    %v1276 = vunpack.c.l.b16 %v664
    %v1277 = vunpack.c.h.b16 %v664
    %v1278 = vunpack.c.l.b16 %v665
    %v1279 = vunpack.c.h.b16 %v665
    %v1280 = vunpack.c.l.b16 %v666
    %v1281 = vunpack.c.h.b16 %v666
    %v1282 = vunpack.c.l.b16 %v667
    %v1283 = vunpack.c.h.b16 %v667
    %v1284 = vunpack.c.l.b16 %v668
    %v1285 = vunpack.c.h.b16 %v668
    %v1286 = vunpack.c.l.b16 %v669
    %v1287 = vunpack.c.h.b16 %v669
    %v1288 = vunpack.c.l.b16 %v670
    %v1289 = vunpack.c.h.b16 %v670
    %v1290 = vunpack.c.l.b16 %v671
    %v1291 = vunpack.c.h.b16 %v671
    %v1292 = vunpack.c.l.b16 %v672
    %v1293 = vunpack.c.h.b16 %v672
    %v1294 = vunpack.c.l.b16 %v673
    %v1295 = vunpack.c.h.b16 %v673
    %v1296 = vunpack.c.l.b16 %v674
    %v1297 = vunpack.c.h.b16 %v674
    %v1298 = vunpack.c.l.b16 %v675
    %v1299 = vunpack.c.h.b16 %v675
    %v1300 = vunpack.c.l.b16 %v676
    %v1301 = vunpack.c.h.b16 %v676
    %v1302 = vunpack.c.l.b16 %v677
    %v1303 = vunpack.c.h.b16 %v677
    %v1304 = vunpack.c.l.b16 %v678
    %v1305 = vunpack.c.h.b16 %v678
    %v1306 = vunpack.c.l.b16 %v679
    %v1307 = vunpack.c.h.b16 %v679
    %v1308 = vunpack.c.l.b16 %v680
    %v1309 = vunpack.c.h.b16 %v680
    %v1310 = vunpack.c.l.b16 %v681
    %v1311 = vunpack.c.h.b16 %v681
    %v1312 = vunpack.c.l.b16 %v682
    %v1313 = vunpack.c.h.b16 %v682
    %v1314 = vunpack.c.l.b16 %v683
    %v1315 = vunpack.c.h.b16 %v683
    %v1316 = vunpack.c.l.b16 %v684
    %v1317 = vunpack.c.h.b16 %v684
    %v1318 = vunpack.c.l.b16 %v685
    %v1319 = vunpack.c.h.b16 %v685
    %v1320 = vunpack.c.l.b16 %v686
    %v1321 = vunpack.c.h.b16 %v686
    %v1322 = vunpack.c.l.b16 %v687
    %v1323 = vunpack.c.h.b16 %v687
    %v1324 = vunpack.c.l.b16 %v688
    %v1325 = vunpack.c.h.b16 %v688
    %v1326 = vunpack.c.l.b16 %v689
    %v1327 = vunpack.c.h.b16 %v689
    %v1328 = vunpack.c.l.b16 %v690
    %v1329 = vunpack.c.h.b16 %v690
    %v1330 = vunpack.c.l.b16 %v691
    %v1331 = vunpack.c.h.b16 %v691
    %v1332 = vunpack.c.l.b16 %v692
    %v1333 = vunpack.c.h.b16 %v692
    %v1334 = vunpack.c.l.b16 %v693
    %v1335 = vunpack.c.h.b16 %v693
    %v1336 = vunpack.c.l.b16 %v694
    %v1337 = vunpack.c.h.b16 %v694
    %v1338 = vunpack.c.l.b16 %v695
    %v1339 = vunpack.c.h.b16 %v695
    %v1340 = vunpack.c.l.b16 %v696
    %v1341 = vunpack.c.h.b16 %v696
    %v1342 = vunpack.c.l.b16 %v697
    %v1343 = vunpack.c.h.b16 %v697
    %v1344 = vunpack.c.l.b16 %v698
    %v1345 = vunpack.c.h.b16 %v698
    %v1346 = vunpack.c.l.b16 %v699
    %v1347 = vunpack.c.h.b16 %v699
    %v1348 = vunpack.c.l.b16 %v700
    %v1349 = vunpack.c.h.b16 %v700
    %v1350 = vunpack.c.l.b16 %v701
    %v1351 = vunpack.c.h.b16 %v701
    %v1352 = vunpack.c.l.b16 %v702
    %v1353 = vunpack.c.h.b16 %v702
    %v1354 = vunpack.c.l.b16 %v703
    %v1355 = vunpack.c.h.b16 %v703
    %v1356 = vunpack.c.l.b16 %v704
    %v1357 = vunpack.c.h.b16 %v704
    %v1358 = vunpack.c.l.b16 %v705
    %v1359 = vunpack.c.h.b16 %v705
    %v1360 = vunpack.c.l.b16 %v706
    %v1361 = vunpack.c.h.b16 %v706
    %v1362 = vunpack.c.l.b16 %v707
    %v1363 = vunpack.c.h.b16 %v707
    %v1364 = vunpack.c.l.b16 %v708
    %v1365 = vunpack.c.h.b16 %v708
    %v1366 = vunpack.c.l.b16 %v709
    %v1367 = vunpack.c.h.b16 %v709
    %v1368 = vunpack.c.l.b16 %v710
    %v1369 = vunpack.c.h.b16 %v710
    %v1370 = vunpack.c.l.b16 %v711
    %v1371 = vunpack.c.h.b16 %v711
    %v1372 = vunpack.c.l.b16 %v712
    %v1373 = vunpack.c.h.b16 %v712
    %v1374 = vunpack.c.l.b16 %v713
    %v1375 = vunpack.c.h.b16 %v713
    %v1376 = vunpack.c.l.b16 %v714
    %v1377 = vunpack.c.h.b16 %v714
    %v1378 = vunpack.c.l.b16 %v715
    %v1379 = vunpack.c.h.b16 %v715
    %v1380 = vunpack.c.l.b16 %v716
    %v1381 = vunpack.c.h.b16 %v716
    %v1382 = vunpack.c.l.b16 %v717
    %v1383 = vunpack.c.h.b16 %v717
    %v1384 = vunpack.c.l.b16 %v718
    %v1385 = vunpack.c.h.b16 %v718
    %v1386 = vunpack.c.l.b16 %v719
    %v1387 = vunpack.c.h.b16 %v719
    %v1388 = vunpack.c.l.b16 %v720
    %v1389 = vunpack.c.h.b16 %v720
    %v1390 = vunpack.c.l.b16 %v721
    %v1391 = vunpack.c.h.b16 %v721
    %v1392 = vunpack.c.l.b16 %v722
    %v1393 = vunpack.c.h.b16 %v722
    %v1394 = vunpack.c.l.b16 %v723
    %v1395 = vunpack.c.h.b16 %v723
    %v1396 = vunpack.c.l.b16 %v724
    %v1397 = vunpack.c.h.b16 %v724
    %v1398 = vunpack.c.l.b16 %v725
    %v1399 = vunpack.c.h.b16 %v725
    %v1400 = vunpack.c.l.b16 %v726
    %v1401 = vunpack.c.h.b16 %v726
    %v1402 = vunpack.c.l.b16 %v727
    %v1403 = vunpack.c.h.b16 %v727
    %v1404 = vunpack.c.l.b16 %v728
    %v1405 = vunpack.c.h.b16 %v728
    %v1406 = vunpack.c.l.b16 %v729
    %v1407 = vunpack.c.h.b16 %v729
    %v1408 = vunpack.c.l.b16 %v730
    %v1409 = vunpack.c.h.b16 %v730
    %v1410 = vunpack.c.l.b16 %v731
    %v1411 = vunpack.c.h.b16 %v731
    %v1412 = vunpack.c.l.b16 %v732
    %v1413 = vunpack.c.h.b16 %v732
    %v1414 = vunpack.c.l.b16 %v733
    %v1415 = vunpack.c.h.b16 %v733
    %v1416 = vunpack.c.l.b16 %v734
    %v1417 = vunpack.c.h.b16 %v734
    %v1418 = vunpack.c.l.b16 %v735
    %v1419 = vunpack.c.h.b16 %v735
    %v1420 = vunpack.c.l.b16 %v736
    %v1421 = vunpack.c.h.b16 %v736
    %v1422 = vunpack.c.l.b16 %v737
    %v1423 = vunpack.c.h.b16 %v737
    %v1424 = vunpack.c.l.b16 %v738
    %v1425 = vunpack.c.h.b16 %v738
    %v1426 = vunpack.c.l.b16 %v739
    %v1427 = vunpack.c.h.b16 %v739
    %v1428 = vunpack.c.l.b16 %v740
    %v1429 = vunpack.c.h.b16 %v740
    %v1430 = vunpack.c.l.b16 %v741
    %v1431 = vunpack.c.h.b16 %v741
    %v1432 = vunpack.c.l.b16 %v742
    %v1433 = vunpack.c.h.b16 %v742
    %v1434 = vunpack.c.l.b16 %v743
    %v1435 = vunpack.c.h.b16 %v743
    %v1436 = vunpack.c.l.b16 %v744
    %v1437 = vunpack.c.h.b16 %v744
    %v1438 = vunpack.c.l.b16 %v745
    %v1439 = vunpack.c.h.b16 %v745
    %v1440 = vunpack.c.l.b16 %v746
    %v1441 = vunpack.c.h.b16 %v746
    %v1442 = vunpack.c.l.b16 %v747
    %v1443 = vunpack.c.h.b16 %v747
    %v1444 = vunpack.c.l.b16 %v748
    %v1445 = vunpack.c.h.b16 %v748
    %v1446 = vunpack.c.l.b16 %v749
    %v1447 = vunpack.c.h.b16 %v749
    %v1448 = vunpack.c.l.b16 %v750
    %v1449 = vunpack.c.h.b16 %v750
    %v1450 = vunpack.c.l.b16 %v751
    %v1451 = vunpack.c.h.b16 %v751
    %v1452 = vunpack.c.l.b16 %v752
    %v1453 = vunpack.c.h.b16 %v752
    %v1454 = vunpack.c.l.b16 %v753
    %v1455 = vunpack.c.h.b16 %v753
    %v1456 = vunpack.c.l.b16 %v754
    %v1457 = vunpack.c.h.b16 %v754
    %v1458 = vunpack.c.l.b16 %v755
    %v1459 = vunpack.c.h.b16 %v755
    %v1460 = vunpack.c.l.b16 %v756
    %v1461 = vunpack.c.h.b16 %v756
    %v1462 = vunpack.c.l.b16 %v757
    %v1463 = vunpack.c.h.b16 %v757
    %v1464 = vunpack.c.l.b16 %v758
    %v1465 = vunpack.c.h.b16 %v758
    %v1466 = vunpack.c.l.b16 %v759
    %v1467 = vunpack.c.h.b16 %v759
    %v1468 = vunpack.c.l.b16 %v760
    %v1469 = vunpack.c.h.b16 %v760
    %v1470 = vunpack.c.l.b16 %v761
    %v1471 = vunpack.c.h.b16 %v761
    %v1472 = vunpack.c.l.b16 %v762
    %v1473 = vunpack.c.h.b16 %v762
    %v1474 = vunpack.c.l.b16 %v763
    %v1475 = vunpack.c.h.b16 %v763
    %v1476 = vunpack.c.l.b16 %v764
    %v1477 = vunpack.c.h.b16 %v764
    %v1478 = vunpack.c.l.b16 %v765
    %v1479 = vunpack.c.h.b16 %v765
    %v1480 = vunpack.c.l.b16 %v766
    %v1481 = vunpack.c.h.b16 %v766
    %v1482 = vunpack.c.l.b16 %v767
    %v1483 = vunpack.c.h.b16 %v767
    %v1484 = vunpack.c.l.b16 %v768
    %v1485 = vunpack.c.h.b16 %v768
    %v1486 = vunpack.c.l.b16 %v769
    %v1487 = vunpack.c.h.b16 %v769
    %v1488 = vunpack.c.l.b16 %v770
    %v1489 = vunpack.c.h.b16 %v770
    %v1490 = vunpack.c.l.b16 %v771
    %v1491 = vunpack.c.h.b16 %v771
    %v1492 = vunpack.c.l.b16 %v772
    %v1493 = vunpack.c.h.b16 %v772
    %v1494 = vunpack.c.l.b16 %v773
    %v1495 = vunpack.c.h.b16 %v773
    %v1496 = vunpack.c.l.b16 %v774
    %v1497 = vunpack.c.h.b16 %v774
    %v1498 = vunpack.c.l.b16 %v775
    %v1499 = vunpack.c.h.b16 %v775
    %v1500 = vunpack.c.l.b16 %v776
    %v1501 = vunpack.c.h.b16 %v776
    %v1502 = vunpack.c.l.b16 %v777
    %v1503 = vunpack.c.h.b16 %v777
    %v1504 = vunpack.c.l.b16 %v778
    %v1505 = vunpack.c.h.b16 %v778
    %v1506 = vunpack.c.l.b16 %v779
    %v1507 = vunpack.c.h.b16 %v779
    %v1508 = vunpack.c.l.b16 %v780
    %v1509 = vunpack.c.h.b16 %v780
    %v1510 = vunpack.c.l.b16 %v781
    %v1511 = vunpack.c.h.b16 %v781
    %v1512 = vunpack.c.l.b16 %v782
    %v1513 = vunpack.c.h.b16 %v782
    %v1514 = vunpack.c.l.b16 %v783
    %v1515 = vunpack.c.h.b16 %v783
    %v1516 = vunpack.c.l.b16 %v784
    %v1517 = vunpack.c.h.b16 %v784
    %v1518 = vunpack.c.l.b16 %v785
    %v1519 = vunpack.c.h.b16 %v785
    %v1520 = vunpack.c.l.b16 %v786
    %v1521 = vunpack.c.h.b16 %v786
    %v1522 = vunpack.c.l.b16 %v787
    %v1523 = vunpack.c.h.b16 %v787
    %v1524 = vunpack.c.l.b16 %v788
    %v1525 = vunpack.c.h.b16 %v788
    %v1526 = vunpack.c.l.b16 %v789
    %v1527 = vunpack.c.h.b16 %v789
    %v1528 = vunpack.c.l.b16 %v790
    %v1529 = vunpack.c.h.b16 %v790
    %v1530 = vunpack.c.l.b16 %v791
    %v1531 = vunpack.c.h.b16 %v791
    %v1532 = vunpack.c.l.b16 %v792
    %v1533 = vunpack.c.h.b16 %v792
    %v1534 = vunpack.c.l.b16 %v793
    %v1535 = vunpack.c.h.b16 %v793
    %v1536 = vunpack.c.l.b16 %v794
    %v1537 = vunpack.c.h.b16 %v794
    %v1538 = vunpack.c.l.b16 %v795
    %v1539 = vunpack.c.h.b16 %v795
    %v1540 = vunpack.c.l.b16 %v796
    %v1541 = vunpack.c.h.b16 %v796
    %v1542 = vunpack.c.l.b16 %v797
    %v1543 = vunpack.c.h.b16 %v797
    %v1544 = vunpack.c.l.b16 %v798
    %v1545 = vunpack.c.h.b16 %v798
    %v1546 = vunpack.c.l.b16 %v799
    %v1547 = vunpack.c.h.b16 %v799
    %v1548 = vunpack.c.l.b16 %v800
    %v1549 = vunpack.c.h.b16 %v800
    %v1550 = vunpack.c.l.b16 %v801
    %v1551 = vunpack.c.h.b16 %v801
    %v1552 = vunpack.c.l.b16 %v802
    %v1553 = vunpack.c.h.b16 %v802
    %v1554 = vunpack.c.l.b16 %v803
    %v1555 = vunpack.c.h.b16 %v803
    %v1556 = vunpack.c.l.b16 %v804
    %v1557 = vunpack.c.h.b16 %v804
    %v1558 = vunpack.c.l.b16 %v805
    %v1559 = vunpack.c.h.b16 %v805
    %v1560 = vunpack.c.l.b16 %v806
    %v1561 = vunpack.c.h.b16 %v806
    %v1562 = vunpack.c.l.b16 %v807
    %v1563 = vunpack.c.h.b16 %v807
    %v1564 = vunpack.c.l.b16 %v808
    %v1565 = vunpack.c.h.b16 %v808
    %v1566 = vunpack.c.l.b16 %v809
    %v1567 = vunpack.c.h.b16 %v809
    %v1568 = vunpack.c.l.b16 %v810
    %v1569 = vunpack.c.h.b16 %v810
    %v1570 = vunpack.c.l.b16 %v811
    %v1571 = vunpack.c.h.b16 %v811
    %v1572 = vunpack.c.l.b16 %v812
    %v1573 = vunpack.c.h.b16 %v812
    %v1574 = vunpack.c.l.b16 %v813
    %v1575 = vunpack.c.h.b16 %v813
    %v1576 = vunpack.c.l.b16 %v814
    %v1577 = vunpack.c.h.b16 %v814
    %v1578 = vunpack.c.l.b16 %v815
    %v1579 = vunpack.c.h.b16 %v815
    %v1580 = vunpack.c.l.b16 %v816
    %v1581 = vunpack.c.h.b16 %v816
    %v1582 = vunpack.c.l.b16 %v817
    %v1583 = vunpack.c.h.b16 %v817
    %v1584 = vunpack.c.l.b16 %v818
    %v1585 = vunpack.c.h.b16 %v818
    %v1586 = vunpack.c.l.b16 %v819
    %v1587 = vunpack.c.h.b16 %v819
    %v1588 = vunpack.c.l.b16 %v820
    %v1589 = vunpack.c.h.b16 %v820
    %v1590 = vunpack.c.l.b16 %v821
    %v1591 = vunpack.c.h.b16 %v821
    %v1592 = vunpack.c.l.b16 %v822
    %v1593 = vunpack.c.h.b16 %v822
    %v1594 = vunpack.c.l.b16 %v823
    %v1595 = vunpack.c.h.b16 %v823
    %v1596 = vunpack.c.l.b16 %v824
    %v1597 = vunpack.c.h.b16 %v824
    %v1598 = vunpack.c.l.b16 %v825
    %v1599 = vunpack.c.h.b16 %v825
    %v1600 = vunpack.c.l.b16 %v826
    %v1601 = vunpack.c.h.b16 %v826
    %v1602 = vunpack.c.l.b16 %v827
    %v1603 = vunpack.c.h.b16 %v827
    %v1604 = vunpack.c.l.b16 %v828
    %v1605 = vunpack.c.h.b16 %v828
    %v1606 = vunpack.c.l.b16 %v829
    %v1607 = vunpack.c.h.b16 %v829
    %v1608 = vunpack.c.l.b16 %v830
    %v1609 = vunpack.c.h.b16 %v830
    %v1610 = vunpack.c.l.b16 %v831
    %v1611 = vunpack.c.h.b16 %v831
    %v1612 = vunpack.c.l.b16 %v832
    %v1613 = vunpack.c.h.b16 %v832
    %v1614 = vunpack.c.l.b16 %v833
    %v1615 = vunpack.c.h.b16 %v833
    %v1616 = vunpack.c.l.b16 %v834
    %v1617 = vunpack.c.h.b16 %v834
    %v1618 = vunpack.c.l.b16 %v835
    %v1619 = vunpack.c.h.b16 %v835
    %v1620 = vunpack.c.l.b16 %v836
    %v1621 = vunpack.c.h.b16 %v836
    %v1622 = vunpack.c.l.b16 %v837
    %v1623 = vunpack.c.h.b16 %v837
    %v1624 = vunpack.c.l.b16 %v838
    %v1625 = vunpack.c.h.b16 %v838
    %v1626 = vunpack.c.l.b16 %v839
    %v1627 = vunpack.c.h.b16 %v839
    %v1628 = vunpack.c.l.b16 %v840
    %v1629 = vunpack.c.h.b16 %v840
    %v1630 = vunpack.c.l.b16 %v841
    %v1631 = vunpack.c.h.b16 %v841
    %v1632 = vunpack.c.l.b16 %v842
    %v1633 = vunpack.c.h.b16 %v842
    %v1634 = vunpack.c.l.b16 %v843
    %v1635 = vunpack.c.h.b16 %v843
    %v1636 = vunpack.c.l.b16 %v844
    %v1637 = vunpack.c.h.b16 %v844
    %v1638 = vunpack.c.l.b16 %v845
    %v1639 = vunpack.c.h.b16 %v845
    %v1640 = vunpack.c.l.b16 %v846
    %v1641 = vunpack.c.h.b16 %v846
    %v1642 = vunpack.c.l.b16 %v847
    %v1643 = vunpack.c.h.b16 %v847
    %v1644 = vunpack.c.l.b16 %v848
    %v1645 = vunpack.c.h.b16 %v848
    %v1646 = vunpack.c.l.b16 %v849
    %v1647 = vunpack.c.h.b16 %v849
    %v1648 = vunpack.c.l.b16 %v850
    %v1649 = vunpack.c.h.b16 %v850
    %v1650 = vunpack.c.l.b16 %v851
    %v1651 = vunpack.c.h.b16 %v851
    %v1652 = vunpack.c.l.b16 %v852
    %v1653 = vunpack.c.h.b16 %v852
    %v1654 = vunpack.c.l.b16 %v853
    %v1655 = vunpack.c.h.b16 %v853
    %v1656 = vunpack.c.l.b16 %v854
    %v1657 = vunpack.c.h.b16 %v854
    %v1658 = vunpack.c.l.b16 %v855
    %v1659 = vunpack.c.h.b16 %v855
    %v1660 = vunpack.c.l.b16 %v856
    %v1661 = vunpack.c.h.b16 %v856
    %v1662 = vunpack.c.l.b16 %v857
    %v1663 = vunpack.c.h.b16 %v857
    %v1664 = vunpack.c.l.b16 %v858
    %v1665 = vunpack.c.h.b16 %v858
    %v1666 = vunpack.c.l.b16 %v859
    %v1667 = vunpack.c.h.b16 %v859
    %v1668 = vunpack.c.l.b16 %v860
    %v1669 = vunpack.c.h.b16 %v860
    %v1670 = vunpack.c.l.b16 %v861
    %v1671 = vunpack.c.h.b16 %v861
    %v1672 = vunpack.c.l.b16 %v862
    %v1673 = vunpack.c.h.b16 %v862
    %v1674 = vunpack.c.l.b16 %v863
    %v1675 = vunpack.c.h.b16 %v863
    %v1676 = vunpack.c.l.b16 %v864
    %v1677 = vunpack.c.h.b16 %v864
    %v1678 = vunpack.c.l.b16 %v865
    %v1679 = vunpack.c.h.b16 %v865
    %v1680 = vunpack.c.l.b16 %v866
    %v1681 = vunpack.c.h.b16 %v866
    %v1682 = vunpack.c.l.b16 %v867
    %v1683 = vunpack.c.h.b16 %v867
    %v1684 = vunpack.c.l.b16 %v868
    %v1685 = vunpack.c.h.b16 %v868
    %v1686 = vunpack.c.l.b16 %v869
    %v1687 = vunpack.c.h.b16 %v869
    %v1688 = vpack.c.b16 %v1184, %v1176
    %v1689 = vpack.c.b16 %v1185, %v1177
    %v1690 = vpack.c.b16 %v1186, %v1178
    %v1691 = vpack.c.b16 %v1187, %v1179
    %v1692 = vpack.c.b16 %v1188, %v1180
    %v1693 = vpack.c.b16 %v1189, %v1181
    %v1694 = vpack.c.b16 %v1190, %v1182
    %v1695 = vpack.c.b16 %v1191, %v1183
    %v1696 = vpack.c.b16 %v1200, %v1192
    %v1697 = vpack.c.b16 %v1201, %v1193
    %v1698 = vpack.c.b16 %v1202, %v1194
    %v1699 = vpack.c.b16 %v1203, %v1195
    %v1700 = vpack.c.b16 %v1204, %v1196
    %v1701 = vpack.c.b16 %v1205, %v1197
    %v1702 = vpack.c.b16 %v1206, %v1198
    %v1703 = vpack.c.b16 %v1207, %v1199
    %v1704 = vpack.c.b16 %v1216, %v1208
    %v1705 = vpack.c.b16 %v1217, %v1209
    %v1706 = vpack.c.b16 %v1218, %v1210
    %v1707 = vpack.c.b16 %v1219, %v1211
    %v1708 = vpack.c.b16 %v1220, %v1212
    %v1709 = vpack.c.b16 %v1221, %v1213
    %v1710 = vpack.c.b16 %v1222, %v1214
    %v1711 = vpack.c.b16 %v1223, %v1215
    %v1712 = vpack.c.b16 %v1232, %v1224
    %v1713 = vpack.c.b16 %v1233, %v1225
    %v1714 = vpack.c.b16 %v1234, %v1226
    %v1715 = vpack.c.b16 %v1235, %v1227
    %v1716 = vpack.c.b16 %v1236, %v1228
    %v1717 = vpack.c.b16 %v1237, %v1229
    %v1718 = vpack.c.b16 %v1238, %v1230
    %v1719 = vpack.c.b16 %v1239, %v1231
    %v1720 = vpack.c.b16 %v1248, %v1240
    %v1721 = vpack.c.b16 %v1249, %v1241
    %v1722 = vpack.c.b16 %v1250, %v1242
    %v1723 = vpack.c.b16 %v1251, %v1243
    %v1724 = vpack.c.b16 %v1252, %v1244
    %v1725 = vpack.c.b16 %v1253, %v1245
    %v1726 = vpack.c.b16 %v1254, %v1246
    %v1727 = vpack.c.b16 %v1255, %v1247
    %v1728 = vpack.c.b16 %v1264, %v1256
    %v1729 = vpack.c.b16 %v1265, %v1257
    %v1730 = vpack.c.b16 %v1266, %v1258
    %v1731 = vpack.c.b16 %v1267, %v1259
    %v1732 = vpack.c.b16 %v1268, %v1260
    %v1733 = vpack.c.b16 %v1269, %v1261
    %v1734 = vpack.c.b16 %v1270, %v1262
    %v1735 = vpack.c.b16 %v1271, %v1263
    %v1736 = vpack.c.b16 %v1280, %v1272
    %v1737 = vpack.c.b16 %v1281, %v1273
    %v1738 = vpack.c.b16 %v1282, %v1274
    %v1739 = vpack.c.b16 %v1283, %v1275
    %v1740 = vpack.c.b16 %v1284, %v1276
    %v1741 = vpack.c.b16 %v1285, %v1277
    %v1742 = vpack.c.b16 %v1286, %v1278
    %v1743 = vpack.c.b16 %v1287, %v1279
    %v1744 = vpack.c.b16 %v1296, %v1288
    %v1745 = vpack.c.b16 %v1297, %v1289
    %v1746 = vpack.c.b16 %v1298, %v1290
    %v1747 = vpack.c.b16 %v1299, %v1291
    %v1748 = vpack.c.b16 %v1300, %v1292
    %v1749 = vpack.c.b16 %v1301, %v1293
    %v1750 = vpack.c.b16 %v1302, %v1294
    %v1751 = vpack.c.b16 %v1303, %v1295
    %v1752 = vpack.c.b16 %v1312, %v1304
    %v1753 = vpack.c.b16 %v1313, %v1305
    %v1754 = vpack.c.b16 %v1314, %v1306
    %v1755 = vpack.c.b16 %v1315, %v1307
    %v1756 = vpack.c.b16 %v1316, %v1308
    %v1757 = vpack.c.b16 %v1317, %v1309
    %v1758 = vpack.c.b16 %v1318, %v1310
    %v1759 = vpack.c.b16 %v1319, %v1311
    %v1760 = vpack.c.b16 %v1328, %v1320
    %v1761 = vpack.c.b16 %v1329, %v1321
    %v1762 = vpack.c.b16 %v1330, %v1322
    %v1763 = vpack.c.b16 %v1331, %v1323
    %v1764 = vpack.c.b16 %v1332, %v1324
    %v1765 = vpack.c.b16 %v1333, %v1325
    %v1766 = vpack.c.b16 %v1334, %v1326
    %v1767 = vpack.c.b16 %v1335, %v1327
    %v1768 = vpack.c.b16 %v1344, %v1336
    %v1769 = vpack.c.b16 %v1345, %v1337
    %v1770 = vpack.c.b16 %v1346, %v1338
    %v1771 = vpack.c.b16 %v1347, %v1339
    %v1772 = vpack.c.b16 %v1348, %v1340
    %v1773 = vpack.c.b16 %v1349, %v1341
    %v1774 = vpack.c.b16 %v1350, %v1342
    %v1775 = vpack.c.b16 %v1351, %v1343
    %v1776 = vpack.c.b16 %v1360, %v1352
    %v1777 = vpack.c.b16 %v1361, %v1353
    %v1778 = vpack.c.b16 %v1362, %v1354
    %v1779 = vpack.c.b16 %v1363, %v1355
    %v1780 = vpack.c.b16 %v1364, %v1356
    %v1781 = vpack.c.b16 %v1365, %v1357
    %v1782 = vpack.c.b16 %v1366, %v1358
    %v1783 = vpack.c.b16 %v1367, %v1359
    %v1784 = vpack.c.b16 %v1376, %v1368
    %v1785 = vpack.c.b16 %v1377, %v1369
    %v1786 = vpack.c.b16 %v1378, %v1370
    %v1787 = vpack.c.b16 %v1379, %v1371
    %v1788 = vpack.c.b16 %v1380, %v1372
    %v1789 = vpack.c.b16 %v1381, %v1373
    %v1790 = vpack.c.b16 %v1382, %v1374
    %v1791 = vpack.c.b16 %v1383, %v1375
    %v1792 = vpack.c.b16 %v1392, %v1384
    %v1793 = vpack.c.b16 %v1393, %v1385
    %v1794 = vpack.c.b16 %v1394, %v1386
    %v1795 = vpack.c.b16 %v1395, %v1387
    %v1796 = vpack.c.b16 %v1396, %v1388
    %v1797 = vpack.c.b16 %v1397, %v1389
    %v1798 = vpack.c.b16 %v1398, %v1390
    %v1799 = vpack.c.b16 %v1399, %v1391
    %v1800 = vpack.c.b16 %v1408, %v1400
    %v1801 = vpack.c.b16 %v1409, %v1401
    %v1802 = vpack.c.b16 %v1410, %v1402
    %v1803 = vpack.c.b16 %v1411, %v1403
    %v1804 = vpack.c.b16 %v1412, %v1404
    %v1805 = vpack.c.b16 %v1413, %v1405
    %v1806 = vpack.c.b16 %v1414, %v1406
    %v1807 = vpack.c.b16 %v1415, %v1407
    %v1808 = vpack.c.b16 %v1424, %v1416
    %v1809 = vpack.c.b16 %v1425, %v1417
    %v1810 = vpack.c.b16 %v1426, %v1418
    %v1811 = vpack.c.b16 %v1427, %v1419
    %v1812 = vpack.c.b16 %v1428, %v1420
    %v1813 = vpack.c.b16 %v1429, %v1421
    %v1814 = vpack.c.b16 %v1430, %v1422
    %v1815 = vpack.c.b16 %v1431, %v1423
    %v1816 = vpack.c.b16 %v1440, %v1432
    %v1817 = vpack.c.b16 %v1441, %v1433
    %v1818 = vpack.c.b16 %v1442, %v1434
    %v1819 = vpack.c.b16 %v1443, %v1435
    %v1820 = vpack.c.b16 %v1444, %v1436
    %v1821 = vpack.c.b16 %v1445, %v1437
    %v1822 = vpack.c.b16 %v1446, %v1438
    %v1823 = vpack.c.b16 %v1447, %v1439
    %v1824 = vpack.c.b16 %v1456, %v1448
    %v1825 = vpack.c.b16 %v1457, %v1449
    %v1826 = vpack.c.b16 %v1458, %v1450
    %v1827 = vpack.c.b16 %v1459, %v1451
    %v1828 = vpack.c.b16 %v1460, %v1452
    %v1829 = vpack.c.b16 %v1461, %v1453
    %v1830 = vpack.c.b16 %v1462, %v1454
    %v1831 = vpack.c.b16 %v1463, %v1455
    %v1832 = vpack.c.b16 %v1472, %v1464
    %v1833 = vpack.c.b16 %v1473, %v1465
    %v1834 = vpack.c.b16 %v1474, %v1466
    %v1835 = vpack.c.b16 %v1475, %v1467
    %v1836 = vpack.c.b16 %v1476, %v1468
    %v1837 = vpack.c.b16 %v1477, %v1469
    %v1838 = vpack.c.b16 %v1478, %v1470
    %v1839 = vpack.c.b16 %v1479, %v1471
    %v1840 = vpack.c.b16 %v1488, %v1480
    %v1841 = vpack.c.b16 %v1489, %v1481
    %v1842 = vpack.c.b16 %v1490, %v1482
    %v1843 = vpack.c.b16 %v1491, %v1483
    %v1844 = vpack.c.b16 %v1492, %v1484
    %v1845 = vpack.c.b16 %v1493, %v1485
    %v1846 = vpack.c.b16 %v1494, %v1486
    %v1847 = vpack.c.b16 %v1495, %v1487
    %v1848 = vpack.c.b16 %v1504, %v1496
    %v1849 = vpack.c.b16 %v1505, %v1497
    %v1850 = vpack.c.b16 %v1506, %v1498
    %v1851 = vpack.c.b16 %v1507, %v1499
    %v1852 = vpack.c.b16 %v1508, %v1500
    %v1853 = vpack.c.b16 %v1509, %v1501
    %v1854 = vpack.c.b16 %v1510, %v1502
    %v1855 = vpack.c.b16 %v1511, %v1503
    %v1856 = vpack.c.b16 %v1520, %v1512
    %v1857 = vpack.c.b16 %v1521, %v1513
    %v1858 = vpack.c.b16 %v1522, %v1514
    %v1859 = vpack.c.b16 %v1523, %v1515
    %v1860 = vpack.c.b16 %v1524, %v1516
    %v1861 = vpack.c.b16 %v1525, %v1517
    %v1862 = vpack.c.b16 %v1526, %v1518
    %v1863 = vpack.c.b16 %v1527, %v1519
    %v1864 = vpack.c.b16 %v1536, %v1528
    %v1865 = vpack.c.b16 %v1537, %v1529
    %v1866 = vpack.c.b16 %v1538, %v1530
    %v1867 = vpack.c.b16 %v1539, %v1531
    %v1868 = vpack.c.b16 %v1540, %v1532
    %v1869 = vpack.c.b16 %v1541, %v1533
    %v1870 = vpack.c.b16 %v1542, %v1534
    %v1871 = vpack.c.b16 %v1543, %v1535
    %v1872 = vpack.c.b16 %v1552, %v1544
    %v1873 = vpack.c.b16 %v1553, %v1545
    %v1874 = vpack.c.b16 %v1554, %v1546
    %v1875 = vpack.c.b16 %v1555, %v1547
    %v1876 = vpack.c.b16 %v1556, %v1548
    %v1877 = vpack.c.b16 %v1557, %v1549
    %v1878 = vpack.c.b16 %v1558, %v1550
    %v1879 = vpack.c.b16 %v1559, %v1551
    %v1880 = vpack.c.b16 %v1568, %v1560
    %v1881 = vpack.c.b16 %v1569, %v1561
    %v1882 = vpack.c.b16 %v1570, %v1562
    %v1883 = vpack.c.b16 %v1571, %v1563
    %v1884 = vpack.c.b16 %v1572, %v1564
    %v1885 = vpack.c.b16 %v1573, %v1565
    %v1886 = vpack.c.b16 %v1574, %v1566
    %v1887 = vpack.c.b16 %v1575, %v1567
    %v1888 = vpack.c.b16 %v1584, %v1576
    %v1889 = vpack.c.b16 %v1585, %v1577
    %v1890 = vpack.c.b16 %v1586, %v1578
    %v1891 = vpack.c.b16 %v1587, %v1579
    %v1892 = vpack.c.b16 %v1588, %v1580
    %v1893 = vpack.c.b16 %v1589, %v1581
    %v1894 = vpack.c.b16 %v1590, %v1582
    %v1895 = vpack.c.b16 %v1591, %v1583
    %v1896 = vpack.c.b16 %v1600, %v1592
    %v1897 = vpack.c.b16 %v1601, %v1593
    %v1898 = vpack.c.b16 %v1602, %v1594
    %v1899 = vpack.c.b16 %v1603, %v1595
    %v1900 = vpack.c.b16 %v1604, %v1596
    %v1901 = vpack.c.b16 %v1605, %v1597
    %v1902 = vpack.c.b16 %v1606, %v1598
    %v1903 = vpack.c.b16 %v1607, %v1599
    %v1904 = vpack.c.b16 %v1616, %v1608
    %v1905 = vpack.c.b16 %v1617, %v1609
    %v1906 = vpack.c.b16 %v1618, %v1610
    %v1907 = vpack.c.b16 %v1619, %v1611
    %v1908 = vpack.c.b16 %v1620, %v1612
    %v1909 = vpack.c.b16 %v1621, %v1613
    %v1910 = vpack.c.b16 %v1622, %v1614
    %v1911 = vpack.c.b16 %v1623, %v1615
    %v1912 = vpack.c.b16 %v1632, %v1624
    %v1913 = vpack.c.b16 %v1633, %v1625
    %v1914 = vpack.c.b16 %v1634, %v1626
    %v1915 = vpack.c.b16 %v1635, %v1627
    %v1916 = vpack.c.b16 %v1636, %v1628
    %v1917 = vpack.c.b16 %v1637, %v1629
    %v1918 = vpack.c.b16 %v1638, %v1630
    %v1919 = vpack.c.b16 %v1639, %v1631
    %v1920 = vpack.c.b16 %v1648, %v1640
    %v1921 = vpack.c.b16 %v1649, %v1641
    %v1922 = vpack.c.b16 %v1650, %v1642
    %v1923 = vpack.c.b16 %v1651, %v1643
    %v1924 = vpack.c.b16 %v1652, %v1644
    %v1925 = vpack.c.b16 %v1653, %v1645
    %v1926 = vpack.c.b16 %v1654, %v1646
    %v1927 = vpack.c.b16 %v1655, %v1647
    %v1928 = vpack.c.b16 %v1664, %v1656
    %v1929 = vpack.c.b16 %v1665, %v1657
    %v1930 = vpack.c.b16 %v1666, %v1658
    %v1931 = vpack.c.b16 %v1667, %v1659
    %v1932 = vpack.c.b16 %v1668, %v1660
    %v1933 = vpack.c.b16 %v1669, %v1661
    %v1934 = vpack.c.b16 %v1670, %v1662
    %v1935 = vpack.c.b16 %v1671, %v1663
    %v1936 = vpack.c.b16 %v1680, %v1672
    %v1937 = vpack.c.b16 %v1681, %v1673
    %v1938 = vpack.c.b16 %v1682, %v1674
    %v1939 = vpack.c.b16 %v1683, %v1675
    %v1940 = vpack.c.b16 %v1684, %v1676
    %v1941 = vpack.c.b16 %v1685, %v1677
    %v1942 = vpack.c.b16 %v1686, %v1678
    %v1943 = vpack.c.b16 %v1687, %v1679
    %2200 = vmatprep.subr.bf16.mxu0 %v1745
    %2201 = vmatpush1.bf16.msra.mxu0 %v1744
    %2202 = vmatprep.subr.bf16.mxu0 %v1737
    %2203 = vmatpush1.bf16.msra.mxu0 %v1736
    %2204 = vmatprep.subr.bf16.mxu0 %v1729
    %2205 = vmatpush1.bf16.msra.mxu0 %v1728
    %2206 = vmatprep.subr.bf16.mxu0 %v1721
    %2207 = vmatpush1.bf16.msra.mxu0 %v1720
    %2208 = vmatprep.subr.bf16.mxu0 %v1713
    %2209 = vmatpush1.bf16.msra.mxu0 %v1712
    %2210 = vmatprep.subr.bf16.mxu0 %v1705
    %2211 = vmatpush1.bf16.msra.mxu0 %v1704
    %2212 = vmatprep.subr.bf16.mxu0 %v1697
    %2213 = vmatpush1.bf16.msra.mxu0 %v1696
    %2214 = vmatprep.subr.bf16.mxu0 %v1689
    %2215 = vmatpush1.bf16.msra.mxu0 %v1688
    %2216 = vmatprep.subr.bf16.mxu0 %v1809
    %2217 = vmatpush2.bf16.msra.mxu0 %v1808
    %2218 = vmatprep.subr.bf16.mxu0 %v1801
    %2219 = vmatpush2.bf16.msra.mxu0 %v1800
    %2220 = vmatprep.subr.bf16.mxu0 %v1793
    %2221 = vmatpush2.bf16.msra.mxu0 %v1792
    %2222 = vmatprep.subr.bf16.mxu0 %v1785
    %2223 = vmatpush2.bf16.msra.mxu0 %v1784
    %2224 = vmatprep.subr.bf16.mxu0 %v1777
    %2225 = vmatpush2.bf16.msra.mxu0 %v1776
    %2226 = vmatprep.subr.bf16.mxu0 %v1769
    %2227 = vmatpush2.bf16.msra.mxu0 %v1768
    %2228 = vmatprep.subr.bf16.mxu0 %v1761
    %2229 = vmatpush2.bf16.msra.mxu0 %v1760
    %2230 = vmatprep.subr.bf16.mxu0 %v1753
    %2231 = vmatpush2.bf16.msra.mxu0 %v1752
    %2232 = vmatprep.mubr.bf16.mxu0 %v876
    %2233 = vmatmul.mubr.bf16.gmra.mxu0 %v875
    %v2234 = vpop.f32.mrf.mxu0
    %v2235 = vadd.f32 %v883, %v2234
    %v2236 = vpop.f32.mrf.mxu0
    %v2237 = vadd.f32 %v887, %v2236
    %v2238 = vpop.f32.mrf.mxu0
    %v2239 = vpop.f32.mrf.mxu0
    %2240 = vdwg.mxu0
    %2241 = vmatprep.subr.bf16.mxu0 %v1873
    %2242 = vmatpush1.bf16.msra.mxu0 %v1872
    %2243 = vmatprep.subr.bf16.mxu0 %v1865
    %2244 = vmatpush1.bf16.msra.mxu0 %v1864
    %2245 = vmatprep.subr.bf16.mxu0 %v1857
    %2246 = vmatpush1.bf16.msra.mxu0 %v1856
    %2247 = vmatprep.subr.bf16.mxu0 %v1849
    %2248 = vmatpush1.bf16.msra.mxu0 %v1848
    %2249 = vmatprep.subr.bf16.mxu0 %v1841
    %2250 = vmatpush1.bf16.msra.mxu0 %v1840
    %2251 = vmatprep.subr.bf16.mxu0 %v1833
    %2252 = vmatpush1.bf16.msra.mxu0 %v1832
    %2253 = vmatprep.subr.bf16.mxu0 %v1825
    %2254 = vmatpush1.bf16.msra.mxu0 %v1824
    %2255 = vmatprep.subr.bf16.mxu0 %v1817
    %2256 = vmatpush1.bf16.msra.mxu0 %v1816
    %2257 = vmatprep.subr.bf16.mxu0 %v1937
    %2258 = vmatpush2.bf16.msra.mxu0 %v1936
    %2259 = vmatprep.subr.bf16.mxu0 %v1929
    %2260 = vmatpush2.bf16.msra.mxu0 %v1928
    %2261 = vmatprep.subr.bf16.mxu0 %v1921
    %2262 = vmatpush2.bf16.msra.mxu0 %v1920
    %2263 = vmatprep.subr.bf16.mxu0 %v1913
    %2264 = vmatpush2.bf16.msra.mxu0 %v1912
    %2265 = vmatprep.subr.bf16.mxu0 %v1905
    %2266 = vmatpush2.bf16.msra.mxu0 %v1904
    %2267 = vmatprep.subr.bf16.mxu0 %v1897
    %2268 = vmatpush2.bf16.msra.mxu0 %v1896
    %2269 = vmatprep.subr.bf16.mxu0 %v1889
    %2270 = vmatpush2.bf16.msra.mxu0 %v1888
    %2271 = vmatprep.subr.bf16.mxu0 %v1881
    %2272 = vmatpush2.bf16.msra.mxu0 %v1880
    %2273 = vmatprep.mubr.bf16.mxu0 %v878
    %2274 = vmatmul.mubr.bf16.gmra.mxu0 %v877
    %v2275 = vpop.f32.mrf.mxu0
    %v2276 = vadd.f32 %v2235, %v2275
    %v2277 = vpop.f32.mrf.mxu0
    %v2278 = vadd.f32 %v2237, %v2277
    %v2279 = vpop.f32.mrf.mxu0
    %v2280 = vpop.f32.mrf.mxu0
    %2281 = vdwg.mxu0
    %2282 = vmatprep.subr.bf16.mxu0 %v1747
    %2283 = vmatpush1.bf16.msra.mxu0 %v1746
    %2284 = vmatprep.subr.bf16.mxu0 %v1739
    %2285 = vmatpush1.bf16.msra.mxu0 %v1738
    %2286 = vmatprep.subr.bf16.mxu0 %v1731
    %2287 = vmatpush1.bf16.msra.mxu0 %v1730
    %2288 = vmatprep.subr.bf16.mxu0 %v1723
    %2289 = vmatpush1.bf16.msra.mxu0 %v1722
    %2290 = vmatprep.subr.bf16.mxu0 %v1715
    %2291 = vmatpush1.bf16.msra.mxu0 %v1714
    %2292 = vmatprep.subr.bf16.mxu0 %v1707
    %2293 = vmatpush1.bf16.msra.mxu0 %v1706
    %2294 = vmatprep.subr.bf16.mxu0 %v1699
    %2295 = vmatpush1.bf16.msra.mxu0 %v1698
    %2296 = vmatprep.subr.bf16.mxu0 %v1691
    %2297 = vmatpush1.bf16.msra.mxu0 %v1690
    %2298 = vmatprep.subr.bf16.mxu0 %v1811
    %2299 = vmatpush2.bf16.msra.mxu0 %v1810
    %2300 = vmatprep.subr.bf16.mxu0 %v1803
    %2301 = vmatpush2.bf16.msra.mxu0 %v1802
    %2302 = vmatprep.subr.bf16.mxu0 %v1795
    %2303 = vmatpush2.bf16.msra.mxu0 %v1794
    %2304 = vmatprep.subr.bf16.mxu0 %v1787
    %2305 = vmatpush2.bf16.msra.mxu0 %v1786
    %2306 = vmatprep.subr.bf16.mxu0 %v1779
    %2307 = vmatpush2.bf16.msra.mxu0 %v1778
    %2308 = vmatprep.subr.bf16.mxu0 %v1771
    %2309 = vmatpush2.bf16.msra.mxu0 %v1770
    %2310 = vmatprep.subr.bf16.mxu0 %v1763
    %2311 = vmatpush2.bf16.msra.mxu0 %v1762
    %2312 = vmatprep.subr.bf16.mxu0 %v1755
    %2313 = vmatpush2.bf16.msra.mxu0 %v1754
    %2314 = vmatprep.mubr.bf16.mxu0 %v876
    %2315 = vmatmul.mubr.bf16.gmra.mxu0 %v875
    %v2316 = vpop.f32.mrf.mxu0
    %v2317 = vadd.f32 %v891, %v2316
    %v2318 = vpop.f32.mrf.mxu0
    %v2319 = vadd.f32 %v895, %v2318
    %v2320 = vpop.f32.mrf.mxu0
    %v2321 = vpop.f32.mrf.mxu0
    %2322 = vdwg.mxu0
    %2323 = vmatprep.subr.bf16.mxu0 %v1875
    %2324 = vmatpush1.bf16.msra.mxu0 %v1874
    %2325 = vmatprep.subr.bf16.mxu0 %v1867
    %2326 = vmatpush1.bf16.msra.mxu0 %v1866
    %2327 = vmatprep.subr.bf16.mxu0 %v1859
    %2328 = vmatpush1.bf16.msra.mxu0 %v1858
    %2329 = vmatprep.subr.bf16.mxu0 %v1851
    %2330 = vmatpush1.bf16.msra.mxu0 %v1850
    %2331 = vmatprep.subr.bf16.mxu0 %v1843
    %2332 = vmatpush1.bf16.msra.mxu0 %v1842
    %2333 = vmatprep.subr.bf16.mxu0 %v1835
    %2334 = vmatpush1.bf16.msra.mxu0 %v1834
    %2335 = vmatprep.subr.bf16.mxu0 %v1827
    %2336 = vmatpush1.bf16.msra.mxu0 %v1826
    %2337 = vmatprep.subr.bf16.mxu0 %v1819
    %2338 = vmatpush1.bf16.msra.mxu0 %v1818
    %2339 = vmatprep.subr.bf16.mxu0 %v1939
    %2340 = vmatpush2.bf16.msra.mxu0 %v1938
    %2341 = vmatprep.subr.bf16.mxu0 %v1931
    %2342 = vmatpush2.bf16.msra.mxu0 %v1930
    %2343 = vmatprep.subr.bf16.mxu0 %v1923
    %2344 = vmatpush2.bf16.msra.mxu0 %v1922
    %2345 = vmatprep.subr.bf16.mxu0 %v1915
    %2346 = vmatpush2.bf16.msra.mxu0 %v1914
    %2347 = vmatprep.subr.bf16.mxu0 %v1907
    %2348 = vmatpush2.bf16.msra.mxu0 %v1906
    %2349 = vmatprep.subr.bf16.mxu0 %v1899
    %2350 = vmatpush2.bf16.msra.mxu0 %v1898
    %2351 = vmatprep.subr.bf16.mxu0 %v1891
    %2352 = vmatpush2.bf16.msra.mxu0 %v1890
    %2353 = vmatprep.subr.bf16.mxu0 %v1883
    %2354 = vmatpush2.bf16.msra.mxu0 %v1882
    %2355 = vmatprep.mubr.bf16.mxu0 %v878
    %2356 = vmatmul.mubr.bf16.gmra.mxu0 %v877
    %v2357 = vpop.f32.mrf.mxu0
    %v2358 = vadd.f32 %v2317, %v2357
    %v2359 = vpop.f32.mrf.mxu0
    %v2360 = vadd.f32 %v2319, %v2359
    %v2361 = vpop.f32.mrf.mxu0
    %v2362 = vpop.f32.mrf.mxu0
    %2363 = vdwg.mxu0
    %2364 = vmatprep.subr.bf16.mxu0 %v1749
    %2365 = vmatpush1.bf16.msra.mxu0 %v1748
    %2366 = vmatprep.subr.bf16.mxu0 %v1741
    %2367 = vmatpush1.bf16.msra.mxu0 %v1740
    %2368 = vmatprep.subr.bf16.mxu0 %v1733
    %2369 = vmatpush1.bf16.msra.mxu0 %v1732
    %2370 = vmatprep.subr.bf16.mxu0 %v1725
    %2371 = vmatpush1.bf16.msra.mxu0 %v1724
    %2372 = vmatprep.subr.bf16.mxu0 %v1717
    %2373 = vmatpush1.bf16.msra.mxu0 %v1716
    %2374 = vmatprep.subr.bf16.mxu0 %v1709
    %2375 = vmatpush1.bf16.msra.mxu0 %v1708
    %2376 = vmatprep.subr.bf16.mxu0 %v1701
    %2377 = vmatpush1.bf16.msra.mxu0 %v1700
    %2378 = vmatprep.subr.bf16.mxu0 %v1693
    %2379 = vmatpush1.bf16.msra.mxu0 %v1692
    %2380 = vmatprep.subr.bf16.mxu0 %v1813
    %2381 = vmatpush2.bf16.msra.mxu0 %v1812
    %2382 = vmatprep.subr.bf16.mxu0 %v1805
    %2383 = vmatpush2.bf16.msra.mxu0 %v1804
    %2384 = vmatprep.subr.bf16.mxu0 %v1797
    %2385 = vmatpush2.bf16.msra.mxu0 %v1796
    %2386 = vmatprep.subr.bf16.mxu0 %v1789
    %2387 = vmatpush2.bf16.msra.mxu0 %v1788
    %2388 = vmatprep.subr.bf16.mxu0 %v1781
    %2389 = vmatpush2.bf16.msra.mxu0 %v1780
    %2390 = vmatprep.subr.bf16.mxu0 %v1773
    %2391 = vmatpush2.bf16.msra.mxu0 %v1772
    %2392 = vmatprep.subr.bf16.mxu0 %v1765
    %2393 = vmatpush2.bf16.msra.mxu0 %v1764
    %2394 = vmatprep.subr.bf16.mxu0 %v1757
    %2395 = vmatpush2.bf16.msra.mxu0 %v1756
    %2396 = vmatprep.mubr.bf16.mxu0 %v876
    %2397 = vmatmul.mubr.bf16.gmra.mxu0 %v875
    %v2398 = vpop.f32.mrf.mxu0
    %v2399 = vadd.f32 %v899, %v2398
    %v2400 = vpop.f32.mrf.mxu0
    %v2401 = vadd.f32 %v903, %v2400
    %v2402 = vpop.f32.mrf.mxu0
    %v2403 = vpop.f32.mrf.mxu0
    %2404 = vdwg.mxu0
    %2405 = vmatprep.subr.bf16.mxu0 %v1877
    %2406 = vmatpush1.bf16.msra.mxu0 %v1876
    %2407 = vmatprep.subr.bf16.mxu0 %v1869
    %2408 = vmatpush1.bf16.msra.mxu0 %v1868
    %2409 = vmatprep.subr.bf16.mxu0 %v1861
    %2410 = vmatpush1.bf16.msra.mxu0 %v1860
    %2411 = vmatprep.subr.bf16.mxu0 %v1853
    %2412 = vmatpush1.bf16.msra.mxu0 %v1852
    %2413 = vmatprep.subr.bf16.mxu0 %v1845
    %2414 = vmatpush1.bf16.msra.mxu0 %v1844
    %2415 = vmatprep.subr.bf16.mxu0 %v1837
    %2416 = vmatpush1.bf16.msra.mxu0 %v1836
    %2417 = vmatprep.subr.bf16.mxu0 %v1829
    %2418 = vmatpush1.bf16.msra.mxu0 %v1828
    %2419 = vmatprep.subr.bf16.mxu0 %v1821
    %2420 = vmatpush1.bf16.msra.mxu0 %v1820
    %2421 = vmatprep.subr.bf16.mxu0 %v1941
    %2422 = vmatpush2.bf16.msra.mxu0 %v1940
    %2423 = vmatprep.subr.bf16.mxu0 %v1933
    %2424 = vmatpush2.bf16.msra.mxu0 %v1932
    %2425 = vmatprep.subr.bf16.mxu0 %v1925
    %2426 = vmatpush2.bf16.msra.mxu0 %v1924
    %2427 = vmatprep.subr.bf16.mxu0 %v1917
    %2428 = vmatpush2.bf16.msra.mxu0 %v1916
    %2429 = vmatprep.subr.bf16.mxu0 %v1909
    %2430 = vmatpush2.bf16.msra.mxu0 %v1908
    %2431 = vmatprep.subr.bf16.mxu0 %v1901
    %2432 = vmatpush2.bf16.msra.mxu0 %v1900
    %2433 = vmatprep.subr.bf16.mxu0 %v1893
    %2434 = vmatpush2.bf16.msra.mxu0 %v1892
    %2435 = vmatprep.subr.bf16.mxu0 %v1885
    %2436 = vmatpush2.bf16.msra.mxu0 %v1884
    %2437 = vmatprep.mubr.bf16.mxu0 %v878
    %2438 = vmatmul.mubr.bf16.gmra.mxu0 %v877
    %v2439 = vpop.f32.mrf.mxu0
    %v2440 = vadd.f32 %v2399, %v2439
    %v2441 = vpop.f32.mrf.mxu0
    %v2442 = vadd.f32 %v2401, %v2441
    %v2443 = vpop.f32.mrf.mxu0
    %v2444 = vpop.f32.mrf.mxu0
    %2445 = vdwg.mxu0
    %2446 = vmatprep.subr.bf16.mxu0 %v1751
    %2447 = vmatpush1.bf16.msra.mxu0 %v1750
    %2448 = vmatprep.subr.bf16.mxu0 %v1743
    %2449 = vmatpush1.bf16.msra.mxu0 %v1742
    %2450 = vmatprep.subr.bf16.mxu0 %v1735
    %2451 = vmatpush1.bf16.msra.mxu0 %v1734
    %2452 = vmatprep.subr.bf16.mxu0 %v1727
    %2453 = vmatpush1.bf16.msra.mxu0 %v1726
    %2454 = vmatprep.subr.bf16.mxu0 %v1719
    %2455 = vmatpush1.bf16.msra.mxu0 %v1718
    %2456 = vmatprep.subr.bf16.mxu0 %v1711
    %2457 = vmatpush1.bf16.msra.mxu0 %v1710
    %2458 = vmatprep.subr.bf16.mxu0 %v1703
    %2459 = vmatpush1.bf16.msra.mxu0 %v1702
    %2460 = vmatprep.subr.bf16.mxu0 %v1695
    %2461 = vmatpush1.bf16.msra.mxu0 %v1694
    %2462 = vmatprep.subr.bf16.mxu0 %v1815
    %2463 = vmatpush2.bf16.msra.mxu0 %v1814
    %2464 = vmatprep.subr.bf16.mxu0 %v1807
    %2465 = vmatpush2.bf16.msra.mxu0 %v1806
    %2466 = vmatprep.subr.bf16.mxu0 %v1799
    %2467 = vmatpush2.bf16.msra.mxu0 %v1798
    %2468 = vmatprep.subr.bf16.mxu0 %v1791
    %2469 = vmatpush2.bf16.msra.mxu0 %v1790
    %2470 = vmatprep.subr.bf16.mxu0 %v1783
    %2471 = vmatpush2.bf16.msra.mxu0 %v1782
    %2472 = vmatprep.subr.bf16.mxu0 %v1775
    %2473 = vmatpush2.bf16.msra.mxu0 %v1774
    %2474 = vmatprep.subr.bf16.mxu0 %v1767
    %2475 = vmatpush2.bf16.msra.mxu0 %v1766
    %2476 = vmatprep.subr.bf16.mxu0 %v1759
    %2477 = vmatpush2.bf16.msra.mxu0 %v1758
    %2478 = vmatprep.mubr.bf16.mxu0 %v876
    %2479 = vmatmul.mubr.bf16.gmra.mxu0 %v875
    %v2480 = vpop.f32.mrf.mxu0
    %v2481 = vadd.f32 %v907, %v2480
    %v2482 = vpop.f32.mrf.mxu0
    %v2483 = vadd.f32 %v911, %v2482
    %v2484 = vpop.f32.mrf.mxu0
    %v2485 = vpop.f32.mrf.mxu0
    %2486 = vdwg.mxu0
    %2487 = vmatprep.subr.bf16.mxu0 %v1879
    %2488 = vmatpush1.bf16.msra.mxu0 %v1878
    %2489 = vmatprep.subr.bf16.mxu0 %v1871
    %2490 = vmatpush1.bf16.msra.mxu0 %v1870
    %2491 = vmatprep.subr.bf16.mxu0 %v1863
    %2492 = vmatpush1.bf16.msra.mxu0 %v1862
    %2493 = vmatprep.subr.bf16.mxu0 %v1855
    %2494 = vmatpush1.bf16.msra.mxu0 %v1854
    %2495 = vmatprep.subr.bf16.mxu0 %v1847
    %2496 = vmatpush1.bf16.msra.mxu0 %v1846
    %2497 = vmatprep.subr.bf16.mxu0 %v1839
    %2498 = vmatpush1.bf16.msra.mxu0 %v1838
    %2499 = vmatprep.subr.bf16.mxu0 %v1831
    %2500 = vmatpush1.bf16.msra.mxu0 %v1830
    %2501 = vmatprep.subr.bf16.mxu0 %v1823
    %2502 = vmatpush1.bf16.msra.mxu0 %v1822
    %2503 = vmatprep.subr.bf16.mxu0 %v1943
    %2504 = vmatpush2.bf16.msra.mxu0 %v1942
    %2505 = vmatprep.subr.bf16.mxu0 %v1935
    %2506 = vmatpush2.bf16.msra.mxu0 %v1934
    %2507 = vmatprep.subr.bf16.mxu0 %v1927
    %2508 = vmatpush2.bf16.msra.mxu0 %v1926
    %2509 = vmatprep.subr.bf16.mxu0 %v1919
    %2510 = vmatpush2.bf16.msra.mxu0 %v1918
    %2511 = vmatprep.subr.bf16.mxu0 %v1911
    %2512 = vmatpush2.bf16.msra.mxu0 %v1910
    %2513 = vmatprep.subr.bf16.mxu0 %v1903
    %2514 = vmatpush2.bf16.msra.mxu0 %v1902
    %2515 = vmatprep.subr.bf16.mxu0 %v1895
    %2516 = vmatpush2.bf16.msra.mxu0 %v1894
    %2517 = vmatprep.subr.bf16.mxu0 %v1887
    %2518 = vmatpush2.bf16.msra.mxu0 %v1886
    %2519 = vmatprep.mubr.bf16.mxu0 %v878
    %2520 = vmatmul.mubr.bf16.gmra.mxu0 %v877
    %v2521 = vpop.f32.mrf.mxu0
    %v2522 = vadd.f32 %v2481, %v2521
    %v2523 = vpop.f32.mrf.mxu0
    %v2524 = vadd.f32 %v2483, %v2523
    %v2525 = vpop.f32.mrf.mxu0
    %v2526 = vpop.f32.mrf.mxu0
    %2527 = vdwg.mxu0
    %v2528 = vld [vmem:[#allocation11] sm:$0xff]
    %v2529 = vld [vmem:[#allocation11 + $0x8] sm:$0xff]
    %v2530 = vld [vmem:[#allocation11 + $0x10] sm:$0xff]
    %v2531 = vld [vmem:[#allocation11 + $0x18] sm:$0xff]
    %v2532 = vld [vmem:[#allocation11 + $0x20] sm:$0xff]
    %v2533 = vld [vmem:[#allocation11 + $0x28] sm:$0xff]
    %v2534 = vld [vmem:[#allocation11 + $0x30] sm:$0xff]
    %v2535 = vld [vmem:[#allocation11 + $0x38] sm:$0xff]
    %v2536 = vld [vmem:[#allocation11 + $0x40] sm:$0xff]
    %v2537 = vld [vmem:[#allocation11 + $0x48] sm:$0xff]
    %v2538 = vld [vmem:[#allocation11 + $0x50] sm:$0xff]
    %v2539 = vld [vmem:[#allocation11 + $0x58] sm:$0xff]
    %v2540 = vld [vmem:[#allocation11 + $0x60] sm:$0xff]
    %v2541 = vld [vmem:[#allocation11 + $0x68] sm:$0xff]
    %v2542 = vld [vmem:[#allocation11 + $0x70] sm:$0xff]
    %v2543 = vld [vmem:[#allocation11 + $0x78] sm:$0xff]
    %v2544 = vld [vmem:[#allocation11 + $0x80] sm:$0xff]
    %v2545 = vld [vmem:[#allocation11 + $0x88] sm:$0xff]
    %v2546 = vld [vmem:[#allocation11 + $0x90] sm:$0xff]
    %v2547 = vld [vmem:[#allocation11 + $0x98] sm:$0xff]
    %v2548 = vld [vmem:[#allocation11 + $0xa0] sm:$0xff]
    %v2549 = vld [vmem:[#allocation11 + $0xa8] sm:$0xff]
    %v2550 = vld [vmem:[#allocation11 + $0xb0] sm:$0xff]
    %v2551 = vld [vmem:[#allocation11 + $0xb8] sm:$0xff]
    %v2552 = vld [vmem:[#allocation11 + $0xc0] sm:$0xff]
    %v2553 = vld [vmem:[#allocation11 + $0xc8] sm:$0xff]
    %v2554 = vld [vmem:[#allocation11 + $0xd0] sm:$0xff]
    %v2555 = vld [vmem:[#allocation11 + $0xd8] sm:$0xff]
    %v2556 = vld [vmem:[#allocation11 + $0xe0] sm:$0xff]
    %v2557 = vld [vmem:[#allocation11 + $0xe8] sm:$0xff]
    %v2558 = vld [vmem:[#allocation11 + $0xf0] sm:$0xff]
    %v2559 = vld [vmem:[#allocation11 + $0xf8] sm:$0xff]
    %v2560 = vld [vmem:[#allocation11 + $0x100] sm:$0xff]
    %v2561 = vld [vmem:[#allocation11 + $0x108] sm:$0xff]
    %v2562 = vld [vmem:[#allocation11 + $0x110] sm:$0xff]
    %v2563 = vld [vmem:[#allocation11 + $0x118] sm:$0xff]
    %v2564 = vld [vmem:[#allocation11 + $0x120] sm:$0xff]
    %v2565 = vld [vmem:[#allocation11 + $0x128] sm:$0xff]
    %v2566 = vld [vmem:[#allocation11 + $0x130] sm:$0xff]
    %v2567 = vld [vmem:[#allocation11 + $0x138] sm:$0xff]
    %v2568 = vld [vmem:[#allocation11 + $0x140] sm:$0xff]
    %v2569 = vld [vmem:[#allocation11 + $0x148] sm:$0xff]
    %v2570 = vld [vmem:[#allocation11 + $0x150] sm:$0xff]
    %v2571 = vld [vmem:[#allocation11 + $0x158] sm:$0xff]
    %v2572 = vld [vmem:[#allocation11 + $0x160] sm:$0xff]
    %v2573 = vld [vmem:[#allocation11 + $0x168] sm:$0xff]
    %v2574 = vld [vmem:[#allocation11 + $0x170] sm:$0xff]
    %v2575 = vld [vmem:[#allocation11 + $0x178] sm:$0xff]
    %v2576 = vld [vmem:[#allocation11 + $0x180] sm:$0xff]
    %v2577 = vld [vmem:[#allocation11 + $0x188] sm:$0xff]
    %v2578 = vld [vmem:[#allocation11 + $0x190] sm:$0xff]
    %v2579 = vld [vmem:[#allocation11 + $0x198] sm:$0xff]
    %v2580 = vld [vmem:[#allocation11 + $0x1a0] sm:$0xff]
    %v2581 = vld [vmem:[#allocation11 + $0x1a8] sm:$0xff]
    %v2582 = vld [vmem:[#allocation11 + $0x1b0] sm:$0xff]
    %v2583 = vld [vmem:[#allocation11 + $0x1b8] sm:$0xff]
    %v2584 = vld [vmem:[#allocation11 + $0x1c0] sm:$0xff]
    %v2585 = vld [vmem:[#allocation11 + $0x1c8] sm:$0xff]
    %v2586 = vld [vmem:[#allocation11 + $0x1d0] sm:$0xff]
    %v2587 = vld [vmem:[#allocation11 + $0x1d8] sm:$0xff]
    %v2588 = vld [vmem:[#allocation11 + $0x1e0] sm:$0xff]
    %v2589 = vld [vmem:[#allocation11 + $0x1e8] sm:$0xff]
    %v2590 = vld [vmem:[#allocation11 + $0x1f0] sm:$0xff]
    %v2591 = vld [vmem:[#allocation11 + $0x1f8] sm:$0xff]
    %v2592 = vld [vmem:[#allocation11 + $0x200] sm:$0xff]
    %v2593 = vld [vmem:[#allocation11 + $0x208] sm:$0xff]
    %v2594 = vld [vmem:[#allocation11 + $0x210] sm:$0xff]
    %v2595 = vld [vmem:[#allocation11 + $0x218] sm:$0xff]
    %v2596 = vld [vmem:[#allocation11 + $0x220] sm:$0xff]
    %v2597 = vld [vmem:[#allocation11 + $0x228] sm:$0xff]
    %v2598 = vld [vmem:[#allocation11 + $0x230] sm:$0xff]
    %v2599 = vld [vmem:[#allocation11 + $0x238] sm:$0xff]
    %v2600 = vld [vmem:[#allocation11 + $0x240] sm:$0xff]
    %v2601 = vld [vmem:[#allocation11 + $0x248] sm:$0xff]
    %v2602 = vld [vmem:[#allocation11 + $0x250] sm:$0xff]
    %v2603 = vld [vmem:[#allocation11 + $0x258] sm:$0xff]
    %v2604 = vld [vmem:[#allocation11 + $0x260] sm:$0xff]
    %v2605 = vld [vmem:[#allocation11 + $0x268] sm:$0xff]
    %v2606 = vld [vmem:[#allocation11 + $0x270] sm:$0xff]
    %v2607 = vld [vmem:[#allocation11 + $0x278] sm:$0xff]
    %v2608 = vld [vmem:[#allocation11 + $0x280] sm:$0xff]
    %v2609 = vld [vmem:[#allocation11 + $0x288] sm:$0xff]
    %v2610 = vld [vmem:[#allocation11 + $0x290] sm:$0xff]
    %v2611 = vld [vmem:[#allocation11 + $0x298] sm:$0xff]
    %v2612 = vld [vmem:[#allocation11 + $0x2a0] sm:$0xff]
    %v2613 = vld [vmem:[#allocation11 + $0x2a8] sm:$0xff]
    %v2614 = vld [vmem:[#allocation11 + $0x2b0] sm:$0xff]
    %v2615 = vld [vmem:[#allocation11 + $0x2b8] sm:$0xff]
    %v2616 = vld [vmem:[#allocation11 + $0x2c0] sm:$0xff]
    %v2617 = vld [vmem:[#allocation11 + $0x2c8] sm:$0xff]
    %v2618 = vld [vmem:[#allocation11 + $0x2d0] sm:$0xff]
    %v2619 = vld [vmem:[#allocation11 + $0x2d8] sm:$0xff]
    %v2620 = vld [vmem:[#allocation11 + $0x2e0] sm:$0xff]
    %v2621 = vld [vmem:[#allocation11 + $0x2e8] sm:$0xff]
    %v2622 = vld [vmem:[#allocation11 + $0x2f0] sm:$0xff]
    %v2623 = vld [vmem:[#allocation11 + $0x2f8] sm:$0xff]
    %v2624 = vld [vmem:[#allocation11 + $0x300] sm:$0xff]
    %v2625 = vld [vmem:[#allocation11 + $0x308] sm:$0xff]
    %v2626 = vld [vmem:[#allocation11 + $0x310] sm:$0xff]
    %v2627 = vld [vmem:[#allocation11 + $0x318] sm:$0xff]
    %v2628 = vld [vmem:[#allocation11 + $0x320] sm:$0xff]
    %v2629 = vld [vmem:[#allocation11 + $0x328] sm:$0xff]
    %v2630 = vld [vmem:[#allocation11 + $0x330] sm:$0xff]
    %v2631 = vld [vmem:[#allocation11 + $0x338] sm:$0xff]
    %v2632 = vld [vmem:[#allocation11 + $0x340] sm:$0xff]
    %v2633 = vld [vmem:[#allocation11 + $0x348] sm:$0xff]
    %v2634 = vld [vmem:[#allocation11 + $0x350] sm:$0xff]
    %v2635 = vld [vmem:[#allocation11 + $0x358] sm:$0xff]
    %v2636 = vld [vmem:[#allocation11 + $0x360] sm:$0xff]
    %v2637 = vld [vmem:[#allocation11 + $0x368] sm:$0xff]
    %v2638 = vld [vmem:[#allocation11 + $0x370] sm:$0xff]
    %v2639 = vld [vmem:[#allocation11 + $0x378] sm:$0xff]
    %v2640 = vld [vmem:[#allocation11 + $0x380] sm:$0xff]
    %v2641 = vld [vmem:[#allocation11 + $0x388] sm:$0xff]
    %v2642 = vld [vmem:[#allocation11 + $0x390] sm:$0xff]
    %v2643 = vld [vmem:[#allocation11 + $0x398] sm:$0xff]
    %v2644 = vld [vmem:[#allocation11 + $0x3a0] sm:$0xff]
    %v2645 = vld [vmem:[#allocation11 + $0x3a8] sm:$0xff]
    %v2646 = vld [vmem:[#allocation11 + $0x3b0] sm:$0xff]
    %v2647 = vld [vmem:[#allocation11 + $0x3b8] sm:$0xff]
    %v2648 = vld [vmem:[#allocation11 + $0x3c0] sm:$0xff]
    %v2649 = vld [vmem:[#allocation11 + $0x3c8] sm:$0xff]
    %v2650 = vld [vmem:[#allocation11 + $0x3d0] sm:$0xff]
    %v2651 = vld [vmem:[#allocation11 + $0x3d8] sm:$0xff]
    %v2652 = vld [vmem:[#allocation11 + $0x3e0] sm:$0xff]
    %v2653 = vld [vmem:[#allocation11 + $0x3e8] sm:$0xff]
    %v2654 = vld [vmem:[#allocation11 + $0x3f0] sm:$0xff]
    %v2655 = vld [vmem:[#allocation11 + $0x3f8] sm:$0xff]
    %v2656 = vld [vmem:[#allocation11 + $0x400] sm:$0xff]
    %v2657 = vld [vmem:[#allocation11 + $0x408] sm:$0xff]
    %v2658 = vld [vmem:[#allocation11 + $0x410] sm:$0xff]
    %v2659 = vld [vmem:[#allocation11 + $0x418] sm:$0xff]
    %v2660 = vld [vmem:[#allocation11 + $0x420] sm:$0xff]
    %v2661 = vld [vmem:[#allocation11 + $0x428] sm:$0xff]
    %v2662 = vld [vmem:[#allocation11 + $0x430] sm:$0xff]
    %v2663 = vld [vmem:[#allocation11 + $0x438] sm:$0xff]
    %v2664 = vld [vmem:[#allocation11 + $0x440] sm:$0xff]
    %v2665 = vld [vmem:[#allocation11 + $0x448] sm:$0xff]
    %v2666 = vld [vmem:[#allocation11 + $0x450] sm:$0xff]
    %v2667 = vld [vmem:[#allocation11 + $0x458] sm:$0xff]
    %v2668 = vld [vmem:[#allocation11 + $0x460] sm:$0xff]
    %v2669 = vld [vmem:[#allocation11 + $0x468] sm:$0xff]
    %v2670 = vld [vmem:[#allocation11 + $0x470] sm:$0xff]
    %v2671 = vld [vmem:[#allocation11 + $0x478] sm:$0xff]
    %v2672 = vld [vmem:[#allocation11 + $0x480] sm:$0xff]
    %v2673 = vld [vmem:[#allocation11 + $0x488] sm:$0xff]
    %v2674 = vld [vmem:[#allocation11 + $0x490] sm:$0xff]
    %v2675 = vld [vmem:[#allocation11 + $0x498] sm:$0xff]
    %v2676 = vld [vmem:[#allocation11 + $0x4a0] sm:$0xff]
    %v2677 = vld [vmem:[#allocation11 + $0x4a8] sm:$0xff]
    %v2678 = vld [vmem:[#allocation11 + $0x4b0] sm:$0xff]
    %v2679 = vld [vmem:[#allocation11 + $0x4b8] sm:$0xff]
    %v2680 = vld [vmem:[#allocation11 + $0x4c0] sm:$0xff]
    %v2681 = vld [vmem:[#allocation11 + $0x4c8] sm:$0xff]
    %v2682 = vld [vmem:[#allocation11 + $0x4d0] sm:$0xff]
    %v2683 = vld [vmem:[#allocation11 + $0x4d8] sm:$0xff]
    %v2684 = vld [vmem:[#allocation11 + $0x4e0] sm:$0xff]
    %v2685 = vld [vmem:[#allocation11 + $0x4e8] sm:$0xff]
    %v2686 = vld [vmem:[#allocation11 + $0x4f0] sm:$0xff]
    %v2687 = vld [vmem:[#allocation11 + $0x4f8] sm:$0xff]
    %v2688 = vld [vmem:[#allocation11 + $0x500] sm:$0xff]
    %v2689 = vld [vmem:[#allocation11 + $0x508] sm:$0xff]
    %v2690 = vld [vmem:[#allocation11 + $0x510] sm:$0xff]
    %v2691 = vld [vmem:[#allocation11 + $0x518] sm:$0xff]
    %v2692 = vld [vmem:[#allocation11 + $0x520] sm:$0xff]
    %v2693 = vld [vmem:[#allocation11 + $0x528] sm:$0xff]
    %v2694 = vld [vmem:[#allocation11 + $0x530] sm:$0xff]
    %v2695 = vld [vmem:[#allocation11 + $0x538] sm:$0xff]
    %v2696 = vld [vmem:[#allocation11 + $0x540] sm:$0xff]
    %v2697 = vld [vmem:[#allocation11 + $0x548] sm:$0xff]
    %v2698 = vld [vmem:[#allocation11 + $0x550] sm:$0xff]
    %v2699 = vld [vmem:[#allocation11 + $0x558] sm:$0xff]
    %v2700 = vld [vmem:[#allocation11 + $0x560] sm:$0xff]
    %v2701 = vld [vmem:[#allocation11 + $0x568] sm:$0xff]
    %v2702 = vld [vmem:[#allocation11 + $0x570] sm:$0xff]
    %v2703 = vld [vmem:[#allocation11 + $0x578] sm:$0xff]
    %v2704 = vld [vmem:[#allocation11 + $0x580] sm:$0xff]
    %v2705 = vld [vmem:[#allocation11 + $0x588] sm:$0xff]
    %v2706 = vld [vmem:[#allocation11 + $0x590] sm:$0xff]
    %v2707 = vld [vmem:[#allocation11 + $0x598] sm:$0xff]
    %v2708 = vld [vmem:[#allocation11 + $0x5a0] sm:$0xff]
    %v2709 = vld [vmem:[#allocation11 + $0x5a8] sm:$0xff]
    %v2710 = vld [vmem:[#allocation11 + $0x5b0] sm:$0xff]
    %v2711 = vld [vmem:[#allocation11 + $0x5b8] sm:$0xff]
    %v2712 = vld [vmem:[#allocation11 + $0x5c0] sm:$0xff]
    %v2713 = vld [vmem:[#allocation11 + $0x5c8] sm:$0xff]
    %v2714 = vld [vmem:[#allocation11 + $0x5d0] sm:$0xff]
    %v2715 = vld [vmem:[#allocation11 + $0x5d8] sm:$0xff]
    %v2716 = vld [vmem:[#allocation11 + $0x5e0] sm:$0xff]
    %v2717 = vld [vmem:[#allocation11 + $0x5e8] sm:$0xff]
    %v2718 = vld [vmem:[#allocation11 + $0x5f0] sm:$0xff]
    %v2719 = vld [vmem:[#allocation11 + $0x5f8] sm:$0xff]
    %v2720 = vld [vmem:[#allocation11 + $0x600] sm:$0xff]
    %v2721 = vld [vmem:[#allocation11 + $0x608] sm:$0xff]
    %v2722 = vld [vmem:[#allocation11 + $0x610] sm:$0xff]
    %v2723 = vld [vmem:[#allocation11 + $0x618] sm:$0xff]
    %v2724 = vld [vmem:[#allocation11 + $0x620] sm:$0xff]
    %v2725 = vld [vmem:[#allocation11 + $0x628] sm:$0xff]
    %v2726 = vld [vmem:[#allocation11 + $0x630] sm:$0xff]
    %v2727 = vld [vmem:[#allocation11 + $0x638] sm:$0xff]
    %v2728 = vld [vmem:[#allocation11 + $0x640] sm:$0xff]
    %v2729 = vld [vmem:[#allocation11 + $0x648] sm:$0xff]
    %v2730 = vld [vmem:[#allocation11 + $0x650] sm:$0xff]
    %v2731 = vld [vmem:[#allocation11 + $0x658] sm:$0xff]
    %v2732 = vld [vmem:[#allocation11 + $0x660] sm:$0xff]
    %v2733 = vld [vmem:[#allocation11 + $0x668] sm:$0xff]
    %v2734 = vld [vmem:[#allocation11 + $0x670] sm:$0xff]
    %v2735 = vld [vmem:[#allocation11 + $0x678] sm:$0xff]
    %v2736 = vld [vmem:[#allocation11 + $0x680] sm:$0xff]
    %v2737 = vld [vmem:[#allocation11 + $0x688] sm:$0xff]
    %v2738 = vld [vmem:[#allocation11 + $0x690] sm:$0xff]
    %v2739 = vld [vmem:[#allocation11 + $0x698] sm:$0xff]
    %v2740 = vld [vmem:[#allocation11 + $0x6a0] sm:$0xff]
    %v2741 = vld [vmem:[#allocation11 + $0x6a8] sm:$0xff]
    %v2742 = vld [vmem:[#allocation11 + $0x6b0] sm:$0xff]
    %v2743 = vld [vmem:[#allocation11 + $0x6b8] sm:$0xff]
    %v2744 = vld [vmem:[#allocation11 + $0x6c0] sm:$0xff]
    %v2745 = vld [vmem:[#allocation11 + $0x6c8] sm:$0xff]
    %v2746 = vld [vmem:[#allocation11 + $0x6d0] sm:$0xff]
    %v2747 = vld [vmem:[#allocation11 + $0x6d8] sm:$0xff]
    %v2748 = vld [vmem:[#allocation11 + $0x6e0] sm:$0xff]
    %v2749 = vld [vmem:[#allocation11 + $0x6e8] sm:$0xff]
    %v2750 = vld [vmem:[#allocation11 + $0x6f0] sm:$0xff]
    %v2751 = vld [vmem:[#allocation11 + $0x6f8] sm:$0xff]
    %v2752 = vld [vmem:[#allocation11 + $0x700] sm:$0xff]
    %v2753 = vld [vmem:[#allocation11 + $0x708] sm:$0xff]
    %v2754 = vld [vmem:[#allocation11 + $0x710] sm:$0xff]
    %v2755 = vld [vmem:[#allocation11 + $0x718] sm:$0xff]
    %v2756 = vld [vmem:[#allocation11 + $0x720] sm:$0xff]
    %v2757 = vld [vmem:[#allocation11 + $0x728] sm:$0xff]
    %v2758 = vld [vmem:[#allocation11 + $0x730] sm:$0xff]
    %v2759 = vld [vmem:[#allocation11 + $0x738] sm:$0xff]
    %v2760 = vld [vmem:[#allocation11 + $0x740] sm:$0xff]
    %v2761 = vld [vmem:[#allocation11 + $0x748] sm:$0xff]
    %v2762 = vld [vmem:[#allocation11 + $0x750] sm:$0xff]
    %v2763 = vld [vmem:[#allocation11 + $0x758] sm:$0xff]
    %v2764 = vld [vmem:[#allocation11 + $0x760] sm:$0xff]
    %v2765 = vld [vmem:[#allocation11 + $0x768] sm:$0xff]
    %v2766 = vld [vmem:[#allocation11 + $0x770] sm:$0xff]
    %v2767 = vld [vmem:[#allocation11 + $0x778] sm:$0xff]
    %v2768 = vld [vmem:[#allocation11 + $0x780] sm:$0xff]
    %v2769 = vld [vmem:[#allocation11 + $0x788] sm:$0xff]
    %v2770 = vld [vmem:[#allocation11 + $0x790] sm:$0xff]
    %v2771 = vld [vmem:[#allocation11 + $0x798] sm:$0xff]
    %v2772 = vld [vmem:[#allocation11 + $0x7a0] sm:$0xff]
    %v2773 = vld [vmem:[#allocation11 + $0x7a8] sm:$0xff]
    %v2774 = vld [vmem:[#allocation11 + $0x7b0] sm:$0xff]
    %v2775 = vld [vmem:[#allocation11 + $0x7b8] sm:$0xff]
    %v2776 = vld [vmem:[#allocation11 + $0x7c0] sm:$0xff]
    %v2777 = vld [vmem:[#allocation11 + $0x7c8] sm:$0xff]
    %v2778 = vld [vmem:[#allocation11 + $0x7d0] sm:$0xff]
    %v2779 = vld [vmem:[#allocation11 + $0x7d8] sm:$0xff]
    %v2780 = vld [vmem:[#allocation11 + $0x7e0] sm:$0xff]
    %v2781 = vld [vmem:[#allocation11 + $0x7e8] sm:$0xff]
    %v2782 = vld [vmem:[#allocation11 + $0x7f0] sm:$0xff]
    %v2783 = vld [vmem:[#allocation11 + $0x7f8] sm:$0xff]
    %v2784 = vld [vmem:[%s6] sm:$0xf]
    %v2785 = vmax.f32 %v2276, 0.0
    %v2786 = vmax.f32 %v2278, 0.0
    %v2787 = vmax.f32 %v2358, 0.0
    %v2788 = vmax.f32 %v2360, 0.0
    %v2789 = vmax.f32 %v2440, 0.0
    %v2790 = vmax.f32 %v2442, 0.0
    %v2791 = vmax.f32 %v2522, 0.0
    %v2792 = vmax.f32 %v2524, 0.0
    %v2793 = vpack.c.bf16 %v2785, %v2785
    %v2794 = vpack.c.bf16 %v2786, %v2786
    %v2795 = vpack.c.bf16 %v2787, %v2787
    %v2796 = vpack.c.bf16 %v2788, %v2788
    %v2797 = vpack.c.bf16 %v2789, %v2789
    %v2798 = vpack.c.bf16 %v2790, %v2790
    %v2799 = vpack.c.bf16 %v2791, %v2791
    %v2800 = vpack.c.bf16 %v2792, %v2792
    %v2802 = vlaneseq
    %v2803 = vshrl.u32 %v2802, 7
    %v2804 = vsub.s32 0, %v2803
    %v2805 = vrot.slane %v2784, %v2804
    %v2806 = vlaneseq
    %v2807 = vshrl.u32 %v2806, 7
    %v2808 = vsub.s32 1, %v2807
    %v2809 = vrot.slane %v2784, %v2808
    %v2810 = vlaneseq
    %v2811 = vshrl.u32 %v2810, 7
    %v2812 = vsub.s32 2, %v2811
    %v2813 = vrot.slane %v2784, %v2812
    %v2814 = vlaneseq
    %v2815 = vshrl.u32 %v2814, 7
    %v2816 = vsub.s32 3, %v2815
    %v2817 = vrot.slane %v2784, %v2816
    %v3078 = vunpack.c.l.b16 %v2528
    %v3079 = vunpack.c.h.b16 %v2528
    %v3080 = vunpack.c.l.b16 %v2529
    %v3081 = vunpack.c.h.b16 %v2529
    %v3082 = vunpack.c.l.b16 %v2530
    %v3083 = vunpack.c.h.b16 %v2530
    %v3084 = vunpack.c.l.b16 %v2531
    %v3085 = vunpack.c.h.b16 %v2531
    %v3086 = vunpack.c.l.b16 %v2532
    %v3087 = vunpack.c.h.b16 %v2532
    %v3088 = vunpack.c.l.b16 %v2533
    %v3089 = vunpack.c.h.b16 %v2533
    %v3090 = vunpack.c.l.b16 %v2534
    %v3091 = vunpack.c.h.b16 %v2534
    %v3092 = vunpack.c.l.b16 %v2535
    %v3093 = vunpack.c.h.b16 %v2535
    %v3094 = vunpack.c.l.b16 %v2536
    %v3095 = vunpack.c.h.b16 %v2536
    %v3096 = vunpack.c.l.b16 %v2537
    %v3097 = vunpack.c.h.b16 %v2537
    %v3098 = vunpack.c.l.b16 %v2538
    %v3099 = vunpack.c.h.b16 %v2538
    %v3100 = vunpack.c.l.b16 %v2539
    %v3101 = vunpack.c.h.b16 %v2539
    %v3102 = vunpack.c.l.b16 %v2540
    %v3103 = vunpack.c.h.b16 %v2540
    %v3104 = vunpack.c.l.b16 %v2541
    %v3105 = vunpack.c.h.b16 %v2541
    %v3106 = vunpack.c.l.b16 %v2542
    %v3107 = vunpack.c.h.b16 %v2542
    %v3108 = vunpack.c.l.b16 %v2543
    %v3109 = vunpack.c.h.b16 %v2543
    %v3110 = vunpack.c.l.b16 %v2544
    %v3111 = vunpack.c.h.b16 %v2544
    %v3112 = vunpack.c.l.b16 %v2545
    %v3113 = vunpack.c.h.b16 %v2545
    %v3114 = vunpack.c.l.b16 %v2546
    %v3115 = vunpack.c.h.b16 %v2546
    %v3116 = vunpack.c.l.b16 %v2547
    %v3117 = vunpack.c.h.b16 %v2547
    %v3118 = vunpack.c.l.b16 %v2548
    %v3119 = vunpack.c.h.b16 %v2548
    %v3120 = vunpack.c.l.b16 %v2549
    %v3121 = vunpack.c.h.b16 %v2549
    %v3122 = vunpack.c.l.b16 %v2550
    %v3123 = vunpack.c.h.b16 %v2550
    %v3124 = vunpack.c.l.b16 %v2551
    %v3125 = vunpack.c.h.b16 %v2551
    %v3126 = vunpack.c.l.b16 %v2552
    %v3127 = vunpack.c.h.b16 %v2552
    %v3128 = vunpack.c.l.b16 %v2553
    %v3129 = vunpack.c.h.b16 %v2553
    %v3130 = vunpack.c.l.b16 %v2554
    %v3131 = vunpack.c.h.b16 %v2554
    %v3132 = vunpack.c.l.b16 %v2555
    %v3133 = vunpack.c.h.b16 %v2555
    %v3134 = vunpack.c.l.b16 %v2556
    %v3135 = vunpack.c.h.b16 %v2556
    %v3136 = vunpack.c.l.b16 %v2557
    %v3137 = vunpack.c.h.b16 %v2557
    %v3138 = vunpack.c.l.b16 %v2558
    %v3139 = vunpack.c.h.b16 %v2558
    %v3140 = vunpack.c.l.b16 %v2559
    %v3141 = vunpack.c.h.b16 %v2559
    %v3142 = vunpack.c.l.b16 %v2560
    %v3143 = vunpack.c.h.b16 %v2560
    %v3144 = vunpack.c.l.b16 %v2561
    %v3145 = vunpack.c.h.b16 %v2561
    %v3146 = vunpack.c.l.b16 %v2562
    %v3147 = vunpack.c.h.b16 %v2562
    %v3148 = vunpack.c.l.b16 %v2563
    %v3149 = vunpack.c.h.b16 %v2563
    %v3150 = vunpack.c.l.b16 %v2564
    %v3151 = vunpack.c.h.b16 %v2564
    %v3152 = vunpack.c.l.b16 %v2565
    %v3153 = vunpack.c.h.b16 %v2565
    %v3154 = vunpack.c.l.b16 %v2566
    %v3155 = vunpack.c.h.b16 %v2566
    %v3156 = vunpack.c.l.b16 %v2567
    %v3157 = vunpack.c.h.b16 %v2567
    %v3158 = vunpack.c.l.b16 %v2568
    %v3159 = vunpack.c.h.b16 %v2568
    %v3160 = vunpack.c.l.b16 %v2569
    %v3161 = vunpack.c.h.b16 %v2569
    %v3162 = vunpack.c.l.b16 %v2570
    %v3163 = vunpack.c.h.b16 %v2570
    %v3164 = vunpack.c.l.b16 %v2571
    %v3165 = vunpack.c.h.b16 %v2571
    %v3166 = vunpack.c.l.b16 %v2572
    %v3167 = vunpack.c.h.b16 %v2572
    %v3168 = vunpack.c.l.b16 %v2573
    %v3169 = vunpack.c.h.b16 %v2573
    %v3170 = vunpack.c.l.b16 %v2574
    %v3171 = vunpack.c.h.b16 %v2574
    %v3172 = vunpack.c.l.b16 %v2575
    %v3173 = vunpack.c.h.b16 %v2575
    %v3174 = vunpack.c.l.b16 %v2576
    %v3175 = vunpack.c.h.b16 %v2576
    %v3176 = vunpack.c.l.b16 %v2577
    %v3177 = vunpack.c.h.b16 %v2577
    %v3178 = vunpack.c.l.b16 %v2578
    %v3179 = vunpack.c.h.b16 %v2578
    %v3180 = vunpack.c.l.b16 %v2579
    %v3181 = vunpack.c.h.b16 %v2579
    %v3182 = vunpack.c.l.b16 %v2580
    %v3183 = vunpack.c.h.b16 %v2580
    %v3184 = vunpack.c.l.b16 %v2581
    %v3185 = vunpack.c.h.b16 %v2581
    %v3186 = vunpack.c.l.b16 %v2582
    %v3187 = vunpack.c.h.b16 %v2582
    %v3188 = vunpack.c.l.b16 %v2583
    %v3189 = vunpack.c.h.b16 %v2583
    %v3190 = vunpack.c.l.b16 %v2584
    %v3191 = vunpack.c.h.b16 %v2584
    %v3192 = vunpack.c.l.b16 %v2585
    %v3193 = vunpack.c.h.b16 %v2585
    %v3194 = vunpack.c.l.b16 %v2586
    %v3195 = vunpack.c.h.b16 %v2586
    %v3196 = vunpack.c.l.b16 %v2587
    %v3197 = vunpack.c.h.b16 %v2587
    %v3198 = vunpack.c.l.b16 %v2588
    %v3199 = vunpack.c.h.b16 %v2588
    %v3200 = vunpack.c.l.b16 %v2589
    %v3201 = vunpack.c.h.b16 %v2589
    %v3202 = vunpack.c.l.b16 %v2590
    %v3203 = vunpack.c.h.b16 %v2590
    %v3204 = vunpack.c.l.b16 %v2591
    %v3205 = vunpack.c.h.b16 %v2591
    %v3206 = vunpack.c.l.b16 %v2592
    %v3207 = vunpack.c.h.b16 %v2592
    %v3208 = vunpack.c.l.b16 %v2593
    %v3209 = vunpack.c.h.b16 %v2593
    %v3210 = vunpack.c.l.b16 %v2594
    %v3211 = vunpack.c.h.b16 %v2594
    %v3212 = vunpack.c.l.b16 %v2595
    %v3213 = vunpack.c.h.b16 %v2595
    %v3214 = vunpack.c.l.b16 %v2596
    %v3215 = vunpack.c.h.b16 %v2596
    %v3216 = vunpack.c.l.b16 %v2597
    %v3217 = vunpack.c.h.b16 %v2597
    %v3218 = vunpack.c.l.b16 %v2598
    %v3219 = vunpack.c.h.b16 %v2598
    %v3220 = vunpack.c.l.b16 %v2599
    %v3221 = vunpack.c.h.b16 %v2599
    %v3222 = vunpack.c.l.b16 %v2600
    %v3223 = vunpack.c.h.b16 %v2600
    %v3224 = vunpack.c.l.b16 %v2601
    %v3225 = vunpack.c.h.b16 %v2601
    %v3226 = vunpack.c.l.b16 %v2602
    %v3227 = vunpack.c.h.b16 %v2602
    %v3228 = vunpack.c.l.b16 %v2603
    %v3229 = vunpack.c.h.b16 %v2603
    %v3230 = vunpack.c.l.b16 %v2604
    %v3231 = vunpack.c.h.b16 %v2604
    %v3232 = vunpack.c.l.b16 %v2605
    %v3233 = vunpack.c.h.b16 %v2605
    %v3234 = vunpack.c.l.b16 %v2606
    %v3235 = vunpack.c.h.b16 %v2606
    %v3236 = vunpack.c.l.b16 %v2607
    %v3237 = vunpack.c.h.b16 %v2607
    %v3238 = vunpack.c.l.b16 %v2608
    %v3239 = vunpack.c.h.b16 %v2608
    %v3240 = vunpack.c.l.b16 %v2609
    %v3241 = vunpack.c.h.b16 %v2609
    %v3242 = vunpack.c.l.b16 %v2610
    %v3243 = vunpack.c.h.b16 %v2610
    %v3244 = vunpack.c.l.b16 %v2611
    %v3245 = vunpack.c.h.b16 %v2611
    %v3246 = vunpack.c.l.b16 %v2612
    %v3247 = vunpack.c.h.b16 %v2612
    %v3248 = vunpack.c.l.b16 %v2613
    %v3249 = vunpack.c.h.b16 %v2613
    %v3250 = vunpack.c.l.b16 %v2614
    %v3251 = vunpack.c.h.b16 %v2614
    %v3252 = vunpack.c.l.b16 %v2615
    %v3253 = vunpack.c.h.b16 %v2615
    %v3254 = vunpack.c.l.b16 %v2616
    %v3255 = vunpack.c.h.b16 %v2616
    %v3256 = vunpack.c.l.b16 %v2617
    %v3257 = vunpack.c.h.b16 %v2617
    %v3258 = vunpack.c.l.b16 %v2618
    %v3259 = vunpack.c.h.b16 %v2618
    %v3260 = vunpack.c.l.b16 %v2619
    %v3261 = vunpack.c.h.b16 %v2619
    %v3262 = vunpack.c.l.b16 %v2620
    %v3263 = vunpack.c.h.b16 %v2620
    %v3264 = vunpack.c.l.b16 %v2621
    %v3265 = vunpack.c.h.b16 %v2621
    %v3266 = vunpack.c.l.b16 %v2622
    %v3267 = vunpack.c.h.b16 %v2622
    %v3268 = vunpack.c.l.b16 %v2623
    %v3269 = vunpack.c.h.b16 %v2623
    %v3270 = vunpack.c.l.b16 %v2624
    %v3271 = vunpack.c.h.b16 %v2624
    %v3272 = vunpack.c.l.b16 %v2625
    %v3273 = vunpack.c.h.b16 %v2625
    %v3274 = vunpack.c.l.b16 %v2626
    %v3275 = vunpack.c.h.b16 %v2626
    %v3276 = vunpack.c.l.b16 %v2627
    %v3277 = vunpack.c.h.b16 %v2627
    %v3278 = vunpack.c.l.b16 %v2628
    %v3279 = vunpack.c.h.b16 %v2628
    %v3280 = vunpack.c.l.b16 %v2629
    %v3281 = vunpack.c.h.b16 %v2629
    %v3282 = vunpack.c.l.b16 %v2630
    %v3283 = vunpack.c.h.b16 %v2630
    %v3284 = vunpack.c.l.b16 %v2631
    %v3285 = vunpack.c.h.b16 %v2631
    %v3286 = vunpack.c.l.b16 %v2632
    %v3287 = vunpack.c.h.b16 %v2632
    %v3288 = vunpack.c.l.b16 %v2633
    %v3289 = vunpack.c.h.b16 %v2633
    %v3290 = vunpack.c.l.b16 %v2634
    %v3291 = vunpack.c.h.b16 %v2634
    %v3292 = vunpack.c.l.b16 %v2635
    %v3293 = vunpack.c.h.b16 %v2635
    %v3294 = vunpack.c.l.b16 %v2636
    %v3295 = vunpack.c.h.b16 %v2636
    %v3296 = vunpack.c.l.b16 %v2637
    %v3297 = vunpack.c.h.b16 %v2637
    %v3298 = vunpack.c.l.b16 %v2638
    %v3299 = vunpack.c.h.b16 %v2638
    %v3300 = vunpack.c.l.b16 %v2639
    %v3301 = vunpack.c.h.b16 %v2639
    %v3302 = vunpack.c.l.b16 %v2640
    %v3303 = vunpack.c.h.b16 %v2640
    %v3304 = vunpack.c.l.b16 %v2641
    %v3305 = vunpack.c.h.b16 %v2641
    %v3306 = vunpack.c.l.b16 %v2642
    %v3307 = vunpack.c.h.b16 %v2642
    %v3308 = vunpack.c.l.b16 %v2643
    %v3309 = vunpack.c.h.b16 %v2643
    %v3310 = vunpack.c.l.b16 %v2644
    %v3311 = vunpack.c.h.b16 %v2644
    %v3312 = vunpack.c.l.b16 %v2645
    %v3313 = vunpack.c.h.b16 %v2645
    %v3314 = vunpack.c.l.b16 %v2646
    %v3315 = vunpack.c.h.b16 %v2646
    %v3316 = vunpack.c.l.b16 %v2647
    %v3317 = vunpack.c.h.b16 %v2647
    %v3318 = vunpack.c.l.b16 %v2648
    %v3319 = vunpack.c.h.b16 %v2648
    %v3320 = vunpack.c.l.b16 %v2649
    %v3321 = vunpack.c.h.b16 %v2649
    %v3322 = vunpack.c.l.b16 %v2650
    %v3323 = vunpack.c.h.b16 %v2650
    %v3324 = vunpack.c.l.b16 %v2651
    %v3325 = vunpack.c.h.b16 %v2651
    %v3326 = vunpack.c.l.b16 %v2652
    %v3327 = vunpack.c.h.b16 %v2652
    %v3328 = vunpack.c.l.b16 %v2653
    %v3329 = vunpack.c.h.b16 %v2653
    %v3330 = vunpack.c.l.b16 %v2654
    %v3331 = vunpack.c.h.b16 %v2654
    %v3332 = vunpack.c.l.b16 %v2655
    %v3333 = vunpack.c.h.b16 %v2655
    %v3334 = vunpack.c.l.b16 %v2656
    %v3335 = vunpack.c.h.b16 %v2656
    %v3336 = vunpack.c.l.b16 %v2657
    %v3337 = vunpack.c.h.b16 %v2657
    %v3338 = vunpack.c.l.b16 %v2658
    %v3339 = vunpack.c.h.b16 %v2658
    %v3340 = vunpack.c.l.b16 %v2659
    %v3341 = vunpack.c.h.b16 %v2659
    %v3342 = vunpack.c.l.b16 %v2660
    %v3343 = vunpack.c.h.b16 %v2660
    %v3344 = vunpack.c.l.b16 %v2661
    %v3345 = vunpack.c.h.b16 %v2661
    %v3346 = vunpack.c.l.b16 %v2662
    %v3347 = vunpack.c.h.b16 %v2662
    %v3348 = vunpack.c.l.b16 %v2663
    %v3349 = vunpack.c.h.b16 %v2663
    %v3350 = vunpack.c.l.b16 %v2664
    %v3351 = vunpack.c.h.b16 %v2664
    %v3352 = vunpack.c.l.b16 %v2665
    %v3353 = vunpack.c.h.b16 %v2665
    %v3354 = vunpack.c.l.b16 %v2666
    %v3355 = vunpack.c.h.b16 %v2666
    %v3356 = vunpack.c.l.b16 %v2667
    %v3357 = vunpack.c.h.b16 %v2667
    %v3358 = vunpack.c.l.b16 %v2668
    %v3359 = vunpack.c.h.b16 %v2668
    %v3360 = vunpack.c.l.b16 %v2669
    %v3361 = vunpack.c.h.b16 %v2669
    %v3362 = vunpack.c.l.b16 %v2670
    %v3363 = vunpack.c.h.b16 %v2670
    %v3364 = vunpack.c.l.b16 %v2671
    %v3365 = vunpack.c.h.b16 %v2671
    %v3366 = vunpack.c.l.b16 %v2672
    %v3367 = vunpack.c.h.b16 %v2672
    %v3368 = vunpack.c.l.b16 %v2673
    %v3369 = vunpack.c.h.b16 %v2673
    %v3370 = vunpack.c.l.b16 %v2674
    %v3371 = vunpack.c.h.b16 %v2674
    %v3372 = vunpack.c.l.b16 %v2675
    %v3373 = vunpack.c.h.b16 %v2675
    %v3374 = vunpack.c.l.b16 %v2676
    %v3375 = vunpack.c.h.b16 %v2676
    %v3376 = vunpack.c.l.b16 %v2677
    %v3377 = vunpack.c.h.b16 %v2677
    %v3378 = vunpack.c.l.b16 %v2678
    %v3379 = vunpack.c.h.b16 %v2678
    %v3380 = vunpack.c.l.b16 %v2679
    %v3381 = vunpack.c.h.b16 %v2679
    %v3382 = vunpack.c.l.b16 %v2680
    %v3383 = vunpack.c.h.b16 %v2680
    %v3384 = vunpack.c.l.b16 %v2681
    %v3385 = vunpack.c.h.b16 %v2681
    %v3386 = vunpack.c.l.b16 %v2682
    %v3387 = vunpack.c.h.b16 %v2682
    %v3388 = vunpack.c.l.b16 %v2683
    %v3389 = vunpack.c.h.b16 %v2683
    %v3390 = vunpack.c.l.b16 %v2684
    %v3391 = vunpack.c.h.b16 %v2684
    %v3392 = vunpack.c.l.b16 %v2685
    %v3393 = vunpack.c.h.b16 %v2685
    %v3394 = vunpack.c.l.b16 %v2686
    %v3395 = vunpack.c.h.b16 %v2686
    %v3396 = vunpack.c.l.b16 %v2687
    %v3397 = vunpack.c.h.b16 %v2687
    %v3398 = vunpack.c.l.b16 %v2688
    %v3399 = vunpack.c.h.b16 %v2688
    %v3400 = vunpack.c.l.b16 %v2689
    %v3401 = vunpack.c.h.b16 %v2689
    %v3402 = vunpack.c.l.b16 %v2690
    %v3403 = vunpack.c.h.b16 %v2690
    %v3404 = vunpack.c.l.b16 %v2691
    %v3405 = vunpack.c.h.b16 %v2691
    %v3406 = vunpack.c.l.b16 %v2692
    %v3407 = vunpack.c.h.b16 %v2692
    %v3408 = vunpack.c.l.b16 %v2693
    %v3409 = vunpack.c.h.b16 %v2693
    %v3410 = vunpack.c.l.b16 %v2694
    %v3411 = vunpack.c.h.b16 %v2694
    %v3412 = vunpack.c.l.b16 %v2695
    %v3413 = vunpack.c.h.b16 %v2695
    %v3414 = vunpack.c.l.b16 %v2696
    %v3415 = vunpack.c.h.b16 %v2696
    %v3416 = vunpack.c.l.b16 %v2697
    %v3417 = vunpack.c.h.b16 %v2697
    %v3418 = vunpack.c.l.b16 %v2698
    %v3419 = vunpack.c.h.b16 %v2698
    %v3420 = vunpack.c.l.b16 %v2699
    %v3421 = vunpack.c.h.b16 %v2699
    %v3422 = vunpack.c.l.b16 %v2700
    %v3423 = vunpack.c.h.b16 %v2700
    %v3424 = vunpack.c.l.b16 %v2701
    %v3425 = vunpack.c.h.b16 %v2701
    %v3426 = vunpack.c.l.b16 %v2702
    %v3427 = vunpack.c.h.b16 %v2702
    %v3428 = vunpack.c.l.b16 %v2703
    %v3429 = vunpack.c.h.b16 %v2703
    %v3430 = vunpack.c.l.b16 %v2704
    %v3431 = vunpack.c.h.b16 %v2704
    %v3432 = vunpack.c.l.b16 %v2705
    %v3433 = vunpack.c.h.b16 %v2705
    %v3434 = vunpack.c.l.b16 %v2706
    %v3435 = vunpack.c.h.b16 %v2706
    %v3436 = vunpack.c.l.b16 %v2707
    %v3437 = vunpack.c.h.b16 %v2707
    %v3438 = vunpack.c.l.b16 %v2708
    %v3439 = vunpack.c.h.b16 %v2708
    %v3440 = vunpack.c.l.b16 %v2709
    %v3441 = vunpack.c.h.b16 %v2709
    %v3442 = vunpack.c.l.b16 %v2710
    %v3443 = vunpack.c.h.b16 %v2710
    %v3444 = vunpack.c.l.b16 %v2711
    %v3445 = vunpack.c.h.b16 %v2711
    %v3446 = vunpack.c.l.b16 %v2712
    %v3447 = vunpack.c.h.b16 %v2712
    %v3448 = vunpack.c.l.b16 %v2713
    %v3449 = vunpack.c.h.b16 %v2713
    %v3450 = vunpack.c.l.b16 %v2714
    %v3451 = vunpack.c.h.b16 %v2714
    %v3452 = vunpack.c.l.b16 %v2715
    %v3453 = vunpack.c.h.b16 %v2715
    %v3454 = vunpack.c.l.b16 %v2716
    %v3455 = vunpack.c.h.b16 %v2716
    %v3456 = vunpack.c.l.b16 %v2717
    %v3457 = vunpack.c.h.b16 %v2717
    %v3458 = vunpack.c.l.b16 %v2718
    %v3459 = vunpack.c.h.b16 %v2718
    %v3460 = vunpack.c.l.b16 %v2719
    %v3461 = vunpack.c.h.b16 %v2719
    %v3462 = vunpack.c.l.b16 %v2720
    %v3463 = vunpack.c.h.b16 %v2720
    %v3464 = vunpack.c.l.b16 %v2721
    %v3465 = vunpack.c.h.b16 %v2721
    %v3466 = vunpack.c.l.b16 %v2722
    %v3467 = vunpack.c.h.b16 %v2722
    %v3468 = vunpack.c.l.b16 %v2723
    %v3469 = vunpack.c.h.b16 %v2723
    %v3470 = vunpack.c.l.b16 %v2724
    %v3471 = vunpack.c.h.b16 %v2724
    %v3472 = vunpack.c.l.b16 %v2725
    %v3473 = vunpack.c.h.b16 %v2725
    %v3474 = vunpack.c.l.b16 %v2726
    %v3475 = vunpack.c.h.b16 %v2726
    %v3476 = vunpack.c.l.b16 %v2727
    %v3477 = vunpack.c.h.b16 %v2727
    %v3478 = vunpack.c.l.b16 %v2728
    %v3479 = vunpack.c.h.b16 %v2728
    %v3480 = vunpack.c.l.b16 %v2729
    %v3481 = vunpack.c.h.b16 %v2729
    %v3482 = vunpack.c.l.b16 %v2730
    %v3483 = vunpack.c.h.b16 %v2730
    %v3484 = vunpack.c.l.b16 %v2731
    %v3485 = vunpack.c.h.b16 %v2731
    %v3486 = vunpack.c.l.b16 %v2732
    %v3487 = vunpack.c.h.b16 %v2732
    %v3488 = vunpack.c.l.b16 %v2733
    %v3489 = vunpack.c.h.b16 %v2733
    %v3490 = vunpack.c.l.b16 %v2734
    %v3491 = vunpack.c.h.b16 %v2734
    %v3492 = vunpack.c.l.b16 %v2735
    %v3493 = vunpack.c.h.b16 %v2735
    %v3494 = vunpack.c.l.b16 %v2736
    %v3495 = vunpack.c.h.b16 %v2736
    %v3496 = vunpack.c.l.b16 %v2737
    %v3497 = vunpack.c.h.b16 %v2737
    %v3498 = vunpack.c.l.b16 %v2738
    %v3499 = vunpack.c.h.b16 %v2738
    %v3500 = vunpack.c.l.b16 %v2739
    %v3501 = vunpack.c.h.b16 %v2739
    %v3502 = vunpack.c.l.b16 %v2740
    %v3503 = vunpack.c.h.b16 %v2740
    %v3504 = vunpack.c.l.b16 %v2741
    %v3505 = vunpack.c.h.b16 %v2741
    %v3506 = vunpack.c.l.b16 %v2742
    %v3507 = vunpack.c.h.b16 %v2742
    %v3508 = vunpack.c.l.b16 %v2743
    %v3509 = vunpack.c.h.b16 %v2743
    %v3510 = vunpack.c.l.b16 %v2744
    %v3511 = vunpack.c.h.b16 %v2744
    %v3512 = vunpack.c.l.b16 %v2745
    %v3513 = vunpack.c.h.b16 %v2745
    %v3514 = vunpack.c.l.b16 %v2746
    %v3515 = vunpack.c.h.b16 %v2746
    %v3516 = vunpack.c.l.b16 %v2747
    %v3517 = vunpack.c.h.b16 %v2747
    %v3518 = vunpack.c.l.b16 %v2748
    %v3519 = vunpack.c.h.b16 %v2748
    %v3520 = vunpack.c.l.b16 %v2749
    %v3521 = vunpack.c.h.b16 %v2749
    %v3522 = vunpack.c.l.b16 %v2750
    %v3523 = vunpack.c.h.b16 %v2750
    %v3524 = vunpack.c.l.b16 %v2751
    %v3525 = vunpack.c.h.b16 %v2751
    %v3526 = vunpack.c.l.b16 %v2752
    %v3527 = vunpack.c.h.b16 %v2752
    %v3528 = vunpack.c.l.b16 %v2753
    %v3529 = vunpack.c.h.b16 %v2753
    %v3530 = vunpack.c.l.b16 %v2754
    %v3531 = vunpack.c.h.b16 %v2754
    %v3532 = vunpack.c.l.b16 %v2755
    %v3533 = vunpack.c.h.b16 %v2755
    %v3534 = vunpack.c.l.b16 %v2756
    %v3535 = vunpack.c.h.b16 %v2756
    %v3536 = vunpack.c.l.b16 %v2757
    %v3537 = vunpack.c.h.b16 %v2757
    %v3538 = vunpack.c.l.b16 %v2758
    %v3539 = vunpack.c.h.b16 %v2758
    %v3540 = vunpack.c.l.b16 %v2759
    %v3541 = vunpack.c.h.b16 %v2759
    %v3542 = vunpack.c.l.b16 %v2760
    %v3543 = vunpack.c.h.b16 %v2760
    %v3544 = vunpack.c.l.b16 %v2761
    %v3545 = vunpack.c.h.b16 %v2761
    %v3546 = vunpack.c.l.b16 %v2762
    %v3547 = vunpack.c.h.b16 %v2762
    %v3548 = vunpack.c.l.b16 %v2763
    %v3549 = vunpack.c.h.b16 %v2763
    %v3550 = vunpack.c.l.b16 %v2764
    %v3551 = vunpack.c.h.b16 %v2764
    %v3552 = vunpack.c.l.b16 %v2765
    %v3553 = vunpack.c.h.b16 %v2765
    %v3554 = vunpack.c.l.b16 %v2766
    %v3555 = vunpack.c.h.b16 %v2766
    %v3556 = vunpack.c.l.b16 %v2767
    %v3557 = vunpack.c.h.b16 %v2767
    %v3558 = vunpack.c.l.b16 %v2768
    %v3559 = vunpack.c.h.b16 %v2768
    %v3560 = vunpack.c.l.b16 %v2769
    %v3561 = vunpack.c.h.b16 %v2769
    %v3562 = vunpack.c.l.b16 %v2770
    %v3563 = vunpack.c.h.b16 %v2770
    %v3564 = vunpack.c.l.b16 %v2771
    %v3565 = vunpack.c.h.b16 %v2771
    %v3566 = vunpack.c.l.b16 %v2772
    %v3567 = vunpack.c.h.b16 %v2772
    %v3568 = vunpack.c.l.b16 %v2773
    %v3569 = vunpack.c.h.b16 %v2773
    %v3570 = vunpack.c.l.b16 %v2774
    %v3571 = vunpack.c.h.b16 %v2774
    %v3572 = vunpack.c.l.b16 %v2775
    %v3573 = vunpack.c.h.b16 %v2775
    %v3574 = vunpack.c.l.b16 %v2776
    %v3575 = vunpack.c.h.b16 %v2776
    %v3576 = vunpack.c.l.b16 %v2777
    %v3577 = vunpack.c.h.b16 %v2777
    %v3578 = vunpack.c.l.b16 %v2778
    %v3579 = vunpack.c.h.b16 %v2778
    %v3580 = vunpack.c.l.b16 %v2779
    %v3581 = vunpack.c.h.b16 %v2779
    %v3582 = vunpack.c.l.b16 %v2780
    %v3583 = vunpack.c.h.b16 %v2780
    %v3584 = vunpack.c.l.b16 %v2781
    %v3585 = vunpack.c.h.b16 %v2781
    %v3586 = vunpack.c.l.b16 %v2782
    %v3587 = vunpack.c.h.b16 %v2782
    %v3588 = vunpack.c.l.b16 %v2783
    %v3589 = vunpack.c.h.b16 %v2783
    %v3590 = vpack.c.b16 %v3082, %v3078
    %v3591 = vpack.c.b16 %v3083, %v3079
    %v3592 = vpack.c.b16 %v3084, %v3080
    %v3593 = vpack.c.b16 %v3085, %v3081
    %v3594 = vpack.c.b16 %v3090, %v3086
    %v3595 = vpack.c.b16 %v3091, %v3087
    %v3596 = vpack.c.b16 %v3092, %v3088
    %v3597 = vpack.c.b16 %v3093, %v3089
    %v3598 = vpack.c.b16 %v3098, %v3094
    %v3599 = vpack.c.b16 %v3099, %v3095
    %v3600 = vpack.c.b16 %v3100, %v3096
    %v3601 = vpack.c.b16 %v3101, %v3097
    %v3602 = vpack.c.b16 %v3106, %v3102
    %v3603 = vpack.c.b16 %v3107, %v3103
    %v3604 = vpack.c.b16 %v3108, %v3104
    %v3605 = vpack.c.b16 %v3109, %v3105
    %v3606 = vpack.c.b16 %v3114, %v3110
    %v3607 = vpack.c.b16 %v3115, %v3111
    %v3608 = vpack.c.b16 %v3116, %v3112
    %v3609 = vpack.c.b16 %v3117, %v3113
    %v3610 = vpack.c.b16 %v3122, %v3118
    %v3611 = vpack.c.b16 %v3123, %v3119
    %v3612 = vpack.c.b16 %v3124, %v3120
    %v3613 = vpack.c.b16 %v3125, %v3121
    %v3614 = vpack.c.b16 %v3130, %v3126
    %v3615 = vpack.c.b16 %v3131, %v3127
    %v3616 = vpack.c.b16 %v3132, %v3128
    %v3617 = vpack.c.b16 %v3133, %v3129
    %v3618 = vpack.c.b16 %v3138, %v3134
    %v3619 = vpack.c.b16 %v3139, %v3135
    %v3620 = vpack.c.b16 %v3140, %v3136
    %v3621 = vpack.c.b16 %v3141, %v3137
    %v3622 = vpack.c.b16 %v3146, %v3142
    %v3623 = vpack.c.b16 %v3147, %v3143
    %v3624 = vpack.c.b16 %v3148, %v3144
    %v3625 = vpack.c.b16 %v3149, %v3145
    %v3626 = vpack.c.b16 %v3154, %v3150
    %v3627 = vpack.c.b16 %v3155, %v3151
    %v3628 = vpack.c.b16 %v3156, %v3152
    %v3629 = vpack.c.b16 %v3157, %v3153
    %v3630 = vpack.c.b16 %v3162, %v3158
    %v3631 = vpack.c.b16 %v3163, %v3159
    %v3632 = vpack.c.b16 %v3164, %v3160
    %v3633 = vpack.c.b16 %v3165, %v3161
    %v3634 = vpack.c.b16 %v3170, %v3166
    %v3635 = vpack.c.b16 %v3171, %v3167
    %v3636 = vpack.c.b16 %v3172, %v3168
    %v3637 = vpack.c.b16 %v3173, %v3169
    %v3638 = vpack.c.b16 %v3178, %v3174
    %v3639 = vpack.c.b16 %v3179, %v3175
    %v3640 = vpack.c.b16 %v3180, %v3176
    %v3641 = vpack.c.b16 %v3181, %v3177
    %v3642 = vpack.c.b16 %v3186, %v3182
    %v3643 = vpack.c.b16 %v3187, %v3183
    %v3644 = vpack.c.b16 %v3188, %v3184
    %v3645 = vpack.c.b16 %v3189, %v3185
    %v3646 = vpack.c.b16 %v3194, %v3190
    %v3647 = vpack.c.b16 %v3195, %v3191
    %v3648 = vpack.c.b16 %v3196, %v3192
    %v3649 = vpack.c.b16 %v3197, %v3193
    %v3650 = vpack.c.b16 %v3202, %v3198
    %v3651 = vpack.c.b16 %v3203, %v3199
    %v3652 = vpack.c.b16 %v3204, %v3200
    %v3653 = vpack.c.b16 %v3205, %v3201
    %v3654 = vpack.c.b16 %v3210, %v3206
    %v3655 = vpack.c.b16 %v3211, %v3207
    %v3656 = vpack.c.b16 %v3212, %v3208
    %v3657 = vpack.c.b16 %v3213, %v3209
    %v3658 = vpack.c.b16 %v3218, %v3214
    %v3659 = vpack.c.b16 %v3219, %v3215
    %v3660 = vpack.c.b16 %v3220, %v3216
    %v3661 = vpack.c.b16 %v3221, %v3217
    %v3662 = vpack.c.b16 %v3226, %v3222
    %v3663 = vpack.c.b16 %v3227, %v3223
    %v3664 = vpack.c.b16 %v3228, %v3224
    %v3665 = vpack.c.b16 %v3229, %v3225
    %v3666 = vpack.c.b16 %v3234, %v3230
    %v3667 = vpack.c.b16 %v3235, %v3231
    %v3668 = vpack.c.b16 %v3236, %v3232
    %v3669 = vpack.c.b16 %v3237, %v3233
    %v3670 = vpack.c.b16 %v3242, %v3238
    %v3671 = vpack.c.b16 %v3243, %v3239
    %v3672 = vpack.c.b16 %v3244, %v3240
    %v3673 = vpack.c.b16 %v3245, %v3241
    %v3674 = vpack.c.b16 %v3250, %v3246
    %v3675 = vpack.c.b16 %v3251, %v3247
    %v3676 = vpack.c.b16 %v3252, %v3248
    %v3677 = vpack.c.b16 %v3253, %v3249
    %v3678 = vpack.c.b16 %v3258, %v3254
    %v3679 = vpack.c.b16 %v3259, %v3255
    %v3680 = vpack.c.b16 %v3260, %v3256
    %v3681 = vpack.c.b16 %v3261, %v3257
    %v3682 = vpack.c.b16 %v3266, %v3262
    %v3683 = vpack.c.b16 %v3267, %v3263
    %v3684 = vpack.c.b16 %v3268, %v3264
    %v3685 = vpack.c.b16 %v3269, %v3265
    %v3686 = vpack.c.b16 %v3274, %v3270
    %v3687 = vpack.c.b16 %v3275, %v3271
    %v3688 = vpack.c.b16 %v3276, %v3272
    %v3689 = vpack.c.b16 %v3277, %v3273
    %v3690 = vpack.c.b16 %v3282, %v3278
    %v3691 = vpack.c.b16 %v3283, %v3279
    %v3692 = vpack.c.b16 %v3284, %v3280
    %v3693 = vpack.c.b16 %v3285, %v3281
    %v3694 = vpack.c.b16 %v3290, %v3286
    %v3695 = vpack.c.b16 %v3291, %v3287
    %v3696 = vpack.c.b16 %v3292, %v3288
    %v3697 = vpack.c.b16 %v3293, %v3289
    %v3698 = vpack.c.b16 %v3298, %v3294
    %v3699 = vpack.c.b16 %v3299, %v3295
    %v3700 = vpack.c.b16 %v3300, %v3296
    %v3701 = vpack.c.b16 %v3301, %v3297
    %v3702 = vpack.c.b16 %v3306, %v3302
    %v3703 = vpack.c.b16 %v3307, %v3303
    %v3704 = vpack.c.b16 %v3308, %v3304
    %v3705 = vpack.c.b16 %v3309, %v3305
    %v3706 = vpack.c.b16 %v3314, %v3310
    %v3707 = vpack.c.b16 %v3315, %v3311
    %v3708 = vpack.c.b16 %v3316, %v3312
    %v3709 = vpack.c.b16 %v3317, %v3313
    %v3710 = vpack.c.b16 %v3322, %v3318
    %v3711 = vpack.c.b16 %v3323, %v3319
    %v3712 = vpack.c.b16 %v3324, %v3320
    %v3713 = vpack.c.b16 %v3325, %v3321
    %v3714 = vpack.c.b16 %v3330, %v3326
    %v3715 = vpack.c.b16 %v3331, %v3327
    %v3716 = vpack.c.b16 %v3332, %v3328
    %v3717 = vpack.c.b16 %v3333, %v3329
    %v3718 = vpack.c.b16 %v3338, %v3334
    %v3719 = vpack.c.b16 %v3339, %v3335
    %v3720 = vpack.c.b16 %v3340, %v3336
    %v3721 = vpack.c.b16 %v3341, %v3337
    %v3722 = vpack.c.b16 %v3346, %v3342
    %v3723 = vpack.c.b16 %v3347, %v3343
    %v3724 = vpack.c.b16 %v3348, %v3344
    %v3725 = vpack.c.b16 %v3349, %v3345
    %v3726 = vpack.c.b16 %v3354, %v3350
    %v3727 = vpack.c.b16 %v3355, %v3351
    %v3728 = vpack.c.b16 %v3356, %v3352
    %v3729 = vpack.c.b16 %v3357, %v3353
    %v3730 = vpack.c.b16 %v3362, %v3358
    %v3731 = vpack.c.b16 %v3363, %v3359
    %v3732 = vpack.c.b16 %v3364, %v3360
    %v3733 = vpack.c.b16 %v3365, %v3361
    %v3734 = vpack.c.b16 %v3370, %v3366
    %v3735 = vpack.c.b16 %v3371, %v3367
    %v3736 = vpack.c.b16 %v3372, %v3368
    %v3737 = vpack.c.b16 %v3373, %v3369
    %v3738 = vpack.c.b16 %v3378, %v3374
    %v3739 = vpack.c.b16 %v3379, %v3375
    %v3740 = vpack.c.b16 %v3380, %v3376
    %v3741 = vpack.c.b16 %v3381, %v3377
    %v3742 = vpack.c.b16 %v3386, %v3382
    %v3743 = vpack.c.b16 %v3387, %v3383
    %v3744 = vpack.c.b16 %v3388, %v3384
    %v3745 = vpack.c.b16 %v3389, %v3385
    %v3746 = vpack.c.b16 %v3394, %v3390
    %v3747 = vpack.c.b16 %v3395, %v3391
    %v3748 = vpack.c.b16 %v3396, %v3392
    %v3749 = vpack.c.b16 %v3397, %v3393
    %v3750 = vpack.c.b16 %v3402, %v3398
    %v3751 = vpack.c.b16 %v3403, %v3399
    %v3752 = vpack.c.b16 %v3404, %v3400
    %v3753 = vpack.c.b16 %v3405, %v3401
    %v3754 = vpack.c.b16 %v3410, %v3406
    %v3755 = vpack.c.b16 %v3411, %v3407
    %v3756 = vpack.c.b16 %v3412, %v3408
    %v3757 = vpack.c.b16 %v3413, %v3409
    %v3758 = vpack.c.b16 %v3418, %v3414
    %v3759 = vpack.c.b16 %v3419, %v3415
    %v3760 = vpack.c.b16 %v3420, %v3416
    %v3761 = vpack.c.b16 %v3421, %v3417
    %v3762 = vpack.c.b16 %v3426, %v3422
    %v3763 = vpack.c.b16 %v3427, %v3423
    %v3764 = vpack.c.b16 %v3428, %v3424
    %v3765 = vpack.c.b16 %v3429, %v3425
    %v3766 = vpack.c.b16 %v3434, %v3430
    %v3767 = vpack.c.b16 %v3435, %v3431
    %v3768 = vpack.c.b16 %v3436, %v3432
    %v3769 = vpack.c.b16 %v3437, %v3433
    %v3770 = vpack.c.b16 %v3442, %v3438
    %v3771 = vpack.c.b16 %v3443, %v3439
    %v3772 = vpack.c.b16 %v3444, %v3440
    %v3773 = vpack.c.b16 %v3445, %v3441
    %v3774 = vpack.c.b16 %v3450, %v3446
    %v3775 = vpack.c.b16 %v3451, %v3447
    %v3776 = vpack.c.b16 %v3452, %v3448
    %v3777 = vpack.c.b16 %v3453, %v3449
    %v3778 = vpack.c.b16 %v3458, %v3454
    %v3779 = vpack.c.b16 %v3459, %v3455
    %v3780 = vpack.c.b16 %v3460, %v3456
    %v3781 = vpack.c.b16 %v3461, %v3457
    %v3782 = vpack.c.b16 %v3466, %v3462
    %v3783 = vpack.c.b16 %v3467, %v3463
    %v3784 = vpack.c.b16 %v3468, %v3464
    %v3785 = vpack.c.b16 %v3469, %v3465
    %v3786 = vpack.c.b16 %v3474, %v3470
    %v3787 = vpack.c.b16 %v3475, %v3471
    %v3788 = vpack.c.b16 %v3476, %v3472
    %v3789 = vpack.c.b16 %v3477, %v3473
    %v3790 = vpack.c.b16 %v3482, %v3478
    %v3791 = vpack.c.b16 %v3483, %v3479
    %v3792 = vpack.c.b16 %v3484, %v3480
    %v3793 = vpack.c.b16 %v3485, %v3481
    %v3794 = vpack.c.b16 %v3490, %v3486
    %v3795 = vpack.c.b16 %v3491, %v3487
    %v3796 = vpack.c.b16 %v3492, %v3488
    %v3797 = vpack.c.b16 %v3493, %v3489
    %v3798 = vpack.c.b16 %v3498, %v3494
    %v3799 = vpack.c.b16 %v3499, %v3495
    %v3800 = vpack.c.b16 %v3500, %v3496
    %v3801 = vpack.c.b16 %v3501, %v3497
    %v3802 = vpack.c.b16 %v3506, %v3502
    %v3803 = vpack.c.b16 %v3507, %v3503
    %v3804 = vpack.c.b16 %v3508, %v3504
    %v3805 = vpack.c.b16 %v3509, %v3505
    %v3806 = vpack.c.b16 %v3514, %v3510
    %v3807 = vpack.c.b16 %v3515, %v3511
    %v3808 = vpack.c.b16 %v3516, %v3512
    %v3809 = vpack.c.b16 %v3517, %v3513
    %v3810 = vpack.c.b16 %v3522, %v3518
    %v3811 = vpack.c.b16 %v3523, %v3519
    %v3812 = vpack.c.b16 %v3524, %v3520
    %v3813 = vpack.c.b16 %v3525, %v3521
    %v3814 = vpack.c.b16 %v3530, %v3526
    %v3815 = vpack.c.b16 %v3531, %v3527
    %v3816 = vpack.c.b16 %v3532, %v3528
    %v3817 = vpack.c.b16 %v3533, %v3529
    %v3818 = vpack.c.b16 %v3538, %v3534
    %v3819 = vpack.c.b16 %v3539, %v3535
    %v3820 = vpack.c.b16 %v3540, %v3536
    %v3821 = vpack.c.b16 %v3541, %v3537
    %v3822 = vpack.c.b16 %v3546, %v3542
    %v3823 = vpack.c.b16 %v3547, %v3543
    %v3824 = vpack.c.b16 %v3548, %v3544
    %v3825 = vpack.c.b16 %v3549, %v3545
    %v3826 = vpack.c.b16 %v3554, %v3550
    %v3827 = vpack.c.b16 %v3555, %v3551
    %v3828 = vpack.c.b16 %v3556, %v3552
    %v3829 = vpack.c.b16 %v3557, %v3553
    %v3830 = vpack.c.b16 %v3562, %v3558
    %v3831 = vpack.c.b16 %v3563, %v3559
    %v3832 = vpack.c.b16 %v3564, %v3560
    %v3833 = vpack.c.b16 %v3565, %v3561
    %v3834 = vpack.c.b16 %v3570, %v3566
    %v3835 = vpack.c.b16 %v3571, %v3567
    %v3836 = vpack.c.b16 %v3572, %v3568
    %v3837 = vpack.c.b16 %v3573, %v3569
    %v3838 = vpack.c.b16 %v3578, %v3574
    %v3839 = vpack.c.b16 %v3579, %v3575
    %v3840 = vpack.c.b16 %v3580, %v3576
    %v3841 = vpack.c.b16 %v3581, %v3577
    %v3842 = vpack.c.b16 %v3586, %v3582
    %v3843 = vpack.c.b16 %v3587, %v3583
    %v3844 = vpack.c.b16 %v3588, %v3584
    %v3845 = vpack.c.b16 %v3589, %v3585
    %4102 = vmatprep.subr.bf16.mxu0 %v3619
    %4103 = vmatpush1.bf16.msra.mxu0 %v3618
    %4104 = vmatprep.subr.bf16.mxu0 %v3615
    %4105 = vmatpush1.bf16.msra.mxu0 %v3614
    %4106 = vmatprep.subr.bf16.mxu0 %v3611
    %4107 = vmatpush1.bf16.msra.mxu0 %v3610
    %4108 = vmatprep.subr.bf16.mxu0 %v3607
    %4109 = vmatpush1.bf16.msra.mxu0 %v3606
    %4110 = vmatprep.subr.bf16.mxu0 %v3603
    %4111 = vmatpush1.bf16.msra.mxu0 %v3602
    %4112 = vmatprep.subr.bf16.mxu0 %v3599
    %4113 = vmatpush1.bf16.msra.mxu0 %v3598
    %4114 = vmatprep.subr.bf16.mxu0 %v3595
    %4115 = vmatpush1.bf16.msra.mxu0 %v3594
    %4116 = vmatprep.subr.bf16.mxu0 %v3591
    %4117 = vmatpush1.bf16.msra.mxu0 %v3590
    %4118 = vmatprep.subr.bf16.mxu0 %v3651
    %4119 = vmatpush2.bf16.msra.mxu0 %v3650
    %4120 = vmatprep.subr.bf16.mxu0 %v3647
    %4121 = vmatpush2.bf16.msra.mxu0 %v3646
    %4122 = vmatprep.subr.bf16.mxu0 %v3643
    %4123 = vmatpush2.bf16.msra.mxu0 %v3642
    %4124 = vmatprep.subr.bf16.mxu0 %v3639
    %4125 = vmatpush2.bf16.msra.mxu0 %v3638
    %4126 = vmatprep.subr.bf16.mxu0 %v3635
    %4127 = vmatpush2.bf16.msra.mxu0 %v3634
    %4128 = vmatprep.subr.bf16.mxu0 %v3631
    %4129 = vmatpush2.bf16.msra.mxu0 %v3630
    %4130 = vmatprep.subr.bf16.mxu0 %v3627
    %4131 = vmatpush2.bf16.msra.mxu0 %v3626
    %4132 = vmatprep.subr.bf16.mxu0 %v3623
    %4133 = vmatpush2.bf16.msra.mxu0 %v3622
    %4134 = vmatprep.mubr.bf16.mxu0 %v2794
    %4135 = vmatmul.mubr.bf16.gmra.mxu0 %v2793
    %v4136 = vpop.f32.mrf.mxu0
    %v4137 = vadd.f32 %v2805, %v4136
    %v4138 = vpop.f32.mrf.mxu0
    %v4139 = vadd.f32 %v2809, %v4138
    %v4140 = vpop.f32.mrf.mxu0
    %v4141 = vpop.f32.mrf.mxu0
    %4142 = vdwg.mxu0
    %4143 = vmatprep.subr.bf16.mxu0 %v3683
    %4144 = vmatpush1.bf16.msra.mxu0 %v3682
    %4145 = vmatprep.subr.bf16.mxu0 %v3679
    %4146 = vmatpush1.bf16.msra.mxu0 %v3678
    %4147 = vmatprep.subr.bf16.mxu0 %v3675
    %4148 = vmatpush1.bf16.msra.mxu0 %v3674
    %4149 = vmatprep.subr.bf16.mxu0 %v3671
    %4150 = vmatpush1.bf16.msra.mxu0 %v3670
    %4151 = vmatprep.subr.bf16.mxu0 %v3667
    %4152 = vmatpush1.bf16.msra.mxu0 %v3666
    %4153 = vmatprep.subr.bf16.mxu0 %v3663
    %4154 = vmatpush1.bf16.msra.mxu0 %v3662
    %4155 = vmatprep.subr.bf16.mxu0 %v3659
    %4156 = vmatpush1.bf16.msra.mxu0 %v3658
    %4157 = vmatprep.subr.bf16.mxu0 %v3655
    %4158 = vmatpush1.bf16.msra.mxu0 %v3654
    %4159 = vmatprep.subr.bf16.mxu0 %v3715
    %4160 = vmatpush2.bf16.msra.mxu0 %v3714
    %4161 = vmatprep.subr.bf16.mxu0 %v3711
    %4162 = vmatpush2.bf16.msra.mxu0 %v3710
    %4163 = vmatprep.subr.bf16.mxu0 %v3707
    %4164 = vmatpush2.bf16.msra.mxu0 %v3706
    %4165 = vmatprep.subr.bf16.mxu0 %v3703
    %4166 = vmatpush2.bf16.msra.mxu0 %v3702
    %4167 = vmatprep.subr.bf16.mxu0 %v3699
    %4168 = vmatpush2.bf16.msra.mxu0 %v3698
    %4169 = vmatprep.subr.bf16.mxu0 %v3695
    %4170 = vmatpush2.bf16.msra.mxu0 %v3694
    %4171 = vmatprep.subr.bf16.mxu0 %v3691
    %4172 = vmatpush2.bf16.msra.mxu0 %v3690
    %4173 = vmatprep.subr.bf16.mxu0 %v3687
    %4174 = vmatpush2.bf16.msra.mxu0 %v3686
    %4175 = vmatprep.mubr.bf16.mxu0 %v2796
    %4176 = vmatmul.mubr.bf16.gmra.mxu0 %v2795
    %v4177 = vpop.f32.mrf.mxu0
    %v4178 = vadd.f32 %v4137, %v4177
    %v4179 = vpop.f32.mrf.mxu0
    %v4180 = vadd.f32 %v4139, %v4179
    %v4181 = vpop.f32.mrf.mxu0
    %v4182 = vpop.f32.mrf.mxu0
    %4183 = vdwg.mxu0
    %4184 = vmatprep.subr.bf16.mxu0 %v3747
    %4185 = vmatpush1.bf16.msra.mxu0 %v3746
    %4186 = vmatprep.subr.bf16.mxu0 %v3743
    %4187 = vmatpush1.bf16.msra.mxu0 %v3742
    %4188 = vmatprep.subr.bf16.mxu0 %v3739
    %4189 = vmatpush1.bf16.msra.mxu0 %v3738
    %4190 = vmatprep.subr.bf16.mxu0 %v3735
    %4191 = vmatpush1.bf16.msra.mxu0 %v3734
    %4192 = vmatprep.subr.bf16.mxu0 %v3731
    %4193 = vmatpush1.bf16.msra.mxu0 %v3730
    %4194 = vmatprep.subr.bf16.mxu0 %v3727
    %4195 = vmatpush1.bf16.msra.mxu0 %v3726
    %4196 = vmatprep.subr.bf16.mxu0 %v3723
    %4197 = vmatpush1.bf16.msra.mxu0 %v3722
    %4198 = vmatprep.subr.bf16.mxu0 %v3719
    %4199 = vmatpush1.bf16.msra.mxu0 %v3718
    %4200 = vmatprep.subr.bf16.mxu0 %v3779
    %4201 = vmatpush2.bf16.msra.mxu0 %v3778
    %4202 = vmatprep.subr.bf16.mxu0 %v3775
    %4203 = vmatpush2.bf16.msra.mxu0 %v3774
    %4204 = vmatprep.subr.bf16.mxu0 %v3771
    %4205 = vmatpush2.bf16.msra.mxu0 %v3770
    %4206 = vmatprep.subr.bf16.mxu0 %v3767
    %4207 = vmatpush2.bf16.msra.mxu0 %v3766
    %4208 = vmatprep.subr.bf16.mxu0 %v3763
    %4209 = vmatpush2.bf16.msra.mxu0 %v3762
    %4210 = vmatprep.subr.bf16.mxu0 %v3759
    %4211 = vmatpush2.bf16.msra.mxu0 %v3758
    %4212 = vmatprep.subr.bf16.mxu0 %v3755
    %4213 = vmatpush2.bf16.msra.mxu0 %v3754
    %4214 = vmatprep.subr.bf16.mxu0 %v3751
    %4215 = vmatpush2.bf16.msra.mxu0 %v3750
    %4216 = vmatprep.mubr.bf16.mxu0 %v2798
    %4217 = vmatmul.mubr.bf16.gmra.mxu0 %v2797
    %v4218 = vpop.f32.mrf.mxu0
    %v4219 = vadd.f32 %v4178, %v4218
    %v4220 = vpop.f32.mrf.mxu0
    %v4221 = vadd.f32 %v4180, %v4220
    %v4222 = vpop.f32.mrf.mxu0
    %v4223 = vpop.f32.mrf.mxu0
    %4224 = vdwg.mxu0
    %4225 = vmatprep.subr.bf16.mxu0 %v3811
    %4226 = vmatpush1.bf16.msra.mxu0 %v3810
    %4227 = vmatprep.subr.bf16.mxu0 %v3807
    %4228 = vmatpush1.bf16.msra.mxu0 %v3806
    %4229 = vmatprep.subr.bf16.mxu0 %v3803
    %4230 = vmatpush1.bf16.msra.mxu0 %v3802
    %4231 = vmatprep.subr.bf16.mxu0 %v3799
    %4232 = vmatpush1.bf16.msra.mxu0 %v3798
    %4233 = vmatprep.subr.bf16.mxu0 %v3795
    %4234 = vmatpush1.bf16.msra.mxu0 %v3794
    %4235 = vmatprep.subr.bf16.mxu0 %v3791
    %4236 = vmatpush1.bf16.msra.mxu0 %v3790
    %4237 = vmatprep.subr.bf16.mxu0 %v3787
    %4238 = vmatpush1.bf16.msra.mxu0 %v3786
    %4239 = vmatprep.subr.bf16.mxu0 %v3783
    %4240 = vmatpush1.bf16.msra.mxu0 %v3782
    %4241 = vmatprep.subr.bf16.mxu0 %v3843
    %4242 = vmatpush2.bf16.msra.mxu0 %v3842
    %4243 = vmatprep.subr.bf16.mxu0 %v3839
    %4244 = vmatpush2.bf16.msra.mxu0 %v3838
    %4245 = vmatprep.subr.bf16.mxu0 %v3835
    %4246 = vmatpush2.bf16.msra.mxu0 %v3834
    %4247 = vmatprep.subr.bf16.mxu0 %v3831
    %4248 = vmatpush2.bf16.msra.mxu0 %v3830
    %4249 = vmatprep.subr.bf16.mxu0 %v3827
    %4250 = vmatpush2.bf16.msra.mxu0 %v3826
    %4251 = vmatprep.subr.bf16.mxu0 %v3823
    %4252 = vmatpush2.bf16.msra.mxu0 %v3822
    %4253 = vmatprep.subr.bf16.mxu0 %v3819
    %4254 = vmatpush2.bf16.msra.mxu0 %v3818
    %4255 = vmatprep.subr.bf16.mxu0 %v3815
    %4256 = vmatpush2.bf16.msra.mxu0 %v3814
    %4257 = vmatprep.mubr.bf16.mxu0 %v2800
    %4258 = vmatmul.mubr.bf16.gmra.mxu0 %v2799
    %v4259 = vpop.f32.mrf.mxu0
    %v4260 = vadd.f32 %v4219, %v4259
    %v4261 = vpop.f32.mrf.mxu0
    %v4262 = vadd.f32 %v4221, %v4261
    %v4263 = vpop.f32.mrf.mxu0
    %v4264 = vpop.f32.mrf.mxu0
    %4265 = vdwg.mxu0
    %4266 = vmatprep.subr.bf16.mxu0 %v3621
    %4267 = vmatpush1.bf16.msra.mxu0 %v3620
    %4268 = vmatprep.subr.bf16.mxu0 %v3617
    %4269 = vmatpush1.bf16.msra.mxu0 %v3616
    %4270 = vmatprep.subr.bf16.mxu0 %v3613
    %4271 = vmatpush1.bf16.msra.mxu0 %v3612
    %4272 = vmatprep.subr.bf16.mxu0 %v3609
    %4273 = vmatpush1.bf16.msra.mxu0 %v3608
    %4274 = vmatprep.subr.bf16.mxu0 %v3605
    %4275 = vmatpush1.bf16.msra.mxu0 %v3604
    %4276 = vmatprep.subr.bf16.mxu0 %v3601
    %4277 = vmatpush1.bf16.msra.mxu0 %v3600
    %4278 = vmatprep.subr.bf16.mxu0 %v3597
    %4279 = vmatpush1.bf16.msra.mxu0 %v3596
    %4280 = vmatprep.subr.bf16.mxu0 %v3593
    %4281 = vmatpush1.bf16.msra.mxu0 %v3592
    %4282 = vmatprep.subr.bf16.mxu0 %v3653
    %4283 = vmatpush2.bf16.msra.mxu0 %v3652
    %4284 = vmatprep.subr.bf16.mxu0 %v3649
    %4285 = vmatpush2.bf16.msra.mxu0 %v3648
    %4286 = vmatprep.subr.bf16.mxu0 %v3645
    %4287 = vmatpush2.bf16.msra.mxu0 %v3644
    %4288 = vmatprep.subr.bf16.mxu0 %v3641
    %4289 = vmatpush2.bf16.msra.mxu0 %v3640
    %4290 = vmatprep.subr.bf16.mxu0 %v3637
    %4291 = vmatpush2.bf16.msra.mxu0 %v3636
    %4292 = vmatprep.subr.bf16.mxu0 %v3633
    %4293 = vmatpush2.bf16.msra.mxu0 %v3632
    %4294 = vmatprep.subr.bf16.mxu0 %v3629
    %4295 = vmatpush2.bf16.msra.mxu0 %v3628
    %4296 = vmatprep.subr.bf16.mxu0 %v3625
    %4297 = vmatpush2.bf16.msra.mxu0 %v3624
    %4298 = vmatprep.mubr.bf16.mxu0 %v2794
    %4299 = vmatmul.mubr.bf16.gmra.mxu0 %v2793
    %v4300 = vpop.f32.mrf.mxu0
    %v4301 = vadd.f32 %v2813, %v4300
    %v4302 = vpop.f32.mrf.mxu0
    %v4303 = vadd.f32 %v2817, %v4302
    %v4304 = vpop.f32.mrf.mxu0
    %v4305 = vpop.f32.mrf.mxu0
    %4306 = vdwg.mxu0
    %4307 = vmatprep.subr.bf16.mxu0 %v3685
    %4308 = vmatpush1.bf16.msra.mxu0 %v3684
    %4309 = vmatprep.subr.bf16.mxu0 %v3681
    %4310 = vmatpush1.bf16.msra.mxu0 %v3680
    %4311 = vmatprep.subr.bf16.mxu0 %v3677
    %4312 = vmatpush1.bf16.msra.mxu0 %v3676
    %4313 = vmatprep.subr.bf16.mxu0 %v3673
    %4314 = vmatpush1.bf16.msra.mxu0 %v3672
    %4315 = vmatprep.subr.bf16.mxu0 %v3669
    %4316 = vmatpush1.bf16.msra.mxu0 %v3668
    %4317 = vmatprep.subr.bf16.mxu0 %v3665
    %4318 = vmatpush1.bf16.msra.mxu0 %v3664
    %4319 = vmatprep.subr.bf16.mxu0 %v3661
    %4320 = vmatpush1.bf16.msra.mxu0 %v3660
    %4321 = vmatprep.subr.bf16.mxu0 %v3657
    %4322 = vmatpush1.bf16.msra.mxu0 %v3656
    %4323 = vmatprep.subr.bf16.mxu0 %v3717
    %4324 = vmatpush2.bf16.msra.mxu0 %v3716
    %4325 = vmatprep.subr.bf16.mxu0 %v3713
    %4326 = vmatpush2.bf16.msra.mxu0 %v3712
    %4327 = vmatprep.subr.bf16.mxu0 %v3709
    %4328 = vmatpush2.bf16.msra.mxu0 %v3708
    %4329 = vmatprep.subr.bf16.mxu0 %v3705
    %4330 = vmatpush2.bf16.msra.mxu0 %v3704
    %4331 = vmatprep.subr.bf16.mxu0 %v3701
    %4332 = vmatpush2.bf16.msra.mxu0 %v3700
    %4333 = vmatprep.subr.bf16.mxu0 %v3697
    %4334 = vmatpush2.bf16.msra.mxu0 %v3696
    %4335 = vmatprep.subr.bf16.mxu0 %v3693
    %4336 = vmatpush2.bf16.msra.mxu0 %v3692
    %4337 = vmatprep.subr.bf16.mxu0 %v3689
    %4338 = vmatpush2.bf16.msra.mxu0 %v3688
    %4339 = vmatprep.mubr.bf16.mxu0 %v2796
    %4340 = vmatmul.mubr.bf16.gmra.mxu0 %v2795
    %v4341 = vpop.f32.mrf.mxu0
    %v4342 = vadd.f32 %v4301, %v4341
    %v4343 = vpop.f32.mrf.mxu0
    %v4344 = vadd.f32 %v4303, %v4343
    %v4345 = vpop.f32.mrf.mxu0
    %v4346 = vpop.f32.mrf.mxu0
    %4347 = vdwg.mxu0
    %4348 = vmatprep.subr.bf16.mxu0 %v3749
    %4349 = vmatpush1.bf16.msra.mxu0 %v3748
    %4350 = vmatprep.subr.bf16.mxu0 %v3745
    %4351 = vmatpush1.bf16.msra.mxu0 %v3744
    %4352 = vmatprep.subr.bf16.mxu0 %v3741
    %4353 = vmatpush1.bf16.msra.mxu0 %v3740
    %4354 = vmatprep.subr.bf16.mxu0 %v3737
    %4355 = vmatpush1.bf16.msra.mxu0 %v3736
    %4356 = vmatprep.subr.bf16.mxu0 %v3733
    %4357 = vmatpush1.bf16.msra.mxu0 %v3732
    %4358 = vmatprep.subr.bf16.mxu0 %v3729
    %4359 = vmatpush1.bf16.msra.mxu0 %v3728
    %4360 = vmatprep.subr.bf16.mxu0 %v3725
    %4361 = vmatpush1.bf16.msra.mxu0 %v3724
    %4362 = vmatprep.subr.bf16.mxu0 %v3721
    %4363 = vmatpush1.bf16.msra.mxu0 %v3720
    %4364 = vmatprep.subr.bf16.mxu0 %v3781
    %4365 = vmatpush2.bf16.msra.mxu0 %v3780
    %4366 = vmatprep.subr.bf16.mxu0 %v3777
    %4367 = vmatpush2.bf16.msra.mxu0 %v3776
    %4368 = vmatprep.subr.bf16.mxu0 %v3773
    %4369 = vmatpush2.bf16.msra.mxu0 %v3772
    %4370 = vmatprep.subr.bf16.mxu0 %v3769
    %4371 = vmatpush2.bf16.msra.mxu0 %v3768
    %4372 = vmatprep.subr.bf16.mxu0 %v3765
    %4373 = vmatpush2.bf16.msra.mxu0 %v3764
    %4374 = vmatprep.subr.bf16.mxu0 %v3761
    %4375 = vmatpush2.bf16.msra.mxu0 %v3760
    %4376 = vmatprep.subr.bf16.mxu0 %v3757
    %4377 = vmatpush2.bf16.msra.mxu0 %v3756
    %4378 = vmatprep.subr.bf16.mxu0 %v3753
    %4379 = vmatpush2.bf16.msra.mxu0 %v3752
    %4380 = vmatprep.mubr.bf16.mxu0 %v2798
    %4381 = vmatmul.mubr.bf16.gmra.mxu0 %v2797
    %v4382 = vpop.f32.mrf.mxu0
    %v4383 = vadd.f32 %v4342, %v4382
    %v4384 = vpop.f32.mrf.mxu0
    %v4385 = vadd.f32 %v4344, %v4384
    %v4386 = vpop.f32.mrf.mxu0
    %v4387 = vpop.f32.mrf.mxu0
    %4388 = vdwg.mxu0
    %4389 = vmatprep.subr.bf16.mxu0 %v3813
    %4390 = vmatpush1.bf16.msra.mxu0 %v3812
    %4391 = vmatprep.subr.bf16.mxu0 %v3809
    %4392 = vmatpush1.bf16.msra.mxu0 %v3808
    %4393 = vmatprep.subr.bf16.mxu0 %v3805
    %4394 = vmatpush1.bf16.msra.mxu0 %v3804
    %4395 = vmatprep.subr.bf16.mxu0 %v3801
    %4396 = vmatpush1.bf16.msra.mxu0 %v3800
    %4397 = vmatprep.subr.bf16.mxu0 %v3797
    %4398 = vmatpush1.bf16.msra.mxu0 %v3796
    %4399 = vmatprep.subr.bf16.mxu0 %v3793
    %4400 = vmatpush1.bf16.msra.mxu0 %v3792
    %4401 = vmatprep.subr.bf16.mxu0 %v3789
    %4402 = vmatpush1.bf16.msra.mxu0 %v3788
    %4403 = vmatprep.subr.bf16.mxu0 %v3785
    %4404 = vmatpush1.bf16.msra.mxu0 %v3784
    %4405 = vmatprep.subr.bf16.mxu0 %v3845
    %4406 = vmatpush2.bf16.msra.mxu0 %v3844
    %4407 = vmatprep.subr.bf16.mxu0 %v3841
    %4408 = vmatpush2.bf16.msra.mxu0 %v3840
    %4409 = vmatprep.subr.bf16.mxu0 %v3837
    %4410 = vmatpush2.bf16.msra.mxu0 %v3836
    %4411 = vmatprep.subr.bf16.mxu0 %v3833
    %4412 = vmatpush2.bf16.msra.mxu0 %v3832
    %4413 = vmatprep.subr.bf16.mxu0 %v3829
    %4414 = vmatpush2.bf16.msra.mxu0 %v3828
    %4415 = vmatprep.subr.bf16.mxu0 %v3825
    %4416 = vmatpush2.bf16.msra.mxu0 %v3824
    %4417 = vmatprep.subr.bf16.mxu0 %v3821
    %4418 = vmatpush2.bf16.msra.mxu0 %v3820
    %4419 = vmatprep.subr.bf16.mxu0 %v3817
    %4420 = vmatpush2.bf16.msra.mxu0 %v3816
    %4421 = vmatprep.mubr.bf16.mxu0 %v2800
    %4422 = vmatmul.mubr.bf16.gmra.mxu0 %v2799
    %v4423 = vpop.f32.mrf.mxu0
    %v4424 = vadd.f32 %v4383, %v4423
    %v4425 = vpop.f32.mrf.mxu0
    %v4426 = vadd.f32 %v4385, %v4425
    %v4427 = vpop.f32.mrf.mxu0
    %v4428 = vpop.f32.mrf.mxu0
    %4429 = vdwg.mxu0
    %v4430 = vadd.f32 %v4260, %v567
    %v4431 = vadd.f32 %v4262, %v569
    %v4432 = vadd.f32 %v4424, %v608
    %v4433 = vadd.f32 %v4426, %v610
    %v4434 = vld [vmem:[#allocation13] sm:$0xff]
    %v4435 = vld [vmem:[#allocation13 + $0x8] sm:$0xff]
    %v4436 = vld [vmem:[#allocation13 + $0x10] sm:$0xff]
    %v4437 = vld [vmem:[#allocation13 + $0x18] sm:$0xff]
    %v4438 = vld [vmem:[#allocation13 + $0x20] sm:$0xff]
    %v4439 = vld [vmem:[#allocation13 + $0x28] sm:$0xff]
    %v4440 = vld [vmem:[#allocation13 + $0x30] sm:$0xff]
    %v4441 = vld [vmem:[#allocation13 + $0x38] sm:$0xff]
    %v4442 = vld [vmem:[#allocation13 + $0x40] sm:$0xff]
    %v4443 = vld [vmem:[#allocation13 + $0x48] sm:$0xff]
    %v4444 = vld [vmem:[#allocation13 + $0x50] sm:$0xff]
    %v4445 = vld [vmem:[#allocation13 + $0x58] sm:$0xff]
    %v4446 = vld [vmem:[#allocation13 + $0x60] sm:$0xff]
    %v4447 = vld [vmem:[#allocation13 + $0x68] sm:$0xff]
    %v4448 = vld [vmem:[#allocation13 + $0x70] sm:$0xff]
    %v4449 = vld [vmem:[#allocation13 + $0x78] sm:$0xff]
    %v4450 = vld [vmem:[#allocation13 + $0x80] sm:$0xff]
    %v4451 = vld [vmem:[#allocation13 + $0x88] sm:$0xff]
    %v4452 = vld [vmem:[#allocation13 + $0x90] sm:$0xff]
    %v4453 = vld [vmem:[#allocation13 + $0x98] sm:$0xff]
    %v4454 = vld [vmem:[#allocation13 + $0xa0] sm:$0xff]
    %v4455 = vld [vmem:[#allocation13 + $0xa8] sm:$0xff]
    %v4456 = vld [vmem:[#allocation13 + $0xb0] sm:$0xff]
    %v4457 = vld [vmem:[#allocation13 + $0xb8] sm:$0xff]
    %v4458 = vld [vmem:[#allocation13 + $0xc0] sm:$0xff]
    %v4459 = vld [vmem:[#allocation13 + $0xc8] sm:$0xff]
    %v4460 = vld [vmem:[#allocation13 + $0xd0] sm:$0xff]
    %v4461 = vld [vmem:[#allocation13 + $0xd8] sm:$0xff]
    %v4462 = vld [vmem:[#allocation13 + $0xe0] sm:$0xff]
    %v4463 = vld [vmem:[#allocation13 + $0xe8] sm:$0xff]
    %v4464 = vld [vmem:[#allocation13 + $0xf0] sm:$0xff]
    %v4465 = vld [vmem:[#allocation13 + $0xf8] sm:$0xff]
    %v4466 = vld [vmem:[#allocation13 + $0x100] sm:$0xff]
    %v4467 = vld [vmem:[#allocation13 + $0x108] sm:$0xff]
    %v4468 = vld [vmem:[#allocation13 + $0x110] sm:$0xff]
    %v4469 = vld [vmem:[#allocation13 + $0x118] sm:$0xff]
    %v4470 = vld [vmem:[#allocation13 + $0x120] sm:$0xff]
    %v4471 = vld [vmem:[#allocation13 + $0x128] sm:$0xff]
    %v4472 = vld [vmem:[#allocation13 + $0x130] sm:$0xff]
    %v4473 = vld [vmem:[#allocation13 + $0x138] sm:$0xff]
    %v4474 = vld [vmem:[#allocation13 + $0x140] sm:$0xff]
    %v4475 = vld [vmem:[#allocation13 + $0x148] sm:$0xff]
    %v4476 = vld [vmem:[#allocation13 + $0x150] sm:$0xff]
    %v4477 = vld [vmem:[#allocation13 + $0x158] sm:$0xff]
    %v4478 = vld [vmem:[#allocation13 + $0x160] sm:$0xff]
    %v4479 = vld [vmem:[#allocation13 + $0x168] sm:$0xff]
    %v4480 = vld [vmem:[#allocation13 + $0x170] sm:$0xff]
    %v4481 = vld [vmem:[#allocation13 + $0x178] sm:$0xff]
    %v4482 = vld [vmem:[#allocation13 + $0x180] sm:$0xff]
    %v4483 = vld [vmem:[#allocation13 + $0x188] sm:$0xff]
    %v4484 = vld [vmem:[#allocation13 + $0x190] sm:$0xff]
    %v4485 = vld [vmem:[#allocation13 + $0x198] sm:$0xff]
    %v4486 = vld [vmem:[#allocation13 + $0x1a0] sm:$0xff]
    %v4487 = vld [vmem:[#allocation13 + $0x1a8] sm:$0xff]
    %v4488 = vld [vmem:[#allocation13 + $0x1b0] sm:$0xff]
    %v4489 = vld [vmem:[#allocation13 + $0x1b8] sm:$0xff]
    %v4490 = vld [vmem:[#allocation13 + $0x1c0] sm:$0xff]
    %v4491 = vld [vmem:[#allocation13 + $0x1c8] sm:$0xff]
    %v4492 = vld [vmem:[#allocation13 + $0x1d0] sm:$0xff]
    %v4493 = vld [vmem:[#allocation13 + $0x1d8] sm:$0xff]
    %v4494 = vld [vmem:[#allocation13 + $0x1e0] sm:$0xff]
    %v4495 = vld [vmem:[#allocation13 + $0x1e8] sm:$0xff]
    %v4496 = vld [vmem:[#allocation13 + $0x1f0] sm:$0xff]
    %v4497 = vld [vmem:[#allocation13 + $0x1f8] sm:$0xff]
    %v4498 = vld [vmem:[%s8] sm:$0x3]
    %v4499 = vmax.f32 %v4430, 0.0
    %v4500 = vmax.f32 %v4431, 0.0
    %v4501 = vmax.f32 %v4432, 0.0
    %v4502 = vmax.f32 %v4433, 0.0
    %v4503 = vpack.c.bf16 %v4499, %v4499
    %v4504 = vpack.c.bf16 %v4500, %v4500
    %v4505 = vpack.c.bf16 %v4501, %v4501
    %v4506 = vpack.c.bf16 %v4502, %v4502
    %v4508 = vlaneseq
    %v4509 = vshrl.u32 %v4508, 7
    %v4510 = vsub.s32 0, %v4509
    %v4511 = vrot.slane %v4498, %v4510
    %v4512 = vlaneseq
    %v4513 = vshrl.u32 %v4512, 7
    %v4514 = vsub.s32 1, %v4513
    %v4515 = vrot.slane %v4498, %v4514
    %v4582 = vunpack.c.l.b16 %v4434
    %v4583 = vunpack.c.h.b16 %v4434
    %v4584 = vunpack.c.l.b16 %v4435
    %v4585 = vunpack.c.h.b16 %v4435
    %v4586 = vunpack.c.l.b16 %v4436
    %v4587 = vunpack.c.h.b16 %v4436
    %v4588 = vunpack.c.l.b16 %v4437
    %v4589 = vunpack.c.h.b16 %v4437
    %v4590 = vunpack.c.l.b16 %v4438
    %v4591 = vunpack.c.h.b16 %v4438
    %v4592 = vunpack.c.l.b16 %v4439
    %v4593 = vunpack.c.h.b16 %v4439
    %v4594 = vunpack.c.l.b16 %v4440
    %v4595 = vunpack.c.h.b16 %v4440
    %v4596 = vunpack.c.l.b16 %v4441
    %v4597 = vunpack.c.h.b16 %v4441
    %v4598 = vunpack.c.l.b16 %v4442
    %v4599 = vunpack.c.h.b16 %v4442
    %v4600 = vunpack.c.l.b16 %v4443
    %v4601 = vunpack.c.h.b16 %v4443
    %v4602 = vunpack.c.l.b16 %v4444
    %v4603 = vunpack.c.h.b16 %v4444
    %v4604 = vunpack.c.l.b16 %v4445
    %v4605 = vunpack.c.h.b16 %v4445
    %v4606 = vunpack.c.l.b16 %v4446
    %v4607 = vunpack.c.h.b16 %v4446
    %v4608 = vunpack.c.l.b16 %v4447
    %v4609 = vunpack.c.h.b16 %v4447
    %v4610 = vunpack.c.l.b16 %v4448
    %v4611 = vunpack.c.h.b16 %v4448
    %v4612 = vunpack.c.l.b16 %v4449
    %v4613 = vunpack.c.h.b16 %v4449
    %v4614 = vunpack.c.l.b16 %v4450
    %v4615 = vunpack.c.h.b16 %v4450
    %v4616 = vunpack.c.l.b16 %v4451
    %v4617 = vunpack.c.h.b16 %v4451
    %v4618 = vunpack.c.l.b16 %v4452
    %v4619 = vunpack.c.h.b16 %v4452
    %v4620 = vunpack.c.l.b16 %v4453
    %v4621 = vunpack.c.h.b16 %v4453
    %v4622 = vunpack.c.l.b16 %v4454
    %v4623 = vunpack.c.h.b16 %v4454
    %v4624 = vunpack.c.l.b16 %v4455
    %v4625 = vunpack.c.h.b16 %v4455
    %v4626 = vunpack.c.l.b16 %v4456
    %v4627 = vunpack.c.h.b16 %v4456
    %v4628 = vunpack.c.l.b16 %v4457
    %v4629 = vunpack.c.h.b16 %v4457
    %v4630 = vunpack.c.l.b16 %v4458
    %v4631 = vunpack.c.h.b16 %v4458
    %v4632 = vunpack.c.l.b16 %v4459
    %v4633 = vunpack.c.h.b16 %v4459
    %v4634 = vunpack.c.l.b16 %v4460
    %v4635 = vunpack.c.h.b16 %v4460
    %v4636 = vunpack.c.l.b16 %v4461
    %v4637 = vunpack.c.h.b16 %v4461
    %v4638 = vunpack.c.l.b16 %v4462
    %v4639 = vunpack.c.h.b16 %v4462
    %v4640 = vunpack.c.l.b16 %v4463
    %v4641 = vunpack.c.h.b16 %v4463
    %v4642 = vunpack.c.l.b16 %v4464
    %v4643 = vunpack.c.h.b16 %v4464
    %v4644 = vunpack.c.l.b16 %v4465
    %v4645 = vunpack.c.h.b16 %v4465
    %v4646 = vunpack.c.l.b16 %v4466
    %v4647 = vunpack.c.h.b16 %v4466
    %v4648 = vunpack.c.l.b16 %v4467
    %v4649 = vunpack.c.h.b16 %v4467
    %v4650 = vunpack.c.l.b16 %v4468
    %v4651 = vunpack.c.h.b16 %v4468
    %v4652 = vunpack.c.l.b16 %v4469
    %v4653 = vunpack.c.h.b16 %v4469
    %v4654 = vunpack.c.l.b16 %v4470
    %v4655 = vunpack.c.h.b16 %v4470
    %v4656 = vunpack.c.l.b16 %v4471
    %v4657 = vunpack.c.h.b16 %v4471
    %v4658 = vunpack.c.l.b16 %v4472
    %v4659 = vunpack.c.h.b16 %v4472
    %v4660 = vunpack.c.l.b16 %v4473
    %v4661 = vunpack.c.h.b16 %v4473
    %v4662 = vunpack.c.l.b16 %v4474
    %v4663 = vunpack.c.h.b16 %v4474
    %v4664 = vunpack.c.l.b16 %v4475
    %v4665 = vunpack.c.h.b16 %v4475
    %v4666 = vunpack.c.l.b16 %v4476
    %v4667 = vunpack.c.h.b16 %v4476
    %v4668 = vunpack.c.l.b16 %v4477
    %v4669 = vunpack.c.h.b16 %v4477
    %v4670 = vunpack.c.l.b16 %v4478
    %v4671 = vunpack.c.h.b16 %v4478
    %v4672 = vunpack.c.l.b16 %v4479
    %v4673 = vunpack.c.h.b16 %v4479
    %v4674 = vunpack.c.l.b16 %v4480
    %v4675 = vunpack.c.h.b16 %v4480
    %v4676 = vunpack.c.l.b16 %v4481
    %v4677 = vunpack.c.h.b16 %v4481
    %v4678 = vunpack.c.l.b16 %v4482
    %v4679 = vunpack.c.h.b16 %v4482
    %v4680 = vunpack.c.l.b16 %v4483
    %v4681 = vunpack.c.h.b16 %v4483
    %v4682 = vunpack.c.l.b16 %v4484
    %v4683 = vunpack.c.h.b16 %v4484
    %v4684 = vunpack.c.l.b16 %v4485
    %v4685 = vunpack.c.h.b16 %v4485
    %v4686 = vunpack.c.l.b16 %v4486
    %v4687 = vunpack.c.h.b16 %v4486
    %v4688 = vunpack.c.l.b16 %v4487
    %v4689 = vunpack.c.h.b16 %v4487
    %v4690 = vunpack.c.l.b16 %v4488
    %v4691 = vunpack.c.h.b16 %v4488
    %v4692 = vunpack.c.l.b16 %v4489
    %v4693 = vunpack.c.h.b16 %v4489
    %v4694 = vunpack.c.l.b16 %v4490
    %v4695 = vunpack.c.h.b16 %v4490
    %v4696 = vunpack.c.l.b16 %v4491
    %v4697 = vunpack.c.h.b16 %v4491
    %v4698 = vunpack.c.l.b16 %v4492
    %v4699 = vunpack.c.h.b16 %v4492
    %v4700 = vunpack.c.l.b16 %v4493
    %v4701 = vunpack.c.h.b16 %v4493
    %v4702 = vunpack.c.l.b16 %v4494
    %v4703 = vunpack.c.h.b16 %v4494
    %v4704 = vunpack.c.l.b16 %v4495
    %v4705 = vunpack.c.h.b16 %v4495
    %v4706 = vunpack.c.l.b16 %v4496
    %v4707 = vunpack.c.h.b16 %v4496
    %v4708 = vunpack.c.l.b16 %v4497
    %v4709 = vunpack.c.h.b16 %v4497
    %v4710 = vpack.c.b16 %v4584, %v4582
    %v4711 = vpack.c.b16 %v4585, %v4583
    %v4712 = vpack.c.b16 %v4588, %v4586
    %v4713 = vpack.c.b16 %v4589, %v4587
    %v4714 = vpack.c.b16 %v4592, %v4590
    %v4715 = vpack.c.b16 %v4593, %v4591
    %v4716 = vpack.c.b16 %v4596, %v4594
    %v4717 = vpack.c.b16 %v4597, %v4595
    %v4718 = vpack.c.b16 %v4600, %v4598
    %v4719 = vpack.c.b16 %v4601, %v4599
    %v4720 = vpack.c.b16 %v4604, %v4602
    %v4721 = vpack.c.b16 %v4605, %v4603
    %v4722 = vpack.c.b16 %v4608, %v4606
    %v4723 = vpack.c.b16 %v4609, %v4607
    %v4724 = vpack.c.b16 %v4612, %v4610
    %v4725 = vpack.c.b16 %v4613, %v4611
    %v4726 = vpack.c.b16 %v4616, %v4614
    %v4727 = vpack.c.b16 %v4617, %v4615
    %v4728 = vpack.c.b16 %v4620, %v4618
    %v4729 = vpack.c.b16 %v4621, %v4619
    %v4730 = vpack.c.b16 %v4624, %v4622
    %v4731 = vpack.c.b16 %v4625, %v4623
    %v4732 = vpack.c.b16 %v4628, %v4626
    %v4733 = vpack.c.b16 %v4629, %v4627
    %v4734 = vpack.c.b16 %v4632, %v4630
    %v4735 = vpack.c.b16 %v4633, %v4631
    %v4736 = vpack.c.b16 %v4636, %v4634
    %v4737 = vpack.c.b16 %v4637, %v4635
    %v4738 = vpack.c.b16 %v4640, %v4638
    %v4739 = vpack.c.b16 %v4641, %v4639
    %v4740 = vpack.c.b16 %v4644, %v4642
    %v4741 = vpack.c.b16 %v4645, %v4643
    %v4742 = vpack.c.b16 %v4648, %v4646
    %v4743 = vpack.c.b16 %v4649, %v4647
    %v4744 = vpack.c.b16 %v4652, %v4650
    %v4745 = vpack.c.b16 %v4653, %v4651
    %v4746 = vpack.c.b16 %v4656, %v4654
    %v4747 = vpack.c.b16 %v4657, %v4655
    %v4748 = vpack.c.b16 %v4660, %v4658
    %v4749 = vpack.c.b16 %v4661, %v4659
    %v4750 = vpack.c.b16 %v4664, %v4662
    %v4751 = vpack.c.b16 %v4665, %v4663
    %v4752 = vpack.c.b16 %v4668, %v4666
    %v4753 = vpack.c.b16 %v4669, %v4667
    %v4754 = vpack.c.b16 %v4672, %v4670
    %v4755 = vpack.c.b16 %v4673, %v4671
    %v4756 = vpack.c.b16 %v4676, %v4674
    %v4757 = vpack.c.b16 %v4677, %v4675
    %v4758 = vpack.c.b16 %v4680, %v4678
    %v4759 = vpack.c.b16 %v4681, %v4679
    %v4760 = vpack.c.b16 %v4684, %v4682
    %v4761 = vpack.c.b16 %v4685, %v4683
    %v4762 = vpack.c.b16 %v4688, %v4686
    %v4763 = vpack.c.b16 %v4689, %v4687
    %v4764 = vpack.c.b16 %v4692, %v4690
    %v4765 = vpack.c.b16 %v4693, %v4691
    %v4766 = vpack.c.b16 %v4696, %v4694
    %v4767 = vpack.c.b16 %v4697, %v4695
    %v4768 = vpack.c.b16 %v4700, %v4698
    %v4769 = vpack.c.b16 %v4701, %v4699
    %v4770 = vpack.c.b16 %v4704, %v4702
    %v4771 = vpack.c.b16 %v4705, %v4703
    %v4772 = vpack.c.b16 %v4708, %v4706
    %v4773 = vpack.c.b16 %v4709, %v4707
    %4838 = vmatprep.subr.bf16.mxu0 %v4725
    %4839 = vmatpush1.bf16.msra.mxu0 %v4724
    %4840 = vmatprep.subr.bf16.mxu0 %v4723
    %4841 = vmatpush1.bf16.msra.mxu0 %v4722
    %4842 = vmatprep.subr.bf16.mxu0 %v4721
    %4843 = vmatpush1.bf16.msra.mxu0 %v4720
    %4844 = vmatprep.subr.bf16.mxu0 %v4719
    %4845 = vmatpush1.bf16.msra.mxu0 %v4718
    %4846 = vmatprep.subr.bf16.mxu0 %v4717
    %4847 = vmatpush1.bf16.msra.mxu0 %v4716
    %4848 = vmatprep.subr.bf16.mxu0 %v4715
    %4849 = vmatpush1.bf16.msra.mxu0 %v4714
    %4850 = vmatprep.subr.bf16.mxu0 %v4713
    %4851 = vmatpush1.bf16.msra.mxu0 %v4712
    %4852 = vmatprep.subr.bf16.mxu0 %v4711
    %4853 = vmatpush1.bf16.msra.mxu0 %v4710
    %4854 = vmatprep.subr.bf16.mxu0 %v4741
    %4855 = vmatpush2.bf16.msra.mxu0 %v4740
    %4856 = vmatprep.subr.bf16.mxu0 %v4739
    %4857 = vmatpush2.bf16.msra.mxu0 %v4738
    %4858 = vmatprep.subr.bf16.mxu0 %v4737
    %4859 = vmatpush2.bf16.msra.mxu0 %v4736
    %4860 = vmatprep.subr.bf16.mxu0 %v4735
    %4861 = vmatpush2.bf16.msra.mxu0 %v4734
    %4862 = vmatprep.subr.bf16.mxu0 %v4733
    %4863 = vmatpush2.bf16.msra.mxu0 %v4732
    %4864 = vmatprep.subr.bf16.mxu0 %v4731
    %4865 = vmatpush2.bf16.msra.mxu0 %v4730
    %4866 = vmatprep.subr.bf16.mxu0 %v4729
    %4867 = vmatpush2.bf16.msra.mxu0 %v4728
    %4868 = vmatprep.subr.bf16.mxu0 %v4727
    %4869 = vmatpush2.bf16.msra.mxu0 %v4726
    %4870 = vmatprep.mubr.bf16.mxu0 %v4504
    %4871 = vmatmul.mubr.bf16.gmra.mxu0 %v4503
    %v4872 = vpop.f32.mrf.mxu0
    %v4873 = vadd.f32 %v4511, %v4872
    %v4874 = vpop.f32.mrf.mxu0
    %v4875 = vadd.f32 %v4515, %v4874
    %v4876 = vpop.f32.mrf.mxu0
    %v4877 = vpop.f32.mrf.mxu0
    %4878 = vdwg.mxu0
    %4879 = vmatprep.subr.bf16.mxu0 %v4757
    %4880 = vmatpush1.bf16.msra.mxu0 %v4756
    %4881 = vmatprep.subr.bf16.mxu0 %v4755
    %4882 = vmatpush1.bf16.msra.mxu0 %v4754
    %4883 = vmatprep.subr.bf16.mxu0 %v4753
    %4884 = vmatpush1.bf16.msra.mxu0 %v4752
    %4885 = vmatprep.subr.bf16.mxu0 %v4751
    %4886 = vmatpush1.bf16.msra.mxu0 %v4750
    %4887 = vmatprep.subr.bf16.mxu0 %v4749
    %4888 = vmatpush1.bf16.msra.mxu0 %v4748
    %4889 = vmatprep.subr.bf16.mxu0 %v4747
    %4890 = vmatpush1.bf16.msra.mxu0 %v4746
    %4891 = vmatprep.subr.bf16.mxu0 %v4745
    %4892 = vmatpush1.bf16.msra.mxu0 %v4744
    %4893 = vmatprep.subr.bf16.mxu0 %v4743
    %4894 = vmatpush1.bf16.msra.mxu0 %v4742
    %4895 = vmatprep.subr.bf16.mxu0 %v4773
    %4896 = vmatpush2.bf16.msra.mxu0 %v4772
    %4897 = vmatprep.subr.bf16.mxu0 %v4771
    %4898 = vmatpush2.bf16.msra.mxu0 %v4770
    %4899 = vmatprep.subr.bf16.mxu0 %v4769
    %4900 = vmatpush2.bf16.msra.mxu0 %v4768
    %4901 = vmatprep.subr.bf16.mxu0 %v4767
    %4902 = vmatpush2.bf16.msra.mxu0 %v4766
    %4903 = vmatprep.subr.bf16.mxu0 %v4765
    %4904 = vmatpush2.bf16.msra.mxu0 %v4764
    %4905 = vmatprep.subr.bf16.mxu0 %v4763
    %4906 = vmatpush2.bf16.msra.mxu0 %v4762
    %4907 = vmatprep.subr.bf16.mxu0 %v4761
    %4908 = vmatpush2.bf16.msra.mxu0 %v4760
    %4909 = vmatprep.subr.bf16.mxu0 %v4759
    %4910 = vmatpush2.bf16.msra.mxu0 %v4758
    %4911 = vmatprep.mubr.bf16.mxu0 %v4506
    %4912 = vmatmul.mubr.bf16.gmra.mxu0 %v4505
    %v4913 = vpop.f32.mrf.mxu0
    %v4914 = vadd.f32 %v4873, %v4913
    %v4915 = vpop.f32.mrf.mxu0
    %v4916 = vadd.f32 %v4875, %v4915
    %v4917 = vpop.f32.mrf.mxu0
    %v4918 = vpop.f32.mrf.mxu0
    %4919 = vdwg.mxu0
    %4920 = vst [vmem:[#allocation14] sm:$0xff] %v4914
    %4921 = vst [vmem:[#allocation14 + $0x8] sm:$0xff] %v4916
    // Predicated region
    $region66: #{tpu_custom_call.1} parent=1 // pred_check
      _
    $region67: #{tpu_custom_call.1} parent=1 // pred_check_branch
      %4923 = sbr.rel (0) target = $region69
    $region68: #{tpu_custom_call.1} parent=1 // pred_region
      %s4925 = ssub.s32 256, 256
      %4926 = vsyncadd [#allocation4], %s4925
      %s4928 = sshll.u32 [#allocation14], 4
      %s4929 = int_to_ptr.vmem [resolvable:$true] %s4928
      %4931 = dma.vmem_to_hbm [thread:$0]  %s4929, 256, %s9, [#allocation4]
    $region69: #{tpu_custom_call.1} parent=1 // pred_fallthru
      _
    // Predicated region
    $region70: #{tpu_custom_call.1} parent=1 // pred_check
      _
    $region71: #{tpu_custom_call.1} parent=1 // pred_check_branch
      %4933 = sbr.rel (0) target = $region73
    $region72: #{tpu_custom_call.1} parent=1 // pred_region
      %4934 = dma.done [#allocation4], 256
    $region73: #{tpu_custom_call.1} parent=1 // pred_fallthru
      _
    %4935 = vsyncpa [#allocation3], 1
    %4936 = vsyncpa [#allocation6], 1
    %4937 = vsyncpa [#allocation9], 1
    %4938 = vsyncpa [#allocation12], 1
    %4939 = vsyncpa [#allocation4], 1

</llo_original>
